<compile_context>
chip_gen: v5e
topology: v5e:2x2
jax: 0.10.0
libtpu: 0.0.40
codegen_flags: <defaults>
</compile_context>

<pallas_src>
import jax
import jax.numpy as jnp
import numpy as np
from jax.experimental import pallas as pl
from jax.experimental.pallas import tpu as pltpu

N_CLASS = 768
N_HIDDEN = 384


# ----------------------------- Pallas kernel -------------------------------- #
def lstm_fwd_recurrence_kernel(gx_ref, whh_ref, h0_ref, c0_ref, h_out_ref):
    """Serial forward-direction LSTM recurrence.

    gx_ref : (T, B, 4H) f32   precomputed x_t @ W_ih + (b_ih + b_hh)  (hoisted to XLA)
    whh_ref: (H, 4H)    bf16  recurrent weight, pre-transposed for (B,K)@(K,N)
    h0/c0  : (B, H)     f32   forward-direction initial state
    h_out  : (B, H)     f32   h_{T-1}
    """
    T = gx_ref.shape[0]
    H = h0_ref.shape[-1]

    def step(t, carry):
        h, c = carry
        # bf16 MXU matmul (single pass) with f32 accumulation; gx add stays f32.
        gates = gx_ref[t] + jnp.dot(h.astype(jnp.bfloat16), whh_ref[...],
                                    preferred_element_type=jnp.float32)
        # PyTorch gate order: i, f, g, o  (H = 384 = 3*128 -> lane-aligned slices)
        i = jax.nn.sigmoid(gates[:, 0 * H:1 * H])
        f = jax.nn.sigmoid(gates[:, 1 * H:2 * H])
        g = jnp.tanh(gates[:, 2 * H:3 * H])
        o = jax.nn.sigmoid(gates[:, 3 * H:4 * H])
        c = f * c + i * g
        h = o * jnp.tanh(c)
        return (h, c)

    # Full unroll (T is small and static) with bounded live ranges, so the
    # scheduler can interleave MXU pushes with EUP sigmoid/tanh of adjacent
    # steps without spilling out of the 64-vreg file.
    h, c = jax.lax.fori_loop(0, T, step, (h0_ref[...], c0_ref[...]), unroll=True)
    h_out_ref[...] = h


# ------------------------------- wrappers ----------------------------------- #
def _lstm_cell_xla(x_t, h, c, wih, whh, b):
    gates = x_t @ wih + h @ whh + b
    i, f, g, o = jnp.split(gates, 4, axis=-1)
    c = jax.nn.sigmoid(f) * c + jax.nn.sigmoid(i) * jnp.tanh(g)
    h = jax.nn.sigmoid(o) * jnp.tanh(c)
    return h, c


@jax.jit
def bilstm_forward(x_bsd, params, h0f, c0f, h0b, c0b):
    """x_bsd: (batch, seq, n_class) float32, like the PyTorch module's X."""
    B, T, C = x_bsd.shape
    H = N_HIDDEN
    x_tbd = jnp.transpose(x_bsd, (1, 0, 2))          # X.transpose(0, 1): (T, B, C)

    # (1) Hoist the input projection: one big matmul instead of T tiny in-kernel ones.
    gx = x_tbd.reshape(T * B, C) @ params["wih_f"] + params["b_f"]
    gx = gx.reshape(T, B, 4 * H)

    # (2) Pallas kernel: single invocation, whole problem resident in VMEM.
    #     W_hh is passed pre-cast to bf16 (halves the un-overlapped DMA and
    #     avoids the ~3x f32 MXU emulation passes on the serial path).
    whh_bf16 = params["whh_f"].astype(jnp.bfloat16)

    # Advisory cost estimate so XLA schedules the independent backward-direction
    # cell / fc work around (not strictly after) the kernel.
    flops = int(T * 2 * B * H * 4 * H + T * B * 4 * H * 10)
    transcendentals = int(T * B * 5 * H)
    bytes_accessed = int(whh_bf16.size * 2 + gx.size * 4
                         + (h0f.size + c0f.size + B * H) * 4)
    cost = pl.CostEstimate(flops=flops, transcendentals=transcendentals,
                           bytes_accessed=bytes_accessed)

    vmem = pltpu.MemorySpace.VMEM
    h_last = pl.pallas_call(
        lstm_fwd_recurrence_kernel,
        out_shape=jax.ShapeDtypeStruct((B, H), jnp.float32),
        in_specs=[pl.BlockSpec(memory_space=vmem)] * 4,
        out_specs=pl.BlockSpec(memory_space=vmem),
        cost_estimate=cost,
    )(gx, whh_bf16, h0f, c0f)

    # (3) Backward direction at the last original timestep = one cell step on
    #     x_{T-1} from the backward init state -> single tiny matmul, do in XLA
    #     (data-independent of the recurrence; overlappable with the kernel).
    h_b, _ = _lstm_cell_xla(x_tbd[-1], h0b, c0b,
                            params["wih_b"], params["whh_b"], params["b_b"])

    # (4) fc without a lane-concat: split fc_w rows and sum the two products.
    return h_last @ params["fc_w"][:H] + h_b @ params["fc_w"][H:] + params["fc_b"]


def reference_forward(x_bsd, params, h0f, c0f, h0b, c0b):
    """Pure-JAX f32 reference matching PyTorch nn.LSTM + fc semantics."""
    xs = jnp.transpose(x_bsd, (1, 0, 2))  # (T, B, C)

    def cell(carry, x_t, wih, whh, b):
        h, c = carry
        gates = x_t @ wih + h @ whh + b
        i, f, g, o = jnp.split(gates, 4, axis=-1)
        c = jax.nn.sigmoid(f) * c + jax.nn.sigmoid(i) * jnp.tanh(g)
        h = jax.nn.sigmoid(o) * jnp.tanh(c)
        return (h, c), h

    (hf, _), _ = jax.lax.scan(
        lambda carry, x_t: cell(carry, x_t, params["wih_f"], params["whh_f"], params["b_f"]),
        (h0f, c0f), xs)
    (hb, _), _ = cell((h0b, c0b), xs[-1], params["wih_b"], params["whh_b"], params["b_b"])
    feat = jnp.concatenate([hf, hb], axis=-1)
    return feat @ params["fc_w"] + params["fc_b"]


def init_params(key):
    """Deterministic synthetic init (shapes match nn.LSTM(768, 384, bidir) + Linear(768, 768))."""
    H, C = N_HIDDEN, N_CLASS
    k = 1.0 / np.sqrt(H)
    keys = jax.random.split(key, 12)
    u = lambda kk, shape: jax.random.uniform(kk, shape, jnp.float32, -k, k)
    # PyTorch stores weight_ih as (4H, C) / weight_hh as (4H, H); pre-transpose for (B,K)@(K,N).
    return {
        "wih_f": u(keys[0], (C, 4 * H)),
        "whh_f": u(keys[1], (H, 4 * H)),
        "b_f":   (u(keys[2], (1, 4 * H)) + u(keys[3], (1, 4 * H))),  # b_ih + b_hh
        "wih_b": u(keys[4], (C, 4 * H)),
        "whh_b": u(keys[5], (H, 4 * H)),
        "b_b":   (u(keys[6], (1, 4 * H)) + u(keys[7], (1, 4 * H))),
        "fc_w":  u(keys[8], (2 * H, C)),
        "fc_b":  u(keys[9], (1, C)),
    }


if __name__ == "__main__":
    key = jax.random.PRNGKey(0)
    kx, kp, kh0f, kc0f, kh0b, kc0b = jax.random.split(key, 6)

    B, T = 2, 8
    x = jax.random.normal(kx, (B, T, N_CLASS), jnp.float32)
    params = init_params(kp)
    # torch.randn initial states -> deterministic normal draws here
    h0f = jax.random.normal(kh0f, (B, N_HIDDEN), jnp.float32)
    c0f = jax.random.normal(kc0f, (B, N_HIDDEN), jnp.float32)
    h0b = jax.random.normal(kh0b, (B, N_HIDDEN), jnp.float32)
    c0b = jax.random.normal(kc0b, (B, N_HIDDEN), jnp.float32)

    out = jax.block_until_ready(bilstm_forward(x, params, h0f, c0f, h0b, c0b))
    ref = jax.block_until_ready(reference_forward(x, params, h0f, c0f, h0b, c0b))

    assert out.shape == (B, N_CLASS), out.shape
    # Tolerance widened slightly vs the all-f32 version: the recurrent matmul
    # now runs with bf16 h / W_hh and that rounding compounds through the
    # 8-step serial chain (f32 reference unchanged).
    np.testing.assert_allclose(np.asarray(out), np.asarray(ref), rtol=2e-2, atol=2e-2)
    print("KERNEL_OK")
</pallas_src>

<mosaic_0001>
module attributes {stable_mosaic.version = 11 : i64} {
  func.func @lstm_fwd_recurrence_kernel(%arg0: memref<8x2x1536xf32, #tpu.memory_space<vmem>>, %arg1: memref<384x1536xbf16, #tpu.memory_space<vmem>>, %arg2: memref<2x384xf32, #tpu.memory_space<vmem>>, %arg3: memref<2x384xf32, #tpu.memory_space<vmem>>, %arg4: memref<2x384xf32, #tpu.memory_space<vmem>>) attributes {dimension_semantics = [], scalar_prefetch = 0 : i64, scratch_operands = 0 : i64, tpu.core_type = #tpu.core_type<tc>} {
    %c0 = arith.constant 0 : index
    %c0_0 = arith.constant 0 : index
    %0 = vector.load %arg2[%c0, %c0_0] : memref<2x384xf32, #tpu.memory_space<vmem>>, vector<2x384xf32>
    %c0_1 = arith.constant 0 : index
    %c0_2 = arith.constant 0 : index
    %1 = vector.load %arg3[%c0_1, %c0_2] : memref<2x384xf32, #tpu.memory_space<vmem>>, vector<2x384xf32>
    %c0_i32 = arith.constant 0 : i32
    %2 = arith.index_cast %c0_i32 : i32 to index
    %c0_3 = arith.constant 0 : index
    %c0_4 = arith.constant 0 : index
    %3 = vector.load %arg0[%2, %c0_3, %c0_4] : memref<8x2x1536xf32, #tpu.memory_space<vmem>>, vector<1x2x1536xf32>
    %4 = vector.shape_cast %3 : vector<1x2x1536xf32> to vector<2x1536xf32>
    %5 = arith.truncf %0 : vector<2x384xf32> to vector<2x384xbf16>
    %c0_5 = arith.constant 0 : index
    %c0_6 = arith.constant 0 : index
    %6 = vector.load %arg1[%c0_5, %c0_6] : memref<384x1536xbf16, #tpu.memory_space<vmem>>, vector<384x1536xbf16>
    %cst = arith.constant dense<0.000000e+00> : vector<2x1536xf32>
    %7 = tpu.matmul %5, %6, %cst {dimension_numbers = #tpu.dot_dimension_numbers<[1], [0], [0], [1], [0, 0, 1, 1], [], []>} : vector<2x384xbf16>, vector<384x1536xbf16>, vector<2x1536xf32> -> vector<2x1536xf32>
    %8 = arith.addf %4, %7 : vector<2x1536xf32>
    %9 = vector.extract_strided_slice %8 {offsets = [0, 0], sizes = [2, 384], strides = [1, 1]} : vector<2x1536xf32> to vector<2x384xf32>
    %10 = arith.negf %9 : vector<2x384xf32>
    %11 = math.exp %10 : vector<2x384xf32>
    %cst_7 = arith.constant 1.000000e+00 : f32
    %12 = vector.broadcast %cst_7 : f32 to vector<2x384xf32>
    %13 = arith.addf %12, %11 : vector<2x384xf32>
    %14 = arith.divf %12, %13 : vector<2x384xf32>
    %15 = vector.extract_strided_slice %8 {offsets = [0, 384], sizes = [2, 384], strides = [1, 1]} : vector<2x1536xf32> to vector<2x384xf32>
    %16 = arith.negf %15 : vector<2x384xf32>
    %17 = math.exp %16 : vector<2x384xf32>
    %cst_8 = arith.constant 1.000000e+00 : f32
    %18 = vector.broadcast %cst_8 : f32 to vector<2x384xf32>
    %19 = arith.addf %18, %17 : vector<2x384xf32>
    %20 = arith.divf %18, %19 : vector<2x384xf32>
    %21 = vector.extract_strided_slice %8 {offsets = [0, 768], sizes = [2, 384], strides = [1, 1]} : vector<2x1536xf32> to vector<2x384xf32>
    %22 = math.tanh %21 : vector<2x384xf32>
    %23 = vector.extract_strided_slice %8 {offsets = [0, 1152], sizes = [2, 384], strides = [1, 1]} : vector<2x1536xf32> to vector<2x384xf32>
    %24 = arith.negf %23 : vector<2x384xf32>
    %25 = math.exp %24 : vector<2x384xf32>
    %cst_9 = arith.constant 1.000000e+00 : f32
    %26 = vector.broadcast %cst_9 : f32 to vector<2x384xf32>
    %27 = arith.addf %26, %25 : vector<2x384xf32>
    %28 = arith.divf %26, %27 : vector<2x384xf32>
    %29 = arith.mulf %20, %1 : vector<2x384xf32>
    %30 = arith.mulf %14, %22 : vector<2x384xf32>
    %31 = arith.addf %29, %30 : vector<2x384xf32>
    %32 = math.tanh %31 : vector<2x384xf32>
    %33 = arith.mulf %28, %32 : vector<2x384xf32>
    %c1_i32 = arith.constant 1 : i32
    %34 = arith.index_cast %c1_i32 : i32 to index
    %c0_10 = arith.constant 0 : index
    %c0_11 = arith.constant 0 : index
    %35 = vector.load %arg0[%34, %c0_10, %c0_11] : memref<8x2x1536xf32, #tpu.memory_space<vmem>>, vector<1x2x1536xf32>
    %36 = vector.shape_cast %35 : vector<1x2x1536xf32> to vector<2x1536xf32>
    %37 = arith.truncf %33 : vector<2x384xf32> to vector<2x384xbf16>
    %c0_12 = arith.constant 0 : index
    %c0_13 = arith.constant 0 : index
    %38 = vector.load %arg1[%c0_12, %c0_13] : memref<384x1536xbf16, #tpu.memory_space<vmem>>, vector<384x1536xbf16>
    %cst_14 = arith.constant dense<0.000000e+00> : vector<2x1536xf32>
    %39 = tpu.matmul %37, %38, %cst_14 {dimension_numbers = #tpu.dot_dimension_numbers<[1], [0], [0], [1], [0, 0, 1, 1], [], []>} : vector<2x384xbf16>, vector<384x1536xbf16>, vector<2x1536xf32> -> vector<2x1536xf32>
    %40 = arith.addf %36, %39 : vector<2x1536xf32>
    %41 = vector.extract_strided_slice %40 {offsets = [0, 0], sizes = [2, 384], strides = [1, 1]} : vector<2x1536xf32> to vector<2x384xf32>
    %42 = arith.negf %41 : vector<2x384xf32>
    %43 = math.exp %42 : vector<2x384xf32>
    %cst_15 = arith.constant 1.000000e+00 : f32
    %44 = vector.broadcast %cst_15 : f32 to vector<2x384xf32>
    %45 = arith.addf %44, %43 : vector<2x384xf32>
    %46 = arith.divf %44, %45 : vector<2x384xf32>
    %47 = vector.extract_strided_slice %40 {offsets = [0, 384], sizes = [2, 384], strides = [1, 1]} : vector<2x1536xf32> to vector<2x384xf32>
    %48 = arith.negf %47 : vector<2x384xf32>
    %49 = math.exp %48 : vector<2x384xf32>
    %cst_16 = arith.constant 1.000000e+00 : f32
    %50 = vector.broadcast %cst_16 : f32 to vector<2x384xf32>
    %51 = arith.addf %50, %49 : vector<2x384xf32>
    %52 = arith.divf %50, %51 : vector<2x384xf32>
    %53 = vector.extract_strided_slice %40 {offsets = [0, 768], sizes = [2, 384], strides = [1, 1]} : vector<2x1536xf32> to vector<2x384xf32>
    %54 = math.tanh %53 : vector<2x384xf32>
    %55 = vector.extract_strided_slice %40 {offsets = [0, 1152], sizes = [2, 384], strides = [1, 1]} : vector<2x1536xf32> to vector<2x384xf32>
    %56 = arith.negf %55 : vector<2x384xf32>
    %57 = math.exp %56 : vector<2x384xf32>
    %cst_17 = arith.constant 1.000000e+00 : f32
    %58 = vector.broadcast %cst_17 : f32 to vector<2x384xf32>
    %59 = arith.addf %58, %57 : vector<2x384xf32>
    %60 = arith.divf %58, %59 : vector<2x384xf32>
    %61 = arith.mulf %52, %31 : vector<2x384xf32>
    %62 = arith.mulf %46, %54 : vector<2x384xf32>
    %63 = arith.addf %61, %62 : vector<2x384xf32>
    %64 = math.tanh %63 : vector<2x384xf32>
    %65 = arith.mulf %60, %64 : vector<2x384xf32>
    %c2_i32 = arith.constant 2 : i32
    %66 = arith.index_cast %c2_i32 : i32 to index
    %c0_18 = arith.constant 0 : index
    %c0_19 = arith.constant 0 : index
    %67 = vector.load %arg0[%66, %c0_18, %c0_19] : memref<8x2x1536xf32, #tpu.memory_space<vmem>>, vector<1x2x1536xf32>
    %68 = vector.shape_cast %67 : vector<1x2x1536xf32> to vector<2x1536xf32>
    %69 = arith.truncf %65 : vector<2x384xf32> to vector<2x384xbf16>
    %c0_20 = arith.constant 0 : index
    %c0_21 = arith.constant 0 : index
    %70 = vector.load %arg1[%c0_20, %c0_21] : memref<384x1536xbf16, #tpu.memory_space<vmem>>, vector<384x1536xbf16>
    %cst_22 = arith.constant dense<0.000000e+00> : vector<2x1536xf32>
    %71 = tpu.matmul %69, %70, %cst_22 {dimension_numbers = #tpu.dot_dimension_numbers<[1], [0], [0], [1], [0, 0, 1, 1], [], []>} : vector<2x384xbf16>, vector<384x1536xbf16>, vector<2x1536xf32> -> vector<2x1536xf32>
    %72 = arith.addf %68, %71 : vector<2x1536xf32>
    %73 = vector.extract_strided_slice %72 {offsets = [0, 0], sizes = [2, 384], strides = [1, 1]} : vector<2x1536xf32> to vector<2x384xf32>
    %74 = arith.negf %73 : vector<2x384xf32>
    %75 = math.exp %74 : vector<2x384xf32>
    %cst_23 = arith.constant 1.000000e+00 : f32
    %76 = vector.broadcast %cst_23 : f32 to vector<2x384xf32>
    %77 = arith.addf %76, %75 : vector<2x384xf32>
    %78 = arith.divf %76, %77 : vector<2x384xf32>
    %79 = vector.extract_strided_slice %72 {offsets = [0, 384], sizes = [2, 384], strides = [1, 1]} : vector<2x1536xf32> to vector<2x384xf32>
    %80 = arith.negf %79 : vector<2x384xf32>
    %81 = math.exp %80 : vector<2x384xf32>
    %cst_24 = arith.constant 1.000000e+00 : f32
    %82 = vector.broadcast %cst_24 : f32 to vector<2x384xf32>
    %83 = arith.addf %82, %81 : vector<2x384xf32>
    %84 = arith.divf %82, %83 : vector<2x384xf32>
    %85 = vector.extract_strided_slice %72 {offsets = [0, 768], sizes = [2, 384], strides = [1, 1]} : vector<2x1536xf32> to vector<2x384xf32>
    %86 = math.tanh %85 : vector<2x384xf32>
    %87 = vector.extract_strided_slice %72 {offsets = [0, 1152], sizes = [2, 384], strides = [1, 1]} : vector<2x1536xf32> to vector<2x384xf32>
    %88 = arith.negf %87 : vector<2x384xf32>
    %89 = math.exp %88 : vector<2x384xf32>
    %cst_25 = arith.constant 1.000000e+00 : f32
    %90 = vector.broadcast %cst_25 : f32 to vector<2x384xf32>
    %91 = arith.addf %90, %89 : vector<2x384xf32>
    %92 = arith.divf %90, %91 : vector<2x384xf32>
    %93 = arith.mulf %84, %63 : vector<2x384xf32>
    %94 = arith.mulf %78, %86 : vector<2x384xf32>
    %95 = arith.addf %93, %94 : vector<2x384xf32>
    %96 = math.tanh %95 : vector<2x384xf32>
    %97 = arith.mulf %92, %96 : vector<2x384xf32>
    %c3_i32 = arith.constant 3 : i32
    %98 = arith.index_cast %c3_i32 : i32 to index
    %c0_26 = arith.constant 0 : index
    %c0_27 = arith.constant 0 : index
    %99 = vector.load %arg0[%98, %c0_26, %c0_27] : memref<8x2x1536xf32, #tpu.memory_space<vmem>>, vector<1x2x1536xf32>
    %100 = vector.shape_cast %99 : vector<1x2x1536xf32> to vector<2x1536xf32>
    %101 = arith.truncf %97 : vector<2x384xf32> to vector<2x384xbf16>
    %c0_28 = arith.constant 0 : index
    %c0_29 = arith.constant 0 : index
    %102 = vector.load %arg1[%c0_28, %c0_29] : memref<384x1536xbf16, #tpu.memory_space<vmem>>, vector<384x1536xbf16>
    %cst_30 = arith.constant dense<0.000000e+00> : vector<2x1536xf32>
    %103 = tpu.matmul %101, %102, %cst_30 {dimension_numbers = #tpu.dot_dimension_numbers<[1], [0], [0], [1], [0, 0, 1, 1], [], []>} : vector<2x384xbf16>, vector<384x1536xbf16>, vector<2x1536xf32> -> vector<2x1536xf32>
    %104 = arith.addf %100, %103 : vector<2x1536xf32>
    %105 = vector.extract_strided_slice %104 {offsets = [0, 0], sizes = [2, 384], strides = [1, 1]} : vector<2x1536xf32> to vector<2x384xf32>
    %106 = arith.negf %105 : vector<2x384xf32>
    %107 = math.exp %106 : vector<2x384xf32>
    %cst_31 = arith.constant 1.000000e+00 : f32
    %108 = vector.broadcast %cst_31 : f32 to vector<2x384xf32>
    %109 = arith.addf %108, %107 : vector<2x384xf32>
    %110 = arith.divf %108, %109 : vector<2x384xf32>
    %111 = vector.extract_strided_slice %104 {offsets = [0, 384], sizes = [2, 384], strides = [1, 1]} : vector<2x1536xf32> to vector<2x384xf32>
    %112 = arith.negf %111 : vector<2x384xf32>
    %113 = math.exp %112 : vector<2x384xf32>
    %cst_32 = arith.constant 1.000000e+00 : f32
    %114 = vector.broadcast %cst_32 : f32 to vector<2x384xf32>
    %115 = arith.addf %114, %113 : vector<2x384xf32>
    %116 = arith.divf %114, %115 : vector<2x384xf32>
    %117 = vector.extract_strided_slice %104 {offsets = [0, 768], sizes = [2, 384], strides = [1, 1]} : vector<2x1536xf32> to vector<2x384xf32>
    %118 = math.tanh %117 : vector<2x384xf32>
    %119 = vector.extract_strided_slice %104 {offsets = [0, 1152], sizes = [2, 384], strides = [1, 1]} : vector<2x1536xf32> to vector<2x384xf32>
    %120 = arith.negf %119 : vector<2x384xf32>
    %121 = math.exp %120 : vector<2x384xf32>
    %cst_33 = arith.constant 1.000000e+00 : f32
    %122 = vector.broadcast %cst_33 : f32 to vector<2x384xf32>
    %123 = arith.addf %122, %121 : vector<2x384xf32>
    %124 = arith.divf %122, %123 : vector<2x384xf32>
    %125 = arith.mulf %116, %95 : vector<2x384xf32>
    %126 = arith.mulf %110, %118 : vector<2x384xf32>
    %127 = arith.addf %125, %126 : vector<2x384xf32>
    %128 = math.tanh %127 : vector<2x384xf32>
    %129 = arith.mulf %124, %128 : vector<2x384xf32>
    %c4_i32 = arith.constant 4 : i32
    %130 = arith.index_cast %c4_i32 : i32 to index
    %c0_34 = arith.constant 0 : index
    %c0_35 = arith.constant 0 : index
    %131 = vector.load %arg0[%130, %c0_34, %c0_35] : memref<8x2x1536xf32, #tpu.memory_space<vmem>>, vector<1x2x1536xf32>
    %132 = vector.shape_cast %131 : vector<1x2x1536xf32> to vector<2x1536xf32>
    %133 = arith.truncf %129 : vector<2x384xf32> to vector<2x384xbf16>
    %c0_36 = arith.constant 0 : index
    %c0_37 = arith.constant 0 : index
    %134 = vector.load %arg1[%c0_36, %c0_37] : memref<384x1536xbf16, #tpu.memory_space<vmem>>, vector<384x1536xbf16>
    %cst_38 = arith.constant dense<0.000000e+00> : vector<2x1536xf32>
    %135 = tpu.matmul %133, %134, %cst_38 {dimension_numbers = #tpu.dot_dimension_numbers<[1], [0], [0], [1], [0, 0, 1, 1], [], []>} : vector<2x384xbf16>, vector<384x1536xbf16>, vector<2x1536xf32> -> vector<2x1536xf32>
    %136 = arith.addf %132, %135 : vector<2x1536xf32>
    %137 = vector.extract_strided_slice %136 {offsets = [0, 0], sizes = [2, 384], strides = [1, 1]} : vector<2x1536xf32> to vector<2x384xf32>
    %138 = arith.negf %137 : vector<2x384xf32>
    %139 = math.exp %138 : vector<2x384xf32>
    %cst_39 = arith.constant 1.000000e+00 : f32
    %140 = vector.broadcast %cst_39 : f32 to vector<2x384xf32>
    %141 = arith.addf %140, %139 : vector<2x384xf32>
    %142 = arith.divf %140, %141 : vector<2x384xf32>
    %143 = vector.extract_strided_slice %136 {offsets = [0, 384], sizes = [2, 384], strides = [1, 1]} : vector<2x1536xf32> to vector<2x384xf32>
    %144 = arith.negf %143 : vector<2x384xf32>
    %145 = math.exp %144 : vector<2x384xf32>
    %cst_40 = arith.constant 1.000000e+00 : f32
    %146 = vector.broadcast %cst_40 : f32 to vector<2x384xf32>
    %147 = arith.addf %146, %145 : vector<2x384xf32>
    %148 = arith.divf %146, %147 : vector<2x384xf32>
    %149 = vector.extract_strided_slice %136 {offsets = [0, 768], sizes = [2, 384], strides = [1, 1]} : vector<2x1536xf32> to vector<2x384xf32>
    %150 = math.tanh %149 : vector<2x384xf32>
    %151 = vector.extract_strided_slice %136 {offsets = [0, 1152], sizes = [2, 384], strides = [1, 1]} : vector<2x1536xf32> to vector<2x384xf32>
    %152 = arith.negf %151 : vector<2x384xf32>
    %153 = math.exp %152 : vector<2x384xf32>
    %cst_41 = arith.constant 1.000000e+00 : f32
    %154 = vector.broadcast %cst_41 : f32 to vector<2x384xf32>
    %155 = arith.addf %154, %153 : vector<2x384xf32>
    %156 = arith.divf %154, %155 : vector<2x384xf32>
    %157 = arith.mulf %148, %127 : vector<2x384xf32>
    %158 = arith.mulf %142, %150 : vector<2x384xf32>
    %159 = arith.addf %157, %158 : vector<2x384xf32>
    %160 = math.tanh %159 : vector<2x384xf32>
    %161 = arith.mulf %156, %160 : vector<2x384xf32>
    %c5_i32 = arith.constant 5 : i32
    %162 = arith.index_cast %c5_i32 : i32 to index
    %c0_42 = arith.constant 0 : index
    %c0_43 = arith.constant 0 : index
    %163 = vector.load %arg0[%162, %c0_42, %c0_43] : memref<8x2x1536xf32, #tpu.memory_space<vmem>>, vector<1x2x1536xf32>
    %164 = vector.shape_cast %163 : vector<1x2x1536xf32> to vector<2x1536xf32>
    %165 = arith.truncf %161 : vector<2x384xf32> to vector<2x384xbf16>
    %c0_44 = arith.constant 0 : index
    %c0_45 = arith.constant 0 : index
    %166 = vector.load %arg1[%c0_44, %c0_45] : memref<384x1536xbf16, #tpu.memory_space<vmem>>, vector<384x1536xbf16>
    %cst_46 = arith.constant dense<0.000000e+00> : vector<2x1536xf32>
    %167 = tpu.matmul %165, %166, %cst_46 {dimension_numbers = #tpu.dot_dimension_numbers<[1], [0], [0], [1], [0, 0, 1, 1], [], []>} : vector<2x384xbf16>, vector<384x1536xbf16>, vector<2x1536xf32> -> vector<2x1536xf32>
    %168 = arith.addf %164, %167 : vector<2x1536xf32>
    %169 = vector.extract_strided_slice %168 {offsets = [0, 0], sizes = [2, 384], strides = [1, 1]} : vector<2x1536xf32> to vector<2x384xf32>
    %170 = arith.negf %169 : vector<2x384xf32>
    %171 = math.exp %170 : vector<2x384xf32>
    %cst_47 = arith.constant 1.000000e+00 : f32
    %172 = vector.broadcast %cst_47 : f32 to vector<2x384xf32>
    %173 = arith.addf %172, %171 : vector<2x384xf32>
    %174 = arith.divf %172, %173 : vector<2x384xf32>
    %175 = vector.extract_strided_slice %168 {offsets = [0, 384], sizes = [2, 384], strides = [1, 1]} : vector<2x1536xf32> to vector<2x384xf32>
    %176 = arith.negf %175 : vector<2x384xf32>
    %177 = math.exp %176 : vector<2x384xf32>
    %cst_48 = arith.constant 1.000000e+00 : f32
    %178 = vector.broadcast %cst_48 : f32 to vector<2x384xf32>
    %179 = arith.addf %178, %177 : vector<2x384xf32>
    %180 = arith.divf %178, %179 : vector<2x384xf32>
    %181 = vector.extract_strided_slice %168 {offsets = [0, 768], sizes = [2, 384], strides = [1, 1]} : vector<2x1536xf32> to vector<2x384xf32>
    %182 = math.tanh %181 : vector<2x384xf32>
    %183 = vector.extract_strided_slice %168 {offsets = [0, 1152], sizes = [2, 384], strides = [1, 1]} : vector<2x1536xf32> to vector<2x384xf32>
    %184 = arith.negf %183 : vector<2x384xf32>
    %185 = math.exp %184 : vector<2x384xf32>
    %cst_49 = arith.constant 1.000000e+00 : f32
    %186 = vector.broadcast %cst_49 : f32 to vector<2x384xf32>
    %187 = arith.addf %186, %185 : vector<2x384xf32>
    %188 = arith.divf %186, %187 : vector<2x384xf32>
    %189 = arith.mulf %180, %159 : vector<2x384xf32>
    %190 = arith.mulf %174, %182 : vector<2x384xf32>
    %191 = arith.addf %189, %190 : vector<2x384xf32>
    %192 = math.tanh %191 : vector<2x384xf32>
    %193 = arith.mulf %188, %192 : vector<2x384xf32>
    %c6_i32 = arith.constant 6 : i32
    %194 = arith.index_cast %c6_i32 : i32 to index
    %c0_50 = arith.constant 0 : index
    %c0_51 = arith.constant 0 : index
    %195 = vector.load %arg0[%194, %c0_50, %c0_51] : memref<8x2x1536xf32, #tpu.memory_space<vmem>>, vector<1x2x1536xf32>
    %196 = vector.shape_cast %195 : vector<1x2x1536xf32> to vector<2x1536xf32>
    %197 = arith.truncf %193 : vector<2x384xf32> to vector<2x384xbf16>
    %c0_52 = arith.constant 0 : index
    %c0_53 = arith.constant 0 : index
    %198 = vector.load %arg1[%c0_52, %c0_53] : memref<384x1536xbf16, #tpu.memory_space<vmem>>, vector<384x1536xbf16>
    %cst_54 = arith.constant dense<0.000000e+00> : vector<2x1536xf32>
    %199 = tpu.matmul %197, %198, %cst_54 {dimension_numbers = #tpu.dot_dimension_numbers<[1], [0], [0], [1], [0, 0, 1, 1], [], []>} : vector<2x384xbf16>, vector<384x1536xbf16>, vector<2x1536xf32> -> vector<2x1536xf32>
    %200 = arith.addf %196, %199 : vector<2x1536xf32>
    %201 = vector.extract_strided_slice %200 {offsets = [0, 0], sizes = [2, 384], strides = [1, 1]} : vector<2x1536xf32> to vector<2x384xf32>
    %202 = arith.negf %201 : vector<2x384xf32>
    %203 = math.exp %202 : vector<2x384xf32>
    %cst_55 = arith.constant 1.000000e+00 : f32
    %204 = vector.broadcast %cst_55 : f32 to vector<2x384xf32>
    %205 = arith.addf %204, %203 : vector<2x384xf32>
    %206 = arith.divf %204, %205 : vector<2x384xf32>
    %207 = vector.extract_strided_slice %200 {offsets = [0, 384], sizes = [2, 384], strides = [1, 1]} : vector<2x1536xf32> to vector<2x384xf32>
    %208 = arith.negf %207 : vector<2x384xf32>
    %209 = math.exp %208 : vector<2x384xf32>
    %cst_56 = arith.constant 1.000000e+00 : f32
    %210 = vector.broadcast %cst_56 : f32 to vector<2x384xf32>
    %211 = arith.addf %210, %209 : vector<2x384xf32>
    %212 = arith.divf %210, %211 : vector<2x384xf32>
    %213 = vector.extract_strided_slice %200 {offsets = [0, 768], sizes = [2, 384], strides = [1, 1]} : vector<2x1536xf32> to vector<2x384xf32>
    %214 = math.tanh %213 : vector<2x384xf32>
    %215 = vector.extract_strided_slice %200 {offsets = [0, 1152], sizes = [2, 384], strides = [1, 1]} : vector<2x1536xf32> to vector<2x384xf32>
    %216 = arith.negf %215 : vector<2x384xf32>
    %217 = math.exp %216 : vector<2x384xf32>
    %cst_57 = arith.constant 1.000000e+00 : f32
    %218 = vector.broadcast %cst_57 : f32 to vector<2x384xf32>
    %219 = arith.addf %218, %217 : vector<2x384xf32>
    %220 = arith.divf %218, %219 : vector<2x384xf32>
    %221 = arith.mulf %212, %191 : vector<2x384xf32>
    %222 = arith.mulf %206, %214 : vector<2x384xf32>
    %223 = arith.addf %221, %222 : vector<2x384xf32>
    %224 = math.tanh %223 : vector<2x384xf32>
    %225 = arith.mulf %220, %224 : vector<2x384xf32>
    %c7_i32 = arith.constant 7 : i32
    %226 = arith.index_cast %c7_i32 : i32 to index
    %c0_58 = arith.constant 0 : index
    %c0_59 = arith.constant 0 : index
    %227 = vector.load %arg0[%226, %c0_58, %c0_59] : memref<8x2x1536xf32, #tpu.memory_space<vmem>>, vector<1x2x1536xf32>
    %228 = vector.shape_cast %227 : vector<1x2x1536xf32> to vector<2x1536xf32>
    %229 = arith.truncf %225 : vector<2x384xf32> to vector<2x384xbf16>
    %c0_60 = arith.constant 0 : index
    %c0_61 = arith.constant 0 : index
    %230 = vector.load %arg1[%c0_60, %c0_61] : memref<384x1536xbf16, #tpu.memory_space<vmem>>, vector<384x1536xbf16>
    %cst_62 = arith.constant dense<0.000000e+00> : vector<2x1536xf32>
    %231 = tpu.matmul %229, %230, %cst_62 {dimension_numbers = #tpu.dot_dimension_numbers<[1], [0], [0], [1], [0, 0, 1, 1], [], []>} : vector<2x384xbf16>, vector<384x1536xbf16>, vector<2x1536xf32> -> vector<2x1536xf32>
    %232 = arith.addf %228, %231 : vector<2x1536xf32>
    %233 = vector.extract_strided_slice %232 {offsets = [0, 0], sizes = [2, 384], strides = [1, 1]} : vector<2x1536xf32> to vector<2x384xf32>
    %234 = arith.negf %233 : vector<2x384xf32>
    %235 = math.exp %234 : vector<2x384xf32>
    %cst_63 = arith.constant 1.000000e+00 : f32
    %236 = vector.broadcast %cst_63 : f32 to vector<2x384xf32>
    %237 = arith.addf %236, %235 : vector<2x384xf32>
    %238 = arith.divf %236, %237 : vector<2x384xf32>
    %239 = vector.extract_strided_slice %232 {offsets = [0, 384], sizes = [2, 384], strides = [1, 1]} : vector<2x1536xf32> to vector<2x384xf32>
    %240 = arith.negf %239 : vector<2x384xf32>
    %241 = math.exp %240 : vector<2x384xf32>
    %cst_64 = arith.constant 1.000000e+00 : f32
    %242 = vector.broadcast %cst_64 : f32 to vector<2x384xf32>
    %243 = arith.addf %242, %241 : vector<2x384xf32>
    %244 = arith.divf %242, %243 : vector<2x384xf32>
    %245 = vector.extract_strided_slice %232 {offsets = [0, 768], sizes = [2, 384], strides = [1, 1]} : vector<2x1536xf32> to vector<2x384xf32>
    %246 = math.tanh %245 : vector<2x384xf32>
    %247 = vector.extract_strided_slice %232 {offsets = [0, 1152], sizes = [2, 384], strides = [1, 1]} : vector<2x1536xf32> to vector<2x384xf32>
    %248 = arith.negf %247 : vector<2x384xf32>
    %249 = math.exp %248 : vector<2x384xf32>
    %cst_65 = arith.constant 1.000000e+00 : f32
    %250 = vector.broadcast %cst_65 : f32 to vector<2x384xf32>
    %251 = arith.addf %250, %249 : vector<2x384xf32>
    %252 = arith.divf %250, %251 : vector<2x384xf32>
    %253 = arith.mulf %244, %223 : vector<2x384xf32>
    %254 = arith.mulf %238, %246 : vector<2x384xf32>
    %255 = arith.addf %253, %254 : vector<2x384xf32>
    %256 = math.tanh %255 : vector<2x384xf32>
    %257 = arith.mulf %252, %256 : vector<2x384xf32>
    %c8_i32 = arith.constant 8 : i32
    %c0_66 = arith.constant 0 : index
    %c0_67 = arith.constant 0 : index
    %258 = vector.load %arg4[%c0_66, %c0_67] : memref<2x384xf32, #tpu.memory_space<vmem>>, vector<2x384xf32>
    tpu.vector_store %arg4[%c0_66, %c0_67], %257 {strides = array<i32>} : memref<2x384xf32, #tpu.memory_space<vmem>>, vector<2x384xf32>,
    return
  }
}

</mosaic_0001>

<llo_original>
// kernel: bilstm_forward.1
$region0: #{bilstm_forward.1}
  #allocation0 [shape = 'u32[]', space=smem, size = 0x4, offset = 0x4, fixed_abs, tag = 'smem constant byte address 0x4 - core index']
  #allocation1 [shape = 'u32[72,128]{1,0:T(1,128)}', space=vmem, size = 0x9000, scoped, tag = 'internal scratch']
  %s0 = inlined_call_operand.vmem [shape: f32[8,2,1536], index: 0, kind: input, shape index: {}]
  %s1 = inlined_call_operand.vmem [shape: bf16[384,1536], index: 1, kind: input, shape index: {}]
  %s2 = inlined_call_operand.vmem [shape: f32[2,384], index: 2, kind: input, shape index: {}]
  %s3 = inlined_call_operand.vmem [shape: f32[2,384], index: 3, kind: input, shape index: {}]
  %s4 = inlined_call_operand.vmem [shape: f32[2,384], index: 4, kind: output, shape index: {}]
  %s5 = sld [smem:[#allocation0]]
  $region26: #{bilstm_forward.1} parent=0
    _
  %s7 = ssub.s32 1, %s5
  %s8 = scalar_select 0, %s7, %s5
  // Predicated region
  $region2: #{bilstm_forward.1} parent=0 // pred_check
    _
  $region3: #{bilstm_forward.1} parent=0 // pred_check_branch
    %10 = sbr.rel (0) target = $region5
  $region4: #{bilstm_forward.1} parent=0 // pred_region
    _
  $region5: #{bilstm_forward.1} parent=0 // pred_fallthru
    _
  // Predicated region
  $region6: #{bilstm_forward.1} parent=0 // pred_check
    _
  $region7: #{bilstm_forward.1} parent=0 // pred_check_branch
    %12 = sbr.rel (0) target = $region9
  $region8: #{bilstm_forward.1} parent=0 // pred_region
    _
  $region9: #{bilstm_forward.1} parent=0 // pred_fallthru
    _
  // Predicated region
  $region10: #{bilstm_forward.1} parent=0 // pred_check
    _
  $region11: #{bilstm_forward.1} parent=0 // pred_check_branch
    %14 = sbr.rel (0) target = $region13
  $region12: #{bilstm_forward.1} parent=0 // pred_region
    _
  $region13: #{bilstm_forward.1} parent=0 // pred_fallthru
    _
  // Predicated region
  $region14: #{bilstm_forward.1} parent=0 // pred_check
    _
  $region15: #{bilstm_forward.1} parent=0 // pred_check_branch
    %16 = sbr.rel (0) target = $region17
  $region16: #{bilstm_forward.1} parent=0 // pred_region
    _
  $region17: #{bilstm_forward.1} parent=0 // pred_fallthru
    _
  %v17 = vld [vmem:[%s2] sm:$0x3f]
  %v18 = vld [vmem:[%s3] sm:$0x3f]
  %v19 = vld [vmem:[%s0] sm:$0xff]
  %v20 = vld [vmem:[%s0 + $0x8] sm:$0xff]
  %v21 = vld [vmem:[%s0 + $0x10] sm:$0xff]
  %23 = vst [vmem:[#allocation1] ss:$4 sm:$0xff] %v17
  %v24 = vld.sshfl [vmem:[#allocation1] sm:$0xff pattern:$0x73625140]
  %v25 = vld.sshfl [vmem:[#allocation1 + $0x8] sm:$0xff pattern:$0x73625140]
  %v26 = vld.sshfl [vmem:[#allocation1 + $0x10] sm:$0xff pattern:$0x73625140]
  %v30 = vpack.c.bf16 %v24, %v24
  %v31 = vpack.c.bf16 %v25, %v25
  %v32 = vpack.c.bf16 %v26, %v26
  %v33 = vld [vmem:[%s1] sm:$0xff]
  %v34 = vld [vmem:[%s1 + $0x8] sm:$0xff]
  %v35 = vld [vmem:[%s1 + $0x10] sm:$0xff]
  %v36 = vld [vmem:[%s1 + $0x18] sm:$0xff]
  %v37 = vld [vmem:[%s1 + $0x20] sm:$0xff]
  %v38 = vld [vmem:[%s1 + $0x28] sm:$0xff]
  %v39 = vld [vmem:[%s1 + $0x30] sm:$0xff]
  %v40 = vld [vmem:[%s1 + $0x38] sm:$0xff]
  %v41 = vld [vmem:[%s1 + $0x40] sm:$0xff]
  %v42 = vld [vmem:[%s1 + $0x48] sm:$0xff]
  %v43 = vld [vmem:[%s1 + $0x50] sm:$0xff]
  %v44 = vld [vmem:[%s1 + $0x58] sm:$0xff]
  %v45 = vld [vmem:[%s1 + $0x60] sm:$0xff]
  %v46 = vld [vmem:[%s1 + $0x68] sm:$0xff]
  %v47 = vld [vmem:[%s1 + $0x70] sm:$0xff]
  %v48 = vld [vmem:[%s1 + $0x78] sm:$0xff]
  %v49 = vld [vmem:[%s1 + $0x80] sm:$0xff]
  %v50 = vld [vmem:[%s1 + $0x88] sm:$0xff]
  %v51 = vld [vmem:[%s1 + $0x90] sm:$0xff]
  %v52 = vld [vmem:[%s1 + $0x98] sm:$0xff]
  %v53 = vld [vmem:[%s1 + $0xa0] sm:$0xff]
  %v54 = vld [vmem:[%s1 + $0xa8] sm:$0xff]
  %v55 = vld [vmem:[%s1 + $0xb0] sm:$0xff]
  %v56 = vld [vmem:[%s1 + $0xb8] sm:$0xff]
  %v57 = vld [vmem:[%s1 + $0xc0] sm:$0xff]
  %v58 = vld [vmem:[%s1 + $0xc8] sm:$0xff]
  %v59 = vld [vmem:[%s1 + $0xd0] sm:$0xff]
  %v60 = vld [vmem:[%s1 + $0xd8] sm:$0xff]
  %v61 = vld [vmem:[%s1 + $0xe0] sm:$0xff]
  %v62 = vld [vmem:[%s1 + $0xe8] sm:$0xff]
  %v63 = vld [vmem:[%s1 + $0xf0] sm:$0xff]
  %v64 = vld [vmem:[%s1 + $0xf8] sm:$0xff]
  %v65 = vld [vmem:[%s1 + $0x100] sm:$0xff]
  %v66 = vld [vmem:[%s1 + $0x108] sm:$0xff]
  %v67 = vld [vmem:[%s1 + $0x110] sm:$0xff]
  %v68 = vld [vmem:[%s1 + $0x118] sm:$0xff]
  %v69 = vld [vmem:[%s1 + $0x120] sm:$0xff]
  %v70 = vld [vmem:[%s1 + $0x128] sm:$0xff]
  %v71 = vld [vmem:[%s1 + $0x130] sm:$0xff]
  %v72 = vld [vmem:[%s1 + $0x138] sm:$0xff]
  %v73 = vld [vmem:[%s1 + $0x140] sm:$0xff]
  %v74 = vld [vmem:[%s1 + $0x148] sm:$0xff]
  %v75 = vld [vmem:[%s1 + $0x150] sm:$0xff]
  %v76 = vld [vmem:[%s1 + $0x158] sm:$0xff]
  %v77 = vld [vmem:[%s1 + $0x160] sm:$0xff]
  %v78 = vld [vmem:[%s1 + $0x168] sm:$0xff]
  %v79 = vld [vmem:[%s1 + $0x170] sm:$0xff]
  %v80 = vld [vmem:[%s1 + $0x178] sm:$0xff]
  %v81 = vld [vmem:[%s1 + $0x180] sm:$0xff]
  %v82 = vld [vmem:[%s1 + $0x188] sm:$0xff]
  %v83 = vld [vmem:[%s1 + $0x190] sm:$0xff]
  %v84 = vld [vmem:[%s1 + $0x198] sm:$0xff]
  %v85 = vld [vmem:[%s1 + $0x1a0] sm:$0xff]
  %v86 = vld [vmem:[%s1 + $0x1a8] sm:$0xff]
  %v87 = vld [vmem:[%s1 + $0x1b0] sm:$0xff]
  %v88 = vld [vmem:[%s1 + $0x1b8] sm:$0xff]
  %v89 = vld [vmem:[%s1 + $0x1c0] sm:$0xff]
  %v90 = vld [vmem:[%s1 + $0x1c8] sm:$0xff]
  %v91 = vld [vmem:[%s1 + $0x1d0] sm:$0xff]
  %v92 = vld [vmem:[%s1 + $0x1d8] sm:$0xff]
  %v93 = vld [vmem:[%s1 + $0x1e0] sm:$0xff]
  %v94 = vld [vmem:[%s1 + $0x1e8] sm:$0xff]
  %v95 = vld [vmem:[%s1 + $0x1f0] sm:$0xff]
  %v96 = vld [vmem:[%s1 + $0x1f8] sm:$0xff]
  %v97 = vld [vmem:[%s1 + $0x200] sm:$0xff]
  %v98 = vld [vmem:[%s1 + $0x208] sm:$0xff]
  %v99 = vld [vmem:[%s1 + $0x210] sm:$0xff]
  %v100 = vld [vmem:[%s1 + $0x218] sm:$0xff]
  %v101 = vld [vmem:[%s1 + $0x220] sm:$0xff]
  %v102 = vld [vmem:[%s1 + $0x228] sm:$0xff]
  %v103 = vld [vmem:[%s1 + $0x230] sm:$0xff]
  %v104 = vld [vmem:[%s1 + $0x238] sm:$0xff]
  %v105 = vld [vmem:[%s1 + $0x240] sm:$0xff]
  %v106 = vld [vmem:[%s1 + $0x248] sm:$0xff]
  %v107 = vld [vmem:[%s1 + $0x250] sm:$0xff]
  %v108 = vld [vmem:[%s1 + $0x258] sm:$0xff]
  %v109 = vld [vmem:[%s1 + $0x260] sm:$0xff]
  %v110 = vld [vmem:[%s1 + $0x268] sm:$0xff]
  %v111 = vld [vmem:[%s1 + $0x270] sm:$0xff]
  %v112 = vld [vmem:[%s1 + $0x278] sm:$0xff]
  %v113 = vld [vmem:[%s1 + $0x280] sm:$0xff]
  %v114 = vld [vmem:[%s1 + $0x288] sm:$0xff]
  %v115 = vld [vmem:[%s1 + $0x290] sm:$0xff]
  %v116 = vld [vmem:[%s1 + $0x298] sm:$0xff]
  %v117 = vld [vmem:[%s1 + $0x2a0] sm:$0xff]
  %v118 = vld [vmem:[%s1 + $0x2a8] sm:$0xff]
  %v119 = vld [vmem:[%s1 + $0x2b0] sm:$0xff]
  %v120 = vld [vmem:[%s1 + $0x2b8] sm:$0xff]
  %v121 = vld [vmem:[%s1 + $0x2c0] sm:$0xff]
  %v122 = vld [vmem:[%s1 + $0x2c8] sm:$0xff]
  %v123 = vld [vmem:[%s1 + $0x2d0] sm:$0xff]
  %v124 = vld [vmem:[%s1 + $0x2d8] sm:$0xff]
  %v125 = vld [vmem:[%s1 + $0x2e0] sm:$0xff]
  %v126 = vld [vmem:[%s1 + $0x2e8] sm:$0xff]
  %v127 = vld [vmem:[%s1 + $0x2f0] sm:$0xff]
  %v128 = vld [vmem:[%s1 + $0x2f8] sm:$0xff]
  %v129 = vld [vmem:[%s1 + $0x300] sm:$0xff]
  %v130 = vld [vmem:[%s1 + $0x308] sm:$0xff]
  %v131 = vld [vmem:[%s1 + $0x310] sm:$0xff]
  %v132 = vld [vmem:[%s1 + $0x318] sm:$0xff]
  %v133 = vld [vmem:[%s1 + $0x320] sm:$0xff]
  %v134 = vld [vmem:[%s1 + $0x328] sm:$0xff]
  %v135 = vld [vmem:[%s1 + $0x330] sm:$0xff]
  %v136 = vld [vmem:[%s1 + $0x338] sm:$0xff]
  %v137 = vld [vmem:[%s1 + $0x340] sm:$0xff]
  %v138 = vld [vmem:[%s1 + $0x348] sm:$0xff]
  %v139 = vld [vmem:[%s1 + $0x350] sm:$0xff]
  %v140 = vld [vmem:[%s1 + $0x358] sm:$0xff]
  %v141 = vld [vmem:[%s1 + $0x360] sm:$0xff]
  %v142 = vld [vmem:[%s1 + $0x368] sm:$0xff]
  %v143 = vld [vmem:[%s1 + $0x370] sm:$0xff]
  %v144 = vld [vmem:[%s1 + $0x378] sm:$0xff]
  %v145 = vld [vmem:[%s1 + $0x380] sm:$0xff]
  %v146 = vld [vmem:[%s1 + $0x388] sm:$0xff]
  %v147 = vld [vmem:[%s1 + $0x390] sm:$0xff]
  %v148 = vld [vmem:[%s1 + $0x398] sm:$0xff]
  %v149 = vld [vmem:[%s1 + $0x3a0] sm:$0xff]
  %v150 = vld [vmem:[%s1 + $0x3a8] sm:$0xff]
  %v151 = vld [vmem:[%s1 + $0x3b0] sm:$0xff]
  %v152 = vld [vmem:[%s1 + $0x3b8] sm:$0xff]
  %v153 = vld [vmem:[%s1 + $0x3c0] sm:$0xff]
  %v154 = vld [vmem:[%s1 + $0x3c8] sm:$0xff]
  %v155 = vld [vmem:[%s1 + $0x3d0] sm:$0xff]
  %v156 = vld [vmem:[%s1 + $0x3d8] sm:$0xff]
  %v157 = vld [vmem:[%s1 + $0x3e0] sm:$0xff]
  %v158 = vld [vmem:[%s1 + $0x3e8] sm:$0xff]
  %v159 = vld [vmem:[%s1 + $0x3f0] sm:$0xff]
  %v160 = vld [vmem:[%s1 + $0x3f8] sm:$0xff]
  %v161 = vld [vmem:[%s1 + $0x400] sm:$0xff]
  %v162 = vld [vmem:[%s1 + $0x408] sm:$0xff]
  %v163 = vld [vmem:[%s1 + $0x410] sm:$0xff]
  %v164 = vld [vmem:[%s1 + $0x418] sm:$0xff]
  %v165 = vld [vmem:[%s1 + $0x420] sm:$0xff]
  %v166 = vld [vmem:[%s1 + $0x428] sm:$0xff]
  %v167 = vld [vmem:[%s1 + $0x430] sm:$0xff]
  %v168 = vld [vmem:[%s1 + $0x438] sm:$0xff]
  %v169 = vld [vmem:[%s1 + $0x440] sm:$0xff]
  %v170 = vld [vmem:[%s1 + $0x448] sm:$0xff]
  %v171 = vld [vmem:[%s1 + $0x450] sm:$0xff]
  %v172 = vld [vmem:[%s1 + $0x458] sm:$0xff]
  %v173 = vld [vmem:[%s1 + $0x460] sm:$0xff]
  %v174 = vld [vmem:[%s1 + $0x468] sm:$0xff]
  %v175 = vld [vmem:[%s1 + $0x470] sm:$0xff]
  %v176 = vld [vmem:[%s1 + $0x478] sm:$0xff]
  %v177 = vld [vmem:[%s1 + $0x480] sm:$0xff]
  %v178 = vld [vmem:[%s1 + $0x488] sm:$0xff]
  %v179 = vld [vmem:[%s1 + $0x490] sm:$0xff]
  %v180 = vld [vmem:[%s1 + $0x498] sm:$0xff]
  %v181 = vld [vmem:[%s1 + $0x4a0] sm:$0xff]
  %v182 = vld [vmem:[%s1 + $0x4a8] sm:$0xff]
  %v183 = vld [vmem:[%s1 + $0x4b0] sm:$0xff]
  %v184 = vld [vmem:[%s1 + $0x4b8] sm:$0xff]
  %v185 = vld [vmem:[%s1 + $0x4c0] sm:$0xff]
  %v186 = vld [vmem:[%s1 + $0x4c8] sm:$0xff]
  %v187 = vld [vmem:[%s1 + $0x4d0] sm:$0xff]
  %v188 = vld [vmem:[%s1 + $0x4d8] sm:$0xff]
  %v189 = vld [vmem:[%s1 + $0x4e0] sm:$0xff]
  %v190 = vld [vmem:[%s1 + $0x4e8] sm:$0xff]
  %v191 = vld [vmem:[%s1 + $0x4f0] sm:$0xff]
  %v192 = vld [vmem:[%s1 + $0x4f8] sm:$0xff]
  %v193 = vld [vmem:[%s1 + $0x500] sm:$0xff]
  %v194 = vld [vmem:[%s1 + $0x508] sm:$0xff]
  %v195 = vld [vmem:[%s1 + $0x510] sm:$0xff]
  %v196 = vld [vmem:[%s1 + $0x518] sm:$0xff]
  %v197 = vld [vmem:[%s1 + $0x520] sm:$0xff]
  %v198 = vld [vmem:[%s1 + $0x528] sm:$0xff]
  %v199 = vld [vmem:[%s1 + $0x530] sm:$0xff]
  %v200 = vld [vmem:[%s1 + $0x538] sm:$0xff]
  %v201 = vld [vmem:[%s1 + $0x540] sm:$0xff]
  %v202 = vld [vmem:[%s1 + $0x548] sm:$0xff]
  %v203 = vld [vmem:[%s1 + $0x550] sm:$0xff]
  %v204 = vld [vmem:[%s1 + $0x558] sm:$0xff]
  %v205 = vld [vmem:[%s1 + $0x560] sm:$0xff]
  %v206 = vld [vmem:[%s1 + $0x568] sm:$0xff]
  %v207 = vld [vmem:[%s1 + $0x570] sm:$0xff]
  %v208 = vld [vmem:[%s1 + $0x578] sm:$0xff]
  %v209 = vld [vmem:[%s1 + $0x580] sm:$0xff]
  %v210 = vld [vmem:[%s1 + $0x588] sm:$0xff]
  %v211 = vld [vmem:[%s1 + $0x590] sm:$0xff]
  %v212 = vld [vmem:[%s1 + $0x598] sm:$0xff]
  %v213 = vld [vmem:[%s1 + $0x5a0] sm:$0xff]
  %v214 = vld [vmem:[%s1 + $0x5a8] sm:$0xff]
  %v215 = vld [vmem:[%s1 + $0x5b0] sm:$0xff]
  %v216 = vld [vmem:[%s1 + $0x5b8] sm:$0xff]
  %v217 = vld [vmem:[%s1 + $0x5c0] sm:$0xff]
  %v218 = vld [vmem:[%s1 + $0x5c8] sm:$0xff]
  %v219 = vld [vmem:[%s1 + $0x5d0] sm:$0xff]
  %v220 = vld [vmem:[%s1 + $0x5d8] sm:$0xff]
  %v221 = vld [vmem:[%s1 + $0x5e0] sm:$0xff]
  %v222 = vld [vmem:[%s1 + $0x5e8] sm:$0xff]
  %v223 = vld [vmem:[%s1 + $0x5f0] sm:$0xff]
  %v224 = vld [vmem:[%s1 + $0x5f8] sm:$0xff]
  %v225 = vld [vmem:[%s1 + $0x600] sm:$0xff]
  %v226 = vld [vmem:[%s1 + $0x608] sm:$0xff]
  %v227 = vld [vmem:[%s1 + $0x610] sm:$0xff]
  %v228 = vld [vmem:[%s1 + $0x618] sm:$0xff]
  %v229 = vld [vmem:[%s1 + $0x620] sm:$0xff]
  %v230 = vld [vmem:[%s1 + $0x628] sm:$0xff]
  %v231 = vld [vmem:[%s1 + $0x630] sm:$0xff]
  %v232 = vld [vmem:[%s1 + $0x638] sm:$0xff]
  %v233 = vld [vmem:[%s1 + $0x640] sm:$0xff]
  %v234 = vld [vmem:[%s1 + $0x648] sm:$0xff]
  %v235 = vld [vmem:[%s1 + $0x650] sm:$0xff]
  %v236 = vld [vmem:[%s1 + $0x658] sm:$0xff]
  %v237 = vld [vmem:[%s1 + $0x660] sm:$0xff]
  %v238 = vld [vmem:[%s1 + $0x668] sm:$0xff]
  %v239 = vld [vmem:[%s1 + $0x670] sm:$0xff]
  %v240 = vld [vmem:[%s1 + $0x678] sm:$0xff]
  %v241 = vld [vmem:[%s1 + $0x680] sm:$0xff]
  %v242 = vld [vmem:[%s1 + $0x688] sm:$0xff]
  %v243 = vld [vmem:[%s1 + $0x690] sm:$0xff]
  %v244 = vld [vmem:[%s1 + $0x698] sm:$0xff]
  %v245 = vld [vmem:[%s1 + $0x6a0] sm:$0xff]
  %v246 = vld [vmem:[%s1 + $0x6a8] sm:$0xff]
  %v247 = vld [vmem:[%s1 + $0x6b0] sm:$0xff]
  %v248 = vld [vmem:[%s1 + $0x6b8] sm:$0xff]
  %v249 = vld [vmem:[%s1 + $0x6c0] sm:$0xff]
  %v250 = vld [vmem:[%s1 + $0x6c8] sm:$0xff]
  %v251 = vld [vmem:[%s1 + $0x6d0] sm:$0xff]
  %v252 = vld [vmem:[%s1 + $0x6d8] sm:$0xff]
  %v253 = vld [vmem:[%s1 + $0x6e0] sm:$0xff]
  %v254 = vld [vmem:[%s1 + $0x6e8] sm:$0xff]
  %v255 = vld [vmem:[%s1 + $0x6f0] sm:$0xff]
  %v256 = vld [vmem:[%s1 + $0x6f8] sm:$0xff]
  %v257 = vld [vmem:[%s1 + $0x700] sm:$0xff]
  %v258 = vld [vmem:[%s1 + $0x708] sm:$0xff]
  %v259 = vld [vmem:[%s1 + $0x710] sm:$0xff]
  %v260 = vld [vmem:[%s1 + $0x718] sm:$0xff]
  %v261 = vld [vmem:[%s1 + $0x720] sm:$0xff]
  %v262 = vld [vmem:[%s1 + $0x728] sm:$0xff]
  %v263 = vld [vmem:[%s1 + $0x730] sm:$0xff]
  %v264 = vld [vmem:[%s1 + $0x738] sm:$0xff]
  %v265 = vld [vmem:[%s1 + $0x740] sm:$0xff]
  %v266 = vld [vmem:[%s1 + $0x748] sm:$0xff]
  %v267 = vld [vmem:[%s1 + $0x750] sm:$0xff]
  %v268 = vld [vmem:[%s1 + $0x758] sm:$0xff]
  %v269 = vld [vmem:[%s1 + $0x760] sm:$0xff]
  %v270 = vld [vmem:[%s1 + $0x768] sm:$0xff]
  %v271 = vld [vmem:[%s1 + $0x770] sm:$0xff]
  %v272 = vld [vmem:[%s1 + $0x778] sm:$0xff]
  %v273 = vld [vmem:[%s1 + $0x780] sm:$0xff]
  %v274 = vld [vmem:[%s1 + $0x788] sm:$0xff]
  %v275 = vld [vmem:[%s1 + $0x790] sm:$0xff]
  %v276 = vld [vmem:[%s1 + $0x798] sm:$0xff]
  %v277 = vld [vmem:[%s1 + $0x7a0] sm:$0xff]
  %v278 = vld [vmem:[%s1 + $0x7a8] sm:$0xff]
  %v279 = vld [vmem:[%s1 + $0x7b0] sm:$0xff]
  %v280 = vld [vmem:[%s1 + $0x7b8] sm:$0xff]
  %v281 = vld [vmem:[%s1 + $0x7c0] sm:$0xff]
  %v282 = vld [vmem:[%s1 + $0x7c8] sm:$0xff]
  %v283 = vld [vmem:[%s1 + $0x7d0] sm:$0xff]
  %v284 = vld [vmem:[%s1 + $0x7d8] sm:$0xff]
  %v285 = vld [vmem:[%s1 + $0x7e0] sm:$0xff]
  %v286 = vld [vmem:[%s1 + $0x7e8] sm:$0xff]
  %v287 = vld [vmem:[%s1 + $0x7f0] sm:$0xff]
  %v288 = vld [vmem:[%s1 + $0x7f8] sm:$0xff]
  %v289 = vld [vmem:[%s1 + $0x800] sm:$0xff]
  %v290 = vld [vmem:[%s1 + $0x808] sm:$0xff]
  %v291 = vld [vmem:[%s1 + $0x810] sm:$0xff]
  %v292 = vld [vmem:[%s1 + $0x818] sm:$0xff]
  %v293 = vld [vmem:[%s1 + $0x820] sm:$0xff]
  %v294 = vld [vmem:[%s1 + $0x828] sm:$0xff]
  %v295 = vld [vmem:[%s1 + $0x830] sm:$0xff]
  %v296 = vld [vmem:[%s1 + $0x838] sm:$0xff]
  %v297 = vld [vmem:[%s1 + $0x840] sm:$0xff]
  %v298 = vld [vmem:[%s1 + $0x848] sm:$0xff]
  %v299 = vld [vmem:[%s1 + $0x850] sm:$0xff]
  %v300 = vld [vmem:[%s1 + $0x858] sm:$0xff]
  %v301 = vld [vmem:[%s1 + $0x860] sm:$0xff]
  %v302 = vld [vmem:[%s1 + $0x868] sm:$0xff]
  %v303 = vld [vmem:[%s1 + $0x870] sm:$0xff]
  %v304 = vld [vmem:[%s1 + $0x878] sm:$0xff]
  %v305 = vld [vmem:[%s1 + $0x880] sm:$0xff]
  %v306 = vld [vmem:[%s1 + $0x888] sm:$0xff]
  %v307 = vld [vmem:[%s1 + $0x890] sm:$0xff]
  %v308 = vld [vmem:[%s1 + $0x898] sm:$0xff]
  %v309 = vld [vmem:[%s1 + $0x8a0] sm:$0xff]
  %v310 = vld [vmem:[%s1 + $0x8a8] sm:$0xff]
  %v311 = vld [vmem:[%s1 + $0x8b0] sm:$0xff]
  %v312 = vld [vmem:[%s1 + $0x8b8] sm:$0xff]
  %v313 = vld [vmem:[%s1 + $0x8c0] sm:$0xff]
  %v314 = vld [vmem:[%s1 + $0x8c8] sm:$0xff]
  %v315 = vld [vmem:[%s1 + $0x8d0] sm:$0xff]
  %v316 = vld [vmem:[%s1 + $0x8d8] sm:$0xff]
  %v317 = vld [vmem:[%s1 + $0x8e0] sm:$0xff]
  %v318 = vld [vmem:[%s1 + $0x8e8] sm:$0xff]
  %v319 = vld [vmem:[%s1 + $0x8f0] sm:$0xff]
  %v320 = vld [vmem:[%s1 + $0x8f8] sm:$0xff]
  %v609 = vunpack.c.l.b16 %v33
  %v610 = vunpack.c.h.b16 %v33
  %v611 = vunpack.c.l.b16 %v34
  %v612 = vunpack.c.h.b16 %v34
  %v613 = vunpack.c.l.b16 %v35
  %v614 = vunpack.c.h.b16 %v35
  %v615 = vunpack.c.l.b16 %v36
  %v616 = vunpack.c.h.b16 %v36
  %v617 = vunpack.c.l.b16 %v37
  %v618 = vunpack.c.h.b16 %v37
  %v619 = vunpack.c.l.b16 %v38
  %v620 = vunpack.c.h.b16 %v38
  %v621 = vunpack.c.l.b16 %v39
  %v622 = vunpack.c.h.b16 %v39
  %v623 = vunpack.c.l.b16 %v40
  %v624 = vunpack.c.h.b16 %v40
  %v625 = vunpack.c.l.b16 %v41
  %v626 = vunpack.c.h.b16 %v41
  %v627 = vunpack.c.l.b16 %v42
  %v628 = vunpack.c.h.b16 %v42
  %v629 = vunpack.c.l.b16 %v43
  %v630 = vunpack.c.h.b16 %v43
  %v631 = vunpack.c.l.b16 %v44
  %v632 = vunpack.c.h.b16 %v44
  %v633 = vunpack.c.l.b16 %v45
  %v634 = vunpack.c.h.b16 %v45
  %v635 = vunpack.c.l.b16 %v46
  %v636 = vunpack.c.h.b16 %v46
  %v637 = vunpack.c.l.b16 %v47
  %v638 = vunpack.c.h.b16 %v47
  %v639 = vunpack.c.l.b16 %v48
  %v640 = vunpack.c.h.b16 %v48
  %v641 = vunpack.c.l.b16 %v49
  %v642 = vunpack.c.h.b16 %v49
  %v643 = vunpack.c.l.b16 %v50
  %v644 = vunpack.c.h.b16 %v50
  %v645 = vunpack.c.l.b16 %v51
  %v646 = vunpack.c.h.b16 %v51
  %v647 = vunpack.c.l.b16 %v52
  %v648 = vunpack.c.h.b16 %v52
  %v649 = vunpack.c.l.b16 %v53
  %v650 = vunpack.c.h.b16 %v53
  %v651 = vunpack.c.l.b16 %v54
  %v652 = vunpack.c.h.b16 %v54
  %v653 = vunpack.c.l.b16 %v55
  %v654 = vunpack.c.h.b16 %v55
  %v655 = vunpack.c.l.b16 %v56
  %v656 = vunpack.c.h.b16 %v56
  %v657 = vunpack.c.l.b16 %v57
  %v658 = vunpack.c.h.b16 %v57
  %v659 = vunpack.c.l.b16 %v58
  %v660 = vunpack.c.h.b16 %v58
  %v661 = vunpack.c.l.b16 %v59
  %v662 = vunpack.c.h.b16 %v59
  %v663 = vunpack.c.l.b16 %v60
  %v664 = vunpack.c.h.b16 %v60
  %v665 = vunpack.c.l.b16 %v61
  %v666 = vunpack.c.h.b16 %v61
  %v667 = vunpack.c.l.b16 %v62
  %v668 = vunpack.c.h.b16 %v62
  %v669 = vunpack.c.l.b16 %v63
  %v670 = vunpack.c.h.b16 %v63
  %v671 = vunpack.c.l.b16 %v64
  %v672 = vunpack.c.h.b16 %v64
  %v673 = vunpack.c.l.b16 %v65
  %v674 = vunpack.c.h.b16 %v65
  %v675 = vunpack.c.l.b16 %v66
  %v676 = vunpack.c.h.b16 %v66
  %v677 = vunpack.c.l.b16 %v67
  %v678 = vunpack.c.h.b16 %v67
  %v679 = vunpack.c.l.b16 %v68
  %v680 = vunpack.c.h.b16 %v68
  %v681 = vunpack.c.l.b16 %v69
  %v682 = vunpack.c.h.b16 %v69
  %v683 = vunpack.c.l.b16 %v70
  %v684 = vunpack.c.h.b16 %v70
  %v685 = vunpack.c.l.b16 %v71
  %v686 = vunpack.c.h.b16 %v71
  %v687 = vunpack.c.l.b16 %v72
  %v688 = vunpack.c.h.b16 %v72
  %v689 = vunpack.c.l.b16 %v73
  %v690 = vunpack.c.h.b16 %v73
  %v691 = vunpack.c.l.b16 %v74
  %v692 = vunpack.c.h.b16 %v74
  %v693 = vunpack.c.l.b16 %v75
  %v694 = vunpack.c.h.b16 %v75
  %v695 = vunpack.c.l.b16 %v76
  %v696 = vunpack.c.h.b16 %v76
  %v697 = vunpack.c.l.b16 %v77
  %v698 = vunpack.c.h.b16 %v77
  %v699 = vunpack.c.l.b16 %v78
  %v700 = vunpack.c.h.b16 %v78
  %v701 = vunpack.c.l.b16 %v79
  %v702 = vunpack.c.h.b16 %v79
  %v703 = vunpack.c.l.b16 %v80
  %v704 = vunpack.c.h.b16 %v80
  %v705 = vunpack.c.l.b16 %v81
  %v706 = vunpack.c.h.b16 %v81
  %v707 = vunpack.c.l.b16 %v82
  %v708 = vunpack.c.h.b16 %v82
  %v709 = vunpack.c.l.b16 %v83
  %v710 = vunpack.c.h.b16 %v83
  %v711 = vunpack.c.l.b16 %v84
  %v712 = vunpack.c.h.b16 %v84
  %v713 = vunpack.c.l.b16 %v85
  %v714 = vunpack.c.h.b16 %v85
  %v715 = vunpack.c.l.b16 %v86
  %v716 = vunpack.c.h.b16 %v86
  %v717 = vunpack.c.l.b16 %v87
  %v718 = vunpack.c.h.b16 %v87
  %v719 = vunpack.c.l.b16 %v88
  %v720 = vunpack.c.h.b16 %v88
  %v721 = vunpack.c.l.b16 %v89
  %v722 = vunpack.c.h.b16 %v89
  %v723 = vunpack.c.l.b16 %v90
  %v724 = vunpack.c.h.b16 %v90
  %v725 = vunpack.c.l.b16 %v91
  %v726 = vunpack.c.h.b16 %v91
  %v727 = vunpack.c.l.b16 %v92
  %v728 = vunpack.c.h.b16 %v92
  %v729 = vunpack.c.l.b16 %v93
  %v730 = vunpack.c.h.b16 %v93
  %v731 = vunpack.c.l.b16 %v94
  %v732 = vunpack.c.h.b16 %v94
  %v733 = vunpack.c.l.b16 %v95
  %v734 = vunpack.c.h.b16 %v95
  %v735 = vunpack.c.l.b16 %v96
  %v736 = vunpack.c.h.b16 %v96
  %v737 = vunpack.c.l.b16 %v97
  %v738 = vunpack.c.h.b16 %v97
  %v739 = vunpack.c.l.b16 %v98
  %v740 = vunpack.c.h.b16 %v98
  %v741 = vunpack.c.l.b16 %v99
  %v742 = vunpack.c.h.b16 %v99
  %v743 = vunpack.c.l.b16 %v100
  %v744 = vunpack.c.h.b16 %v100
  %v745 = vunpack.c.l.b16 %v101
  %v746 = vunpack.c.h.b16 %v101
  %v747 = vunpack.c.l.b16 %v102
  %v748 = vunpack.c.h.b16 %v102
  %v749 = vunpack.c.l.b16 %v103
  %v750 = vunpack.c.h.b16 %v103
  %v751 = vunpack.c.l.b16 %v104
  %v752 = vunpack.c.h.b16 %v104
  %v753 = vunpack.c.l.b16 %v105
  %v754 = vunpack.c.h.b16 %v105
  %v755 = vunpack.c.l.b16 %v106
  %v756 = vunpack.c.h.b16 %v106
  %v757 = vunpack.c.l.b16 %v107
  %v758 = vunpack.c.h.b16 %v107
  %v759 = vunpack.c.l.b16 %v108
  %v760 = vunpack.c.h.b16 %v108
  %v761 = vunpack.c.l.b16 %v109
  %v762 = vunpack.c.h.b16 %v109
  %v763 = vunpack.c.l.b16 %v110
  %v764 = vunpack.c.h.b16 %v110
  %v765 = vunpack.c.l.b16 %v111
  %v766 = vunpack.c.h.b16 %v111
  %v767 = vunpack.c.l.b16 %v112
  %v768 = vunpack.c.h.b16 %v112
  %v769 = vunpack.c.l.b16 %v113
  %v770 = vunpack.c.h.b16 %v113
  %v771 = vunpack.c.l.b16 %v114
  %v772 = vunpack.c.h.b16 %v114
  %v773 = vunpack.c.l.b16 %v115
  %v774 = vunpack.c.h.b16 %v115
  %v775 = vunpack.c.l.b16 %v116
  %v776 = vunpack.c.h.b16 %v116
  %v777 = vunpack.c.l.b16 %v117
  %v778 = vunpack.c.h.b16 %v117
  %v779 = vunpack.c.l.b16 %v118
  %v780 = vunpack.c.h.b16 %v118
  %v781 = vunpack.c.l.b16 %v119
  %v782 = vunpack.c.h.b16 %v119
  %v783 = vunpack.c.l.b16 %v120
  %v784 = vunpack.c.h.b16 %v120
  %v785 = vunpack.c.l.b16 %v121
  %v786 = vunpack.c.h.b16 %v121
  %v787 = vunpack.c.l.b16 %v122
  %v788 = vunpack.c.h.b16 %v122
  %v789 = vunpack.c.l.b16 %v123
  %v790 = vunpack.c.h.b16 %v123
  %v791 = vunpack.c.l.b16 %v124
  %v792 = vunpack.c.h.b16 %v124
  %v793 = vunpack.c.l.b16 %v125
  %v794 = vunpack.c.h.b16 %v125
  %v795 = vunpack.c.l.b16 %v126
  %v796 = vunpack.c.h.b16 %v126
  %v797 = vunpack.c.l.b16 %v127
  %v798 = vunpack.c.h.b16 %v127
  %v799 = vunpack.c.l.b16 %v128
  %v800 = vunpack.c.h.b16 %v128
  %v801 = vunpack.c.l.b16 %v129
  %v802 = vunpack.c.h.b16 %v129
  %v803 = vunpack.c.l.b16 %v130
  %v804 = vunpack.c.h.b16 %v130
  %v805 = vunpack.c.l.b16 %v131
  %v806 = vunpack.c.h.b16 %v131
  %v807 = vunpack.c.l.b16 %v132
  %v808 = vunpack.c.h.b16 %v132
  %v809 = vunpack.c.l.b16 %v133
  %v810 = vunpack.c.h.b16 %v133
  %v811 = vunpack.c.l.b16 %v134
  %v812 = vunpack.c.h.b16 %v134
  %v813 = vunpack.c.l.b16 %v135
  %v814 = vunpack.c.h.b16 %v135
  %v815 = vunpack.c.l.b16 %v136
  %v816 = vunpack.c.h.b16 %v136
  %v817 = vunpack.c.l.b16 %v137
  %v818 = vunpack.c.h.b16 %v137
  %v819 = vunpack.c.l.b16 %v138
  %v820 = vunpack.c.h.b16 %v138
  %v821 = vunpack.c.l.b16 %v139
  %v822 = vunpack.c.h.b16 %v139
  %v823 = vunpack.c.l.b16 %v140
  %v824 = vunpack.c.h.b16 %v140
  %v825 = vunpack.c.l.b16 %v141
  %v826 = vunpack.c.h.b16 %v141
  %v827 = vunpack.c.l.b16 %v142
  %v828 = vunpack.c.h.b16 %v142
  %v829 = vunpack.c.l.b16 %v143
  %v830 = vunpack.c.h.b16 %v143
  %v831 = vunpack.c.l.b16 %v144
  %v832 = vunpack.c.h.b16 %v144
  %v833 = vunpack.c.l.b16 %v145
  %v834 = vunpack.c.h.b16 %v145
  %v835 = vunpack.c.l.b16 %v146
  %v836 = vunpack.c.h.b16 %v146
  %v837 = vunpack.c.l.b16 %v147
  %v838 = vunpack.c.h.b16 %v147
  %v839 = vunpack.c.l.b16 %v148
  %v840 = vunpack.c.h.b16 %v148
  %v841 = vunpack.c.l.b16 %v149
  %v842 = vunpack.c.h.b16 %v149
  %v843 = vunpack.c.l.b16 %v150
  %v844 = vunpack.c.h.b16 %v150
  %v845 = vunpack.c.l.b16 %v151
  %v846 = vunpack.c.h.b16 %v151
  %v847 = vunpack.c.l.b16 %v152
  %v848 = vunpack.c.h.b16 %v152
  %v849 = vunpack.c.l.b16 %v153
  %v850 = vunpack.c.h.b16 %v153
  %v851 = vunpack.c.l.b16 %v154
  %v852 = vunpack.c.h.b16 %v154
  %v853 = vunpack.c.l.b16 %v155
  %v854 = vunpack.c.h.b16 %v155
  %v855 = vunpack.c.l.b16 %v156
  %v856 = vunpack.c.h.b16 %v156
  %v857 = vunpack.c.l.b16 %v157
  %v858 = vunpack.c.h.b16 %v157
  %v859 = vunpack.c.l.b16 %v158
  %v860 = vunpack.c.h.b16 %v158
  %v861 = vunpack.c.l.b16 %v159
  %v862 = vunpack.c.h.b16 %v159
  %v863 = vunpack.c.l.b16 %v160
  %v864 = vunpack.c.h.b16 %v160
  %v865 = vunpack.c.l.b16 %v161
  %v866 = vunpack.c.h.b16 %v161
  %v867 = vunpack.c.l.b16 %v162
  %v868 = vunpack.c.h.b16 %v162
  %v869 = vunpack.c.l.b16 %v163
  %v870 = vunpack.c.h.b16 %v163
  %v871 = vunpack.c.l.b16 %v164
  %v872 = vunpack.c.h.b16 %v164
  %v873 = vunpack.c.l.b16 %v165
  %v874 = vunpack.c.h.b16 %v165
  %v875 = vunpack.c.l.b16 %v166
  %v876 = vunpack.c.h.b16 %v166
  %v877 = vunpack.c.l.b16 %v167
  %v878 = vunpack.c.h.b16 %v167
  %v879 = vunpack.c.l.b16 %v168
  %v880 = vunpack.c.h.b16 %v168
  %v881 = vunpack.c.l.b16 %v169
  %v882 = vunpack.c.h.b16 %v169
  %v883 = vunpack.c.l.b16 %v170
  %v884 = vunpack.c.h.b16 %v170
  %v885 = vunpack.c.l.b16 %v171
  %v886 = vunpack.c.h.b16 %v171
  %v887 = vunpack.c.l.b16 %v172
  %v888 = vunpack.c.h.b16 %v172
  %v889 = vunpack.c.l.b16 %v173
  %v890 = vunpack.c.h.b16 %v173
  %v891 = vunpack.c.l.b16 %v174
  %v892 = vunpack.c.h.b16 %v174
  %v893 = vunpack.c.l.b16 %v175
  %v894 = vunpack.c.h.b16 %v175
  %v895 = vunpack.c.l.b16 %v176
  %v896 = vunpack.c.h.b16 %v176
  %v897 = vunpack.c.l.b16 %v177
  %v898 = vunpack.c.h.b16 %v177
  %v899 = vunpack.c.l.b16 %v178
  %v900 = vunpack.c.h.b16 %v178
  %v901 = vunpack.c.l.b16 %v179
  %v902 = vunpack.c.h.b16 %v179
  %v903 = vunpack.c.l.b16 %v180
  %v904 = vunpack.c.h.b16 %v180
  %v905 = vunpack.c.l.b16 %v181
  %v906 = vunpack.c.h.b16 %v181
  %v907 = vunpack.c.l.b16 %v182
  %v908 = vunpack.c.h.b16 %v182
  %v909 = vunpack.c.l.b16 %v183
  %v910 = vunpack.c.h.b16 %v183
  %v911 = vunpack.c.l.b16 %v184
  %v912 = vunpack.c.h.b16 %v184
  %v913 = vunpack.c.l.b16 %v185
  %v914 = vunpack.c.h.b16 %v185
  %v915 = vunpack.c.l.b16 %v186
  %v916 = vunpack.c.h.b16 %v186
  %v917 = vunpack.c.l.b16 %v187
  %v918 = vunpack.c.h.b16 %v187
  %v919 = vunpack.c.l.b16 %v188
  %v920 = vunpack.c.h.b16 %v188
  %v921 = vunpack.c.l.b16 %v189
  %v922 = vunpack.c.h.b16 %v189
  %v923 = vunpack.c.l.b16 %v190
  %v924 = vunpack.c.h.b16 %v190
  %v925 = vunpack.c.l.b16 %v191
  %v926 = vunpack.c.h.b16 %v191
  %v927 = vunpack.c.l.b16 %v192
  %v928 = vunpack.c.h.b16 %v192
  %v929 = vunpack.c.l.b16 %v193
  %v930 = vunpack.c.h.b16 %v193
  %v931 = vunpack.c.l.b16 %v194
  %v932 = vunpack.c.h.b16 %v194
  %v933 = vunpack.c.l.b16 %v195
  %v934 = vunpack.c.h.b16 %v195
  %v935 = vunpack.c.l.b16 %v196
  %v936 = vunpack.c.h.b16 %v196
  %v937 = vunpack.c.l.b16 %v197
  %v938 = vunpack.c.h.b16 %v197
  %v939 = vunpack.c.l.b16 %v198
  %v940 = vunpack.c.h.b16 %v198
  %v941 = vunpack.c.l.b16 %v199
  %v942 = vunpack.c.h.b16 %v199
  %v943 = vunpack.c.l.b16 %v200
  %v944 = vunpack.c.h.b16 %v200
  %v945 = vunpack.c.l.b16 %v201
  %v946 = vunpack.c.h.b16 %v201
  %v947 = vunpack.c.l.b16 %v202
  %v948 = vunpack.c.h.b16 %v202
  %v949 = vunpack.c.l.b16 %v203
  %v950 = vunpack.c.h.b16 %v203
  %v951 = vunpack.c.l.b16 %v204
  %v952 = vunpack.c.h.b16 %v204
  %v953 = vunpack.c.l.b16 %v205
  %v954 = vunpack.c.h.b16 %v205
  %v955 = vunpack.c.l.b16 %v206
  %v956 = vunpack.c.h.b16 %v206
  %v957 = vunpack.c.l.b16 %v207
  %v958 = vunpack.c.h.b16 %v207
  %v959 = vunpack.c.l.b16 %v208
  %v960 = vunpack.c.h.b16 %v208
  %v961 = vunpack.c.l.b16 %v209
  %v962 = vunpack.c.h.b16 %v209
  %v963 = vunpack.c.l.b16 %v210
  %v964 = vunpack.c.h.b16 %v210
  %v965 = vunpack.c.l.b16 %v211
  %v966 = vunpack.c.h.b16 %v211
  %v967 = vunpack.c.l.b16 %v212
  %v968 = vunpack.c.h.b16 %v212
  %v969 = vunpack.c.l.b16 %v213
  %v970 = vunpack.c.h.b16 %v213
  %v971 = vunpack.c.l.b16 %v214
  %v972 = vunpack.c.h.b16 %v214
  %v973 = vunpack.c.l.b16 %v215
  %v974 = vunpack.c.h.b16 %v215
  %v975 = vunpack.c.l.b16 %v216
  %v976 = vunpack.c.h.b16 %v216
  %v977 = vunpack.c.l.b16 %v217
  %v978 = vunpack.c.h.b16 %v217
  %v979 = vunpack.c.l.b16 %v218
  %v980 = vunpack.c.h.b16 %v218
  %v981 = vunpack.c.l.b16 %v219
  %v982 = vunpack.c.h.b16 %v219
  %v983 = vunpack.c.l.b16 %v220
  %v984 = vunpack.c.h.b16 %v220
  %v985 = vunpack.c.l.b16 %v221
  %v986 = vunpack.c.h.b16 %v221
  %v987 = vunpack.c.l.b16 %v222
  %v988 = vunpack.c.h.b16 %v222
  %v989 = vunpack.c.l.b16 %v223
  %v990 = vunpack.c.h.b16 %v223
  %v991 = vunpack.c.l.b16 %v224
  %v992 = vunpack.c.h.b16 %v224
  %v993 = vunpack.c.l.b16 %v225
  %v994 = vunpack.c.h.b16 %v225
  %v995 = vunpack.c.l.b16 %v226
  %v996 = vunpack.c.h.b16 %v226
  %v997 = vunpack.c.l.b16 %v227
  %v998 = vunpack.c.h.b16 %v227
  %v999 = vunpack.c.l.b16 %v228
  %v1000 = vunpack.c.h.b16 %v228
  %v1001 = vunpack.c.l.b16 %v229
  %v1002 = vunpack.c.h.b16 %v229
  %v1003 = vunpack.c.l.b16 %v230
  %v1004 = vunpack.c.h.b16 %v230
  %v1005 = vunpack.c.l.b16 %v231
  %v1006 = vunpack.c.h.b16 %v231
  %v1007 = vunpack.c.l.b16 %v232
  %v1008 = vunpack.c.h.b16 %v232
  %v1009 = vunpack.c.l.b16 %v233
  %v1010 = vunpack.c.h.b16 %v233
  %v1011 = vunpack.c.l.b16 %v234
  %v1012 = vunpack.c.h.b16 %v234
  %v1013 = vunpack.c.l.b16 %v235
  %v1014 = vunpack.c.h.b16 %v235
  %v1015 = vunpack.c.l.b16 %v236
  %v1016 = vunpack.c.h.b16 %v236
  %v1017 = vunpack.c.l.b16 %v237
  %v1018 = vunpack.c.h.b16 %v237
  %v1019 = vunpack.c.l.b16 %v238
  %v1020 = vunpack.c.h.b16 %v238
  %v1021 = vunpack.c.l.b16 %v239
  %v1022 = vunpack.c.h.b16 %v239
  %v1023 = vunpack.c.l.b16 %v240
  %v1024 = vunpack.c.h.b16 %v240
  %v1025 = vunpack.c.l.b16 %v241
  %v1026 = vunpack.c.h.b16 %v241
  %v1027 = vunpack.c.l.b16 %v242
  %v1028 = vunpack.c.h.b16 %v242
  %v1029 = vunpack.c.l.b16 %v243
  %v1030 = vunpack.c.h.b16 %v243
  %v1031 = vunpack.c.l.b16 %v244
  %v1032 = vunpack.c.h.b16 %v244
  %v1033 = vunpack.c.l.b16 %v245
  %v1034 = vunpack.c.h.b16 %v245
  %v1035 = vunpack.c.l.b16 %v246
  %v1036 = vunpack.c.h.b16 %v246
  %v1037 = vunpack.c.l.b16 %v247
  %v1038 = vunpack.c.h.b16 %v247
  %v1039 = vunpack.c.l.b16 %v248
  %v1040 = vunpack.c.h.b16 %v248
  %v1041 = vunpack.c.l.b16 %v249
  %v1042 = vunpack.c.h.b16 %v249
  %v1043 = vunpack.c.l.b16 %v250
  %v1044 = vunpack.c.h.b16 %v250
  %v1045 = vunpack.c.l.b16 %v251
  %v1046 = vunpack.c.h.b16 %v251
  %v1047 = vunpack.c.l.b16 %v252
  %v1048 = vunpack.c.h.b16 %v252
  %v1049 = vunpack.c.l.b16 %v253
  %v1050 = vunpack.c.h.b16 %v253
  %v1051 = vunpack.c.l.b16 %v254
  %v1052 = vunpack.c.h.b16 %v254
  %v1053 = vunpack.c.l.b16 %v255
  %v1054 = vunpack.c.h.b16 %v255
  %v1055 = vunpack.c.l.b16 %v256
  %v1056 = vunpack.c.h.b16 %v256
  %v1057 = vunpack.c.l.b16 %v257
  %v1058 = vunpack.c.h.b16 %v257
  %v1059 = vunpack.c.l.b16 %v258
  %v1060 = vunpack.c.h.b16 %v258
  %v1061 = vunpack.c.l.b16 %v259
  %v1062 = vunpack.c.h.b16 %v259
  %v1063 = vunpack.c.l.b16 %v260
  %v1064 = vunpack.c.h.b16 %v260
  %v1065 = vunpack.c.l.b16 %v261
  %v1066 = vunpack.c.h.b16 %v261
  %v1067 = vunpack.c.l.b16 %v262
  %v1068 = vunpack.c.h.b16 %v262
  %v1069 = vunpack.c.l.b16 %v263
  %v1070 = vunpack.c.h.b16 %v263
  %v1071 = vunpack.c.l.b16 %v264
  %v1072 = vunpack.c.h.b16 %v264
  %v1073 = vunpack.c.l.b16 %v265
  %v1074 = vunpack.c.h.b16 %v265
  %v1075 = vunpack.c.l.b16 %v266
  %v1076 = vunpack.c.h.b16 %v266
  %v1077 = vunpack.c.l.b16 %v267
  %v1078 = vunpack.c.h.b16 %v267
  %v1079 = vunpack.c.l.b16 %v268
  %v1080 = vunpack.c.h.b16 %v268
  %v1081 = vunpack.c.l.b16 %v269
  %v1082 = vunpack.c.h.b16 %v269
  %v1083 = vunpack.c.l.b16 %v270
  %v1084 = vunpack.c.h.b16 %v270
  %v1085 = vunpack.c.l.b16 %v271
  %v1086 = vunpack.c.h.b16 %v271
  %v1087 = vunpack.c.l.b16 %v272
  %v1088 = vunpack.c.h.b16 %v272
  %v1089 = vunpack.c.l.b16 %v273
  %v1090 = vunpack.c.h.b16 %v273
  %v1091 = vunpack.c.l.b16 %v274
  %v1092 = vunpack.c.h.b16 %v274
  %v1093 = vunpack.c.l.b16 %v275
  %v1094 = vunpack.c.h.b16 %v275
  %v1095 = vunpack.c.l.b16 %v276
  %v1096 = vunpack.c.h.b16 %v276
  %v1097 = vunpack.c.l.b16 %v277
  %v1098 = vunpack.c.h.b16 %v277
  %v1099 = vunpack.c.l.b16 %v278
  %v1100 = vunpack.c.h.b16 %v278
  %v1101 = vunpack.c.l.b16 %v279
  %v1102 = vunpack.c.h.b16 %v279
  %v1103 = vunpack.c.l.b16 %v280
  %v1104 = vunpack.c.h.b16 %v280
  %v1105 = vunpack.c.l.b16 %v281
  %v1106 = vunpack.c.h.b16 %v281
  %v1107 = vunpack.c.l.b16 %v282
  %v1108 = vunpack.c.h.b16 %v282
  %v1109 = vunpack.c.l.b16 %v283
  %v1110 = vunpack.c.h.b16 %v283
  %v1111 = vunpack.c.l.b16 %v284
  %v1112 = vunpack.c.h.b16 %v284
  %v1113 = vunpack.c.l.b16 %v285
  %v1114 = vunpack.c.h.b16 %v285
  %v1115 = vunpack.c.l.b16 %v286
  %v1116 = vunpack.c.h.b16 %v286
  %v1117 = vunpack.c.l.b16 %v287
  %v1118 = vunpack.c.h.b16 %v287
  %v1119 = vunpack.c.l.b16 %v288
  %v1120 = vunpack.c.h.b16 %v288
  %v1121 = vunpack.c.l.b16 %v289
  %v1122 = vunpack.c.h.b16 %v289
  %v1123 = vunpack.c.l.b16 %v290
  %v1124 = vunpack.c.h.b16 %v290
  %v1125 = vunpack.c.l.b16 %v291
  %v1126 = vunpack.c.h.b16 %v291
  %v1127 = vunpack.c.l.b16 %v292
  %v1128 = vunpack.c.h.b16 %v292
  %v1129 = vunpack.c.l.b16 %v293
  %v1130 = vunpack.c.h.b16 %v293
  %v1131 = vunpack.c.l.b16 %v294
  %v1132 = vunpack.c.h.b16 %v294
  %v1133 = vunpack.c.l.b16 %v295
  %v1134 = vunpack.c.h.b16 %v295
  %v1135 = vunpack.c.l.b16 %v296
  %v1136 = vunpack.c.h.b16 %v296
  %v1137 = vunpack.c.l.b16 %v297
  %v1138 = vunpack.c.h.b16 %v297
  %v1139 = vunpack.c.l.b16 %v298
  %v1140 = vunpack.c.h.b16 %v298
  %v1141 = vunpack.c.l.b16 %v299
  %v1142 = vunpack.c.h.b16 %v299
  %v1143 = vunpack.c.l.b16 %v300
  %v1144 = vunpack.c.h.b16 %v300
  %v1145 = vunpack.c.l.b16 %v301
  %v1146 = vunpack.c.h.b16 %v301
  %v1147 = vunpack.c.l.b16 %v302
  %v1148 = vunpack.c.h.b16 %v302
  %v1149 = vunpack.c.l.b16 %v303
  %v1150 = vunpack.c.h.b16 %v303
  %v1151 = vunpack.c.l.b16 %v304
  %v1152 = vunpack.c.h.b16 %v304
  %v1153 = vunpack.c.l.b16 %v305
  %v1154 = vunpack.c.h.b16 %v305
  %v1155 = vunpack.c.l.b16 %v306
  %v1156 = vunpack.c.h.b16 %v306
  %v1157 = vunpack.c.l.b16 %v307
  %v1158 = vunpack.c.h.b16 %v307
  %v1159 = vunpack.c.l.b16 %v308
  %v1160 = vunpack.c.h.b16 %v308
  %v1161 = vunpack.c.l.b16 %v309
  %v1162 = vunpack.c.h.b16 %v309
  %v1163 = vunpack.c.l.b16 %v310
  %v1164 = vunpack.c.h.b16 %v310
  %v1165 = vunpack.c.l.b16 %v311
  %v1166 = vunpack.c.h.b16 %v311
  %v1167 = vunpack.c.l.b16 %v312
  %v1168 = vunpack.c.h.b16 %v312
  %v1169 = vunpack.c.l.b16 %v313
  %v1170 = vunpack.c.h.b16 %v313
  %v1171 = vunpack.c.l.b16 %v314
  %v1172 = vunpack.c.h.b16 %v314
  %v1173 = vunpack.c.l.b16 %v315
  %v1174 = vunpack.c.h.b16 %v315
  %v1175 = vunpack.c.l.b16 %v316
  %v1176 = vunpack.c.h.b16 %v316
  %v1177 = vunpack.c.l.b16 %v317
  %v1178 = vunpack.c.h.b16 %v317
  %v1179 = vunpack.c.l.b16 %v318
  %v1180 = vunpack.c.h.b16 %v318
  %v1181 = vunpack.c.l.b16 %v319
  %v1182 = vunpack.c.h.b16 %v319
  %v1183 = vunpack.c.l.b16 %v320
  %v1184 = vunpack.c.h.b16 %v320
  %v1185 = vpack.c.b16 %v621, %v609
  %v1186 = vpack.c.b16 %v622, %v610
  %v1187 = vpack.c.b16 %v623, %v611
  %v1188 = vpack.c.b16 %v624, %v612
  %v1189 = vpack.c.b16 %v625, %v613
  %v1190 = vpack.c.b16 %v626, %v614
  %v1191 = vpack.c.b16 %v627, %v615
  %v1192 = vpack.c.b16 %v628, %v616
  %v1193 = vpack.c.b16 %v629, %v617
  %v1194 = vpack.c.b16 %v630, %v618
  %v1195 = vpack.c.b16 %v631, %v619
  %v1196 = vpack.c.b16 %v632, %v620
  %v1197 = vpack.c.b16 %v645, %v633
  %v1198 = vpack.c.b16 %v646, %v634
  %v1199 = vpack.c.b16 %v647, %v635
  %v1200 = vpack.c.b16 %v648, %v636
  %v1201 = vpack.c.b16 %v649, %v637
  %v1202 = vpack.c.b16 %v650, %v638
  %v1203 = vpack.c.b16 %v651, %v639
  %v1204 = vpack.c.b16 %v652, %v640
  %v1205 = vpack.c.b16 %v653, %v641
  %v1206 = vpack.c.b16 %v654, %v642
  %v1207 = vpack.c.b16 %v655, %v643
  %v1208 = vpack.c.b16 %v656, %v644
  %v1209 = vpack.c.b16 %v669, %v657
  %v1210 = vpack.c.b16 %v670, %v658
  %v1211 = vpack.c.b16 %v671, %v659
  %v1212 = vpack.c.b16 %v672, %v660
  %v1213 = vpack.c.b16 %v673, %v661
  %v1214 = vpack.c.b16 %v674, %v662
  %v1215 = vpack.c.b16 %v675, %v663
  %v1216 = vpack.c.b16 %v676, %v664
  %v1217 = vpack.c.b16 %v677, %v665
  %v1218 = vpack.c.b16 %v678, %v666
  %v1219 = vpack.c.b16 %v679, %v667
  %v1220 = vpack.c.b16 %v680, %v668
  %v1221 = vpack.c.b16 %v693, %v681
  %v1222 = vpack.c.b16 %v694, %v682
  %v1223 = vpack.c.b16 %v695, %v683
  %v1224 = vpack.c.b16 %v696, %v684
  %v1225 = vpack.c.b16 %v697, %v685
  %v1226 = vpack.c.b16 %v698, %v686
  %v1227 = vpack.c.b16 %v699, %v687
  %v1228 = vpack.c.b16 %v700, %v688
  %v1229 = vpack.c.b16 %v701, %v689
  %v1230 = vpack.c.b16 %v702, %v690
  %v1231 = vpack.c.b16 %v703, %v691
  %v1232 = vpack.c.b16 %v704, %v692
  %v1233 = vpack.c.b16 %v717, %v705
  %v1234 = vpack.c.b16 %v718, %v706
  %v1235 = vpack.c.b16 %v719, %v707
  %v1236 = vpack.c.b16 %v720, %v708
  %v1237 = vpack.c.b16 %v721, %v709
  %v1238 = vpack.c.b16 %v722, %v710
  %v1239 = vpack.c.b16 %v723, %v711
  %v1240 = vpack.c.b16 %v724, %v712
  %v1241 = vpack.c.b16 %v725, %v713
  %v1242 = vpack.c.b16 %v726, %v714
  %v1243 = vpack.c.b16 %v727, %v715
  %v1244 = vpack.c.b16 %v728, %v716
  %v1245 = vpack.c.b16 %v741, %v729
  %v1246 = vpack.c.b16 %v742, %v730
  %v1247 = vpack.c.b16 %v743, %v731
  %v1248 = vpack.c.b16 %v744, %v732
  %v1249 = vpack.c.b16 %v745, %v733
  %v1250 = vpack.c.b16 %v746, %v734
  %v1251 = vpack.c.b16 %v747, %v735
  %v1252 = vpack.c.b16 %v748, %v736
  %v1253 = vpack.c.b16 %v749, %v737
  %v1254 = vpack.c.b16 %v750, %v738
  %v1255 = vpack.c.b16 %v751, %v739
  %v1256 = vpack.c.b16 %v752, %v740
  %v1257 = vpack.c.b16 %v765, %v753
  %v1258 = vpack.c.b16 %v766, %v754
  %v1259 = vpack.c.b16 %v767, %v755
  %v1260 = vpack.c.b16 %v768, %v756
  %v1261 = vpack.c.b16 %v769, %v757
  %v1262 = vpack.c.b16 %v770, %v758
  %v1263 = vpack.c.b16 %v771, %v759
  %v1264 = vpack.c.b16 %v772, %v760
  %v1265 = vpack.c.b16 %v773, %v761
  %v1266 = vpack.c.b16 %v774, %v762
  %v1267 = vpack.c.b16 %v775, %v763
  %v1268 = vpack.c.b16 %v776, %v764
  %v1269 = vpack.c.b16 %v789, %v777
  %v1270 = vpack.c.b16 %v790, %v778
  %v1271 = vpack.c.b16 %v791, %v779
  %v1272 = vpack.c.b16 %v792, %v780
  %v1273 = vpack.c.b16 %v793, %v781
  %v1274 = vpack.c.b16 %v794, %v782
  %v1275 = vpack.c.b16 %v795, %v783
  %v1276 = vpack.c.b16 %v796, %v784
  %v1277 = vpack.c.b16 %v797, %v785
  %v1278 = vpack.c.b16 %v798, %v786
  %v1279 = vpack.c.b16 %v799, %v787
  %v1280 = vpack.c.b16 %v800, %v788
  %v1281 = vpack.c.b16 %v813, %v801
  %v1282 = vpack.c.b16 %v814, %v802
  %v1283 = vpack.c.b16 %v815, %v803
  %v1284 = vpack.c.b16 %v816, %v804
  %v1285 = vpack.c.b16 %v817, %v805
  %v1286 = vpack.c.b16 %v818, %v806
  %v1287 = vpack.c.b16 %v819, %v807
  %v1288 = vpack.c.b16 %v820, %v808
  %v1289 = vpack.c.b16 %v821, %v809
  %v1290 = vpack.c.b16 %v822, %v810
  %v1291 = vpack.c.b16 %v823, %v811
  %v1292 = vpack.c.b16 %v824, %v812
  %v1293 = vpack.c.b16 %v837, %v825
  %v1294 = vpack.c.b16 %v838, %v826
  %v1295 = vpack.c.b16 %v839, %v827
  %v1296 = vpack.c.b16 %v840, %v828
  %v1297 = vpack.c.b16 %v841, %v829
  %v1298 = vpack.c.b16 %v842, %v830
  %v1299 = vpack.c.b16 %v843, %v831
  %v1300 = vpack.c.b16 %v844, %v832
  %v1301 = vpack.c.b16 %v845, %v833
  %v1302 = vpack.c.b16 %v846, %v834
  %v1303 = vpack.c.b16 %v847, %v835
  %v1304 = vpack.c.b16 %v848, %v836
  %v1305 = vpack.c.b16 %v861, %v849
  %v1306 = vpack.c.b16 %v862, %v850
  %v1307 = vpack.c.b16 %v863, %v851
  %v1308 = vpack.c.b16 %v864, %v852
  %v1309 = vpack.c.b16 %v865, %v853
  %v1310 = vpack.c.b16 %v866, %v854
  %v1311 = vpack.c.b16 %v867, %v855
  %v1312 = vpack.c.b16 %v868, %v856
  %v1313 = vpack.c.b16 %v869, %v857
  %v1314 = vpack.c.b16 %v870, %v858
  %v1315 = vpack.c.b16 %v871, %v859
  %v1316 = vpack.c.b16 %v872, %v860
  %v1317 = vpack.c.b16 %v885, %v873
  %v1318 = vpack.c.b16 %v886, %v874
  %v1319 = vpack.c.b16 %v887, %v875
  %v1320 = vpack.c.b16 %v888, %v876
  %v1321 = vpack.c.b16 %v889, %v877
  %v1322 = vpack.c.b16 %v890, %v878
  %v1323 = vpack.c.b16 %v891, %v879
  %v1324 = vpack.c.b16 %v892, %v880
  %v1325 = vpack.c.b16 %v893, %v881
  %v1326 = vpack.c.b16 %v894, %v882
  %v1327 = vpack.c.b16 %v895, %v883
  %v1328 = vpack.c.b16 %v896, %v884
  %v1329 = vpack.c.b16 %v909, %v897
  %v1330 = vpack.c.b16 %v910, %v898
  %v1331 = vpack.c.b16 %v911, %v899
  %v1332 = vpack.c.b16 %v912, %v900
  %v1333 = vpack.c.b16 %v913, %v901
  %v1334 = vpack.c.b16 %v914, %v902
  %v1335 = vpack.c.b16 %v915, %v903
  %v1336 = vpack.c.b16 %v916, %v904
  %v1337 = vpack.c.b16 %v917, %v905
  %v1338 = vpack.c.b16 %v918, %v906
  %v1339 = vpack.c.b16 %v919, %v907
  %v1340 = vpack.c.b16 %v920, %v908
  %v1341 = vpack.c.b16 %v933, %v921
  %v1342 = vpack.c.b16 %v934, %v922
  %v1343 = vpack.c.b16 %v935, %v923
  %v1344 = vpack.c.b16 %v936, %v924
  %v1345 = vpack.c.b16 %v937, %v925
  %v1346 = vpack.c.b16 %v938, %v926
  %v1347 = vpack.c.b16 %v939, %v927
  %v1348 = vpack.c.b16 %v940, %v928
  %v1349 = vpack.c.b16 %v941, %v929
  %v1350 = vpack.c.b16 %v942, %v930
  %v1351 = vpack.c.b16 %v943, %v931
  %v1352 = vpack.c.b16 %v944, %v932
  %v1353 = vpack.c.b16 %v957, %v945
  %v1354 = vpack.c.b16 %v958, %v946
  %v1355 = vpack.c.b16 %v959, %v947
  %v1356 = vpack.c.b16 %v960, %v948
  %v1357 = vpack.c.b16 %v961, %v949
  %v1358 = vpack.c.b16 %v962, %v950
  %v1359 = vpack.c.b16 %v963, %v951
  %v1360 = vpack.c.b16 %v964, %v952
  %v1361 = vpack.c.b16 %v965, %v953
  %v1362 = vpack.c.b16 %v966, %v954
  %v1363 = vpack.c.b16 %v967, %v955
  %v1364 = vpack.c.b16 %v968, %v956
  %v1365 = vpack.c.b16 %v981, %v969
  %v1366 = vpack.c.b16 %v982, %v970
  %v1367 = vpack.c.b16 %v983, %v971
  %v1368 = vpack.c.b16 %v984, %v972
  %v1369 = vpack.c.b16 %v985, %v973
  %v1370 = vpack.c.b16 %v986, %v974
  %v1371 = vpack.c.b16 %v987, %v975
  %v1372 = vpack.c.b16 %v988, %v976
  %v1373 = vpack.c.b16 %v989, %v977
  %v1374 = vpack.c.b16 %v990, %v978
  %v1375 = vpack.c.b16 %v991, %v979
  %v1376 = vpack.c.b16 %v992, %v980
  %v1377 = vpack.c.b16 %v1005, %v993
  %v1378 = vpack.c.b16 %v1006, %v994
  %v1379 = vpack.c.b16 %v1007, %v995
  %v1380 = vpack.c.b16 %v1008, %v996
  %v1381 = vpack.c.b16 %v1009, %v997
  %v1382 = vpack.c.b16 %v1010, %v998
  %v1383 = vpack.c.b16 %v1011, %v999
  %v1384 = vpack.c.b16 %v1012, %v1000
  %v1385 = vpack.c.b16 %v1013, %v1001
  %v1386 = vpack.c.b16 %v1014, %v1002
  %v1387 = vpack.c.b16 %v1015, %v1003
  %v1388 = vpack.c.b16 %v1016, %v1004
  %v1389 = vpack.c.b16 %v1029, %v1017
  %v1390 = vpack.c.b16 %v1030, %v1018
  %v1391 = vpack.c.b16 %v1031, %v1019
  %v1392 = vpack.c.b16 %v1032, %v1020
  %v1393 = vpack.c.b16 %v1033, %v1021
  %v1394 = vpack.c.b16 %v1034, %v1022
  %v1395 = vpack.c.b16 %v1035, %v1023
  %v1396 = vpack.c.b16 %v1036, %v1024
  %v1397 = vpack.c.b16 %v1037, %v1025
  %v1398 = vpack.c.b16 %v1038, %v1026
  %v1399 = vpack.c.b16 %v1039, %v1027
  %v1400 = vpack.c.b16 %v1040, %v1028
  %v1401 = vpack.c.b16 %v1053, %v1041
  %v1402 = vpack.c.b16 %v1054, %v1042
  %v1403 = vpack.c.b16 %v1055, %v1043
  %v1404 = vpack.c.b16 %v1056, %v1044
  %v1405 = vpack.c.b16 %v1057, %v1045
  %v1406 = vpack.c.b16 %v1058, %v1046
  %v1407 = vpack.c.b16 %v1059, %v1047
  %v1408 = vpack.c.b16 %v1060, %v1048
  %v1409 = vpack.c.b16 %v1061, %v1049
  %v1410 = vpack.c.b16 %v1062, %v1050
  %v1411 = vpack.c.b16 %v1063, %v1051
  %v1412 = vpack.c.b16 %v1064, %v1052
  %v1413 = vpack.c.b16 %v1077, %v1065
  %v1414 = vpack.c.b16 %v1078, %v1066
  %v1415 = vpack.c.b16 %v1079, %v1067
  %v1416 = vpack.c.b16 %v1080, %v1068
  %v1417 = vpack.c.b16 %v1081, %v1069
  %v1418 = vpack.c.b16 %v1082, %v1070
  %v1419 = vpack.c.b16 %v1083, %v1071
  %v1420 = vpack.c.b16 %v1084, %v1072
  %v1421 = vpack.c.b16 %v1085, %v1073
  %v1422 = vpack.c.b16 %v1086, %v1074
  %v1423 = vpack.c.b16 %v1087, %v1075
  %v1424 = vpack.c.b16 %v1088, %v1076
  %v1425 = vpack.c.b16 %v1101, %v1089
  %v1426 = vpack.c.b16 %v1102, %v1090
  %v1427 = vpack.c.b16 %v1103, %v1091
  %v1428 = vpack.c.b16 %v1104, %v1092
  %v1429 = vpack.c.b16 %v1105, %v1093
  %v1430 = vpack.c.b16 %v1106, %v1094
  %v1431 = vpack.c.b16 %v1107, %v1095
  %v1432 = vpack.c.b16 %v1108, %v1096
  %v1433 = vpack.c.b16 %v1109, %v1097
  %v1434 = vpack.c.b16 %v1110, %v1098
  %v1435 = vpack.c.b16 %v1111, %v1099
  %v1436 = vpack.c.b16 %v1112, %v1100
  %v1437 = vpack.c.b16 %v1125, %v1113
  %v1438 = vpack.c.b16 %v1126, %v1114
  %v1439 = vpack.c.b16 %v1127, %v1115
  %v1440 = vpack.c.b16 %v1128, %v1116
  %v1441 = vpack.c.b16 %v1129, %v1117
  %v1442 = vpack.c.b16 %v1130, %v1118
  %v1443 = vpack.c.b16 %v1131, %v1119
  %v1444 = vpack.c.b16 %v1132, %v1120
  %v1445 = vpack.c.b16 %v1133, %v1121
  %v1446 = vpack.c.b16 %v1134, %v1122
  %v1447 = vpack.c.b16 %v1135, %v1123
  %v1448 = vpack.c.b16 %v1136, %v1124
  %v1449 = vpack.c.b16 %v1149, %v1137
  %v1450 = vpack.c.b16 %v1150, %v1138
  %v1451 = vpack.c.b16 %v1151, %v1139
  %v1452 = vpack.c.b16 %v1152, %v1140
  %v1453 = vpack.c.b16 %v1153, %v1141
  %v1454 = vpack.c.b16 %v1154, %v1142
  %v1455 = vpack.c.b16 %v1155, %v1143
  %v1456 = vpack.c.b16 %v1156, %v1144
  %v1457 = vpack.c.b16 %v1157, %v1145
  %v1458 = vpack.c.b16 %v1158, %v1146
  %v1459 = vpack.c.b16 %v1159, %v1147
  %v1460 = vpack.c.b16 %v1160, %v1148
  %v1461 = vpack.c.b16 %v1173, %v1161
  %v1462 = vpack.c.b16 %v1174, %v1162
  %v1463 = vpack.c.b16 %v1175, %v1163
  %v1464 = vpack.c.b16 %v1176, %v1164
  %v1465 = vpack.c.b16 %v1177, %v1165
  %v1466 = vpack.c.b16 %v1178, %v1166
  %v1467 = vpack.c.b16 %v1179, %v1167
  %v1468 = vpack.c.b16 %v1180, %v1168
  %v1469 = vpack.c.b16 %v1181, %v1169
  %v1470 = vpack.c.b16 %v1182, %v1170
  %v1471 = vpack.c.b16 %v1183, %v1171
  %v1472 = vpack.c.b16 %v1184, %v1172
  %1761 = vmatpush.bf16.msra.mxu0 %v1269
  %1762 = vmatpush.bf16.msra.mxu0 %v1257
  %1763 = vmatpush.bf16.msra.mxu0 %v1245
  %1764 = vmatpush.bf16.msra.mxu0 %v1233
  %1765 = vmatpush.bf16.msra.mxu0 %v1221
  %1766 = vmatpush.bf16.msra.mxu0 %v1209
  %1767 = vmatpush.bf16.msra.mxu0 %v1197
  %1768 = vmatpush.bf16.msra.mxu0 %v1185
  %1769 = vmatmul.bf16.gmra.mxu0 %v30
  %v1770 = vpop.f32.mrf.mxu0
  %v1771 = vadd.f32 0.0, %v1770
  %v1772 = vpop.f32.mrf.mxu0
  %1773 = vdwg.mxu0
  %1774 = vmatpush.bf16.msra.mxu0 %v1365
  %1775 = vmatpush.bf16.msra.mxu0 %v1353
  %1776 = vmatpush.bf16.msra.mxu0 %v1341
  %1777 = vmatpush.bf16.msra.mxu0 %v1329
  %1778 = vmatpush.bf16.msra.mxu0 %v1317
  %1779 = vmatpush.bf16.msra.mxu0 %v1305
  %1780 = vmatpush.bf16.msra.mxu0 %v1293
  %1781 = vmatpush.bf16.msra.mxu0 %v1281
  %1782 = vmatmul.bf16.gmra.mxu0 %v31
  %v1783 = vpop.f32.mrf.mxu0
  %v1784 = vadd.f32 %v1771, %v1783
  %v1785 = vpop.f32.mrf.mxu0
  %1786 = vdwg.mxu0
  %1787 = vmatpush.bf16.msra.mxu0 %v1461
  %1788 = vmatpush.bf16.msra.mxu0 %v1449
  %1789 = vmatpush.bf16.msra.mxu0 %v1437
  %1790 = vmatpush.bf16.msra.mxu0 %v1425
  %1791 = vmatpush.bf16.msra.mxu0 %v1413
  %1792 = vmatpush.bf16.msra.mxu0 %v1401
  %1793 = vmatpush.bf16.msra.mxu0 %v1389
  %1794 = vmatpush.bf16.msra.mxu0 %v1377
  %1795 = vmatmul.bf16.gmra.mxu0 %v32
  %v1796 = vpop.f32.mrf.mxu0
  %v1797 = vadd.f32 %v1784, %v1796
  %v1798 = vpop.f32.mrf.mxu0
  %1799 = vdwg.mxu0
  %1800 = vmatpush.bf16.msra.mxu0 %v1270
  %1801 = vmatpush.bf16.msra.mxu0 %v1258
  %1802 = vmatpush.bf16.msra.mxu0 %v1246
  %1803 = vmatpush.bf16.msra.mxu0 %v1234
  %1804 = vmatpush.bf16.msra.mxu0 %v1222
  %1805 = vmatpush.bf16.msra.mxu0 %v1210
  %1806 = vmatpush.bf16.msra.mxu0 %v1198
  %1807 = vmatpush.bf16.msra.mxu0 %v1186
  %1808 = vmatmul.bf16.gmra.mxu0 %v30
  %v1809 = vpop.f32.mrf.mxu0
  %v1810 = vadd.f32 0.0, %v1809
  %v1811 = vpop.f32.mrf.mxu0
  %1812 = vdwg.mxu0
  %1813 = vmatpush.bf16.msra.mxu0 %v1366
  %1814 = vmatpush.bf16.msra.mxu0 %v1354
  %1815 = vmatpush.bf16.msra.mxu0 %v1342
  %1816 = vmatpush.bf16.msra.mxu0 %v1330
  %1817 = vmatpush.bf16.msra.mxu0 %v1318
  %1818 = vmatpush.bf16.msra.mxu0 %v1306
  %1819 = vmatpush.bf16.msra.mxu0 %v1294
  %1820 = vmatpush.bf16.msra.mxu0 %v1282
  %1821 = vmatmul.bf16.gmra.mxu0 %v31
  %v1822 = vpop.f32.mrf.mxu0
  %v1823 = vadd.f32 %v1810, %v1822
  %v1824 = vpop.f32.mrf.mxu0
  %1825 = vdwg.mxu0
  %1826 = vmatpush.bf16.msra.mxu0 %v1462
  %1827 = vmatpush.bf16.msra.mxu0 %v1450
  %1828 = vmatpush.bf16.msra.mxu0 %v1438
  %1829 = vmatpush.bf16.msra.mxu0 %v1426
  %1830 = vmatpush.bf16.msra.mxu0 %v1414
  %1831 = vmatpush.bf16.msra.mxu0 %v1402
  %1832 = vmatpush.bf16.msra.mxu0 %v1390
  %1833 = vmatpush.bf16.msra.mxu0 %v1378
  %1834 = vmatmul.bf16.gmra.mxu0 %v32
  %v1835 = vpop.f32.mrf.mxu0
  %v1836 = vadd.f32 %v1823, %v1835
  %v1837 = vpop.f32.mrf.mxu0
  %1838 = vdwg.mxu0
  %1839 = vmatpush.bf16.msra.mxu0 %v1271
  %1840 = vmatpush.bf16.msra.mxu0 %v1259
  %1841 = vmatpush.bf16.msra.mxu0 %v1247
  %1842 = vmatpush.bf16.msra.mxu0 %v1235
  %1843 = vmatpush.bf16.msra.mxu0 %v1223
  %1844 = vmatpush.bf16.msra.mxu0 %v1211
  %1845 = vmatpush.bf16.msra.mxu0 %v1199
  %1846 = vmatpush.bf16.msra.mxu0 %v1187
  %1847 = vmatmul.bf16.gmra.mxu0 %v30
  %v1848 = vpop.f32.mrf.mxu0
  %v1849 = vadd.f32 0.0, %v1848
  %v1850 = vpop.f32.mrf.mxu0
  %1851 = vdwg.mxu0
  %1852 = vmatpush.bf16.msra.mxu0 %v1367
  %1853 = vmatpush.bf16.msra.mxu0 %v1355
  %1854 = vmatpush.bf16.msra.mxu0 %v1343
  %1855 = vmatpush.bf16.msra.mxu0 %v1331
  %1856 = vmatpush.bf16.msra.mxu0 %v1319
  %1857 = vmatpush.bf16.msra.mxu0 %v1307
  %1858 = vmatpush.bf16.msra.mxu0 %v1295
  %1859 = vmatpush.bf16.msra.mxu0 %v1283
  %1860 = vmatmul.bf16.gmra.mxu0 %v31
  %v1861 = vpop.f32.mrf.mxu0
  %v1862 = vadd.f32 %v1849, %v1861
  %v1863 = vpop.f32.mrf.mxu0
  %1864 = vdwg.mxu0
  %1865 = vmatpush.bf16.msra.mxu0 %v1463
  %1866 = vmatpush.bf16.msra.mxu0 %v1451
  %1867 = vmatpush.bf16.msra.mxu0 %v1439
  %1868 = vmatpush.bf16.msra.mxu0 %v1427
  %1869 = vmatpush.bf16.msra.mxu0 %v1415
  %1870 = vmatpush.bf16.msra.mxu0 %v1403
  %1871 = vmatpush.bf16.msra.mxu0 %v1391
  %1872 = vmatpush.bf16.msra.mxu0 %v1379
  %1873 = vmatmul.bf16.gmra.mxu0 %v32
  %v1874 = vpop.f32.mrf.mxu0
  %v1875 = vadd.f32 %v1862, %v1874
  %v1876 = vpop.f32.mrf.mxu0
  %1877 = vdwg.mxu0
  %1878 = vmatpush.bf16.msra.mxu0 %v1272
  %1879 = vmatpush.bf16.msra.mxu0 %v1260
  %1880 = vmatpush.bf16.msra.mxu0 %v1248
  %1881 = vmatpush.bf16.msra.mxu0 %v1236
  %1882 = vmatpush.bf16.msra.mxu0 %v1224
  %1883 = vmatpush.bf16.msra.mxu0 %v1212
  %1884 = vmatpush.bf16.msra.mxu0 %v1200
  %1885 = vmatpush.bf16.msra.mxu0 %v1188
  %1886 = vmatmul.bf16.gmra.mxu0 %v30
  %v1887 = vpop.f32.mrf.mxu0
  %v1888 = vadd.f32 0.0, %v1887
  %v1889 = vpop.f32.mrf.mxu0
  %1890 = vdwg.mxu0
  %1891 = vmatpush.bf16.msra.mxu0 %v1368
  %1892 = vmatpush.bf16.msra.mxu0 %v1356
  %1893 = vmatpush.bf16.msra.mxu0 %v1344
  %1894 = vmatpush.bf16.msra.mxu0 %v1332
  %1895 = vmatpush.bf16.msra.mxu0 %v1320
  %1896 = vmatpush.bf16.msra.mxu0 %v1308
  %1897 = vmatpush.bf16.msra.mxu0 %v1296
  %1898 = vmatpush.bf16.msra.mxu0 %v1284
  %1899 = vmatmul.bf16.gmra.mxu0 %v31
  %v1900 = vpop.f32.mrf.mxu0
  %v1901 = vadd.f32 %v1888, %v1900
  %v1902 = vpop.f32.mrf.mxu0
  %1903 = vdwg.mxu0
  %1904 = vmatpush.bf16.msra.mxu0 %v1464
  %1905 = vmatpush.bf16.msra.mxu0 %v1452
  %1906 = vmatpush.bf16.msra.mxu0 %v1440
  %1907 = vmatpush.bf16.msra.mxu0 %v1428
  %1908 = vmatpush.bf16.msra.mxu0 %v1416
  %1909 = vmatpush.bf16.msra.mxu0 %v1404
  %1910 = vmatpush.bf16.msra.mxu0 %v1392
  %1911 = vmatpush.bf16.msra.mxu0 %v1380
  %1912 = vmatmul.bf16.gmra.mxu0 %v32
  %v1913 = vpop.f32.mrf.mxu0
  %v1914 = vadd.f32 %v1901, %v1913
  %v1915 = vpop.f32.mrf.mxu0
  %1916 = vdwg.mxu0
  %1917 = vmatpush.bf16.msra.mxu0 %v1273
  %1918 = vmatpush.bf16.msra.mxu0 %v1261
  %1919 = vmatpush.bf16.msra.mxu0 %v1249
  %1920 = vmatpush.bf16.msra.mxu0 %v1237
  %1921 = vmatpush.bf16.msra.mxu0 %v1225
  %1922 = vmatpush.bf16.msra.mxu0 %v1213
  %1923 = vmatpush.bf16.msra.mxu0 %v1201
  %1924 = vmatpush.bf16.msra.mxu0 %v1189
  %1925 = vmatmul.bf16.gmra.mxu0 %v30
  %v1926 = vpop.f32.mrf.mxu0
  %v1927 = vadd.f32 0.0, %v1926
  %v1928 = vpop.f32.mrf.mxu0
  %1929 = vdwg.mxu0
  %1930 = vmatpush.bf16.msra.mxu0 %v1369
  %1931 = vmatpush.bf16.msra.mxu0 %v1357
  %1932 = vmatpush.bf16.msra.mxu0 %v1345
  %1933 = vmatpush.bf16.msra.mxu0 %v1333
  %1934 = vmatpush.bf16.msra.mxu0 %v1321
  %1935 = vmatpush.bf16.msra.mxu0 %v1309
  %1936 = vmatpush.bf16.msra.mxu0 %v1297
  %1937 = vmatpush.bf16.msra.mxu0 %v1285
  %1938 = vmatmul.bf16.gmra.mxu0 %v31
  %v1939 = vpop.f32.mrf.mxu0
  %v1940 = vadd.f32 %v1927, %v1939
  %v1941 = vpop.f32.mrf.mxu0
  %1942 = vdwg.mxu0
  %1943 = vmatpush.bf16.msra.mxu0 %v1465
  %1944 = vmatpush.bf16.msra.mxu0 %v1453
  %1945 = vmatpush.bf16.msra.mxu0 %v1441
  %1946 = vmatpush.bf16.msra.mxu0 %v1429
  %1947 = vmatpush.bf16.msra.mxu0 %v1417
  %1948 = vmatpush.bf16.msra.mxu0 %v1405
  %1949 = vmatpush.bf16.msra.mxu0 %v1393
  %1950 = vmatpush.bf16.msra.mxu0 %v1381
  %1951 = vmatmul.bf16.gmra.mxu0 %v32
  %v1952 = vpop.f32.mrf.mxu0
  %v1953 = vadd.f32 %v1940, %v1952
  %v1954 = vpop.f32.mrf.mxu0
  %1955 = vdwg.mxu0
  %1956 = vmatpush.bf16.msra.mxu0 %v1274
  %1957 = vmatpush.bf16.msra.mxu0 %v1262
  %1958 = vmatpush.bf16.msra.mxu0 %v1250
  %1959 = vmatpush.bf16.msra.mxu0 %v1238
  %1960 = vmatpush.bf16.msra.mxu0 %v1226
  %1961 = vmatpush.bf16.msra.mxu0 %v1214
  %1962 = vmatpush.bf16.msra.mxu0 %v1202
  %1963 = vmatpush.bf16.msra.mxu0 %v1190
  %1964 = vmatmul.bf16.gmra.mxu0 %v30
  %v1965 = vpop.f32.mrf.mxu0
  %v1966 = vadd.f32 0.0, %v1965
  %v1967 = vpop.f32.mrf.mxu0
  %1968 = vdwg.mxu0
  %1969 = vmatpush.bf16.msra.mxu0 %v1370
  %1970 = vmatpush.bf16.msra.mxu0 %v1358
  %1971 = vmatpush.bf16.msra.mxu0 %v1346
  %1972 = vmatpush.bf16.msra.mxu0 %v1334
  %1973 = vmatpush.bf16.msra.mxu0 %v1322
  %1974 = vmatpush.bf16.msra.mxu0 %v1310
  %1975 = vmatpush.bf16.msra.mxu0 %v1298
  %1976 = vmatpush.bf16.msra.mxu0 %v1286
  %1977 = vmatmul.bf16.gmra.mxu0 %v31
  %v1978 = vpop.f32.mrf.mxu0
  %v1979 = vadd.f32 %v1966, %v1978
  %v1980 = vpop.f32.mrf.mxu0
  %1981 = vdwg.mxu0
  %1982 = vmatpush.bf16.msra.mxu0 %v1466
  %1983 = vmatpush.bf16.msra.mxu0 %v1454
  %1984 = vmatpush.bf16.msra.mxu0 %v1442
  %1985 = vmatpush.bf16.msra.mxu0 %v1430
  %1986 = vmatpush.bf16.msra.mxu0 %v1418
  %1987 = vmatpush.bf16.msra.mxu0 %v1406
  %1988 = vmatpush.bf16.msra.mxu0 %v1394
  %1989 = vmatpush.bf16.msra.mxu0 %v1382
  %1990 = vmatmul.bf16.gmra.mxu0 %v32
  %v1991 = vpop.f32.mrf.mxu0
  %v1992 = vadd.f32 %v1979, %v1991
  %v1993 = vpop.f32.mrf.mxu0
  %1994 = vdwg.mxu0
  %1995 = vmatpush.bf16.msra.mxu0 %v1275
  %1996 = vmatpush.bf16.msra.mxu0 %v1263
  %1997 = vmatpush.bf16.msra.mxu0 %v1251
  %1998 = vmatpush.bf16.msra.mxu0 %v1239
  %1999 = vmatpush.bf16.msra.mxu0 %v1227
  %2000 = vmatpush.bf16.msra.mxu0 %v1215
  %2001 = vmatpush.bf16.msra.mxu0 %v1203
  %2002 = vmatpush.bf16.msra.mxu0 %v1191
  %2003 = vmatmul.bf16.gmra.mxu0 %v30
  %v2004 = vpop.f32.mrf.mxu0
  %v2005 = vadd.f32 0.0, %v2004
  %v2006 = vpop.f32.mrf.mxu0
  %2007 = vdwg.mxu0
  %2008 = vmatpush.bf16.msra.mxu0 %v1371
  %2009 = vmatpush.bf16.msra.mxu0 %v1359
  %2010 = vmatpush.bf16.msra.mxu0 %v1347
  %2011 = vmatpush.bf16.msra.mxu0 %v1335
  %2012 = vmatpush.bf16.msra.mxu0 %v1323
  %2013 = vmatpush.bf16.msra.mxu0 %v1311
  %2014 = vmatpush.bf16.msra.mxu0 %v1299
  %2015 = vmatpush.bf16.msra.mxu0 %v1287
  %2016 = vmatmul.bf16.gmra.mxu0 %v31
  %v2017 = vpop.f32.mrf.mxu0
  %v2018 = vadd.f32 %v2005, %v2017
  %v2019 = vpop.f32.mrf.mxu0
  %2020 = vdwg.mxu0
  %2021 = vmatpush.bf16.msra.mxu0 %v1467
  %2022 = vmatpush.bf16.msra.mxu0 %v1455
  %2023 = vmatpush.bf16.msra.mxu0 %v1443
  %2024 = vmatpush.bf16.msra.mxu0 %v1431
  %2025 = vmatpush.bf16.msra.mxu0 %v1419
  %2026 = vmatpush.bf16.msra.mxu0 %v1407
  %2027 = vmatpush.bf16.msra.mxu0 %v1395
  %2028 = vmatpush.bf16.msra.mxu0 %v1383
  %2029 = vmatmul.bf16.gmra.mxu0 %v32
  %v2030 = vpop.f32.mrf.mxu0
  %v2031 = vadd.f32 %v2018, %v2030
  %v2032 = vpop.f32.mrf.mxu0
  %2033 = vdwg.mxu0
  %2034 = vmatpush.bf16.msra.mxu0 %v1276
  %2035 = vmatpush.bf16.msra.mxu0 %v1264
  %2036 = vmatpush.bf16.msra.mxu0 %v1252
  %2037 = vmatpush.bf16.msra.mxu0 %v1240
  %2038 = vmatpush.bf16.msra.mxu0 %v1228
  %2039 = vmatpush.bf16.msra.mxu0 %v1216
  %2040 = vmatpush.bf16.msra.mxu0 %v1204
  %2041 = vmatpush.bf16.msra.mxu0 %v1192
  %2042 = vmatmul.bf16.gmra.mxu0 %v30
  %v2043 = vpop.f32.mrf.mxu0
  %v2044 = vadd.f32 0.0, %v2043
  %v2045 = vpop.f32.mrf.mxu0
  %2046 = vdwg.mxu0
  %2047 = vmatpush.bf16.msra.mxu0 %v1372
  %2048 = vmatpush.bf16.msra.mxu0 %v1360
  %2049 = vmatpush.bf16.msra.mxu0 %v1348
  %2050 = vmatpush.bf16.msra.mxu0 %v1336
  %2051 = vmatpush.bf16.msra.mxu0 %v1324
  %2052 = vmatpush.bf16.msra.mxu0 %v1312
  %2053 = vmatpush.bf16.msra.mxu0 %v1300
  %2054 = vmatpush.bf16.msra.mxu0 %v1288
  %2055 = vmatmul.bf16.gmra.mxu0 %v31
  %v2056 = vpop.f32.mrf.mxu0
  %v2057 = vadd.f32 %v2044, %v2056
  %v2058 = vpop.f32.mrf.mxu0
  %2059 = vdwg.mxu0
  %2060 = vmatpush.bf16.msra.mxu0 %v1468
  %2061 = vmatpush.bf16.msra.mxu0 %v1456
  %2062 = vmatpush.bf16.msra.mxu0 %v1444
  %2063 = vmatpush.bf16.msra.mxu0 %v1432
  %2064 = vmatpush.bf16.msra.mxu0 %v1420
  %2065 = vmatpush.bf16.msra.mxu0 %v1408
  %2066 = vmatpush.bf16.msra.mxu0 %v1396
  %2067 = vmatpush.bf16.msra.mxu0 %v1384
  %2068 = vmatmul.bf16.gmra.mxu0 %v32
  %v2069 = vpop.f32.mrf.mxu0
  %v2070 = vadd.f32 %v2057, %v2069
  %v2071 = vpop.f32.mrf.mxu0
  %2072 = vdwg.mxu0
  %2073 = vmatpush.bf16.msra.mxu0 %v1277
  %2074 = vmatpush.bf16.msra.mxu0 %v1265
  %2075 = vmatpush.bf16.msra.mxu0 %v1253
  %2076 = vmatpush.bf16.msra.mxu0 %v1241
  %2077 = vmatpush.bf16.msra.mxu0 %v1229
  %2078 = vmatpush.bf16.msra.mxu0 %v1217
  %2079 = vmatpush.bf16.msra.mxu0 %v1205
  %2080 = vmatpush.bf16.msra.mxu0 %v1193
  %2081 = vmatmul.bf16.gmra.mxu0 %v30
  %v2082 = vpop.f32.mrf.mxu0
  %v2083 = vadd.f32 0.0, %v2082
  %v2084 = vpop.f32.mrf.mxu0
  %2085 = vdwg.mxu0
  %2086 = vmatpush.bf16.msra.mxu0 %v1373
  %2087 = vmatpush.bf16.msra.mxu0 %v1361
  %2088 = vmatpush.bf16.msra.mxu0 %v1349
  %2089 = vmatpush.bf16.msra.mxu0 %v1337
  %2090 = vmatpush.bf16.msra.mxu0 %v1325
  %2091 = vmatpush.bf16.msra.mxu0 %v1313
  %2092 = vmatpush.bf16.msra.mxu0 %v1301
  %2093 = vmatpush.bf16.msra.mxu0 %v1289
  %2094 = vmatmul.bf16.gmra.mxu0 %v31
  %v2095 = vpop.f32.mrf.mxu0
  %v2096 = vadd.f32 %v2083, %v2095
  %v2097 = vpop.f32.mrf.mxu0
  %2098 = vdwg.mxu0
  %2099 = vmatpush.bf16.msra.mxu0 %v1469
  %2100 = vmatpush.bf16.msra.mxu0 %v1457
  %2101 = vmatpush.bf16.msra.mxu0 %v1445
  %2102 = vmatpush.bf16.msra.mxu0 %v1433
  %2103 = vmatpush.bf16.msra.mxu0 %v1421
  %2104 = vmatpush.bf16.msra.mxu0 %v1409
  %2105 = vmatpush.bf16.msra.mxu0 %v1397
  %2106 = vmatpush.bf16.msra.mxu0 %v1385
  %2107 = vmatmul.bf16.gmra.mxu0 %v32
  %v2108 = vpop.f32.mrf.mxu0
  %v2109 = vadd.f32 %v2096, %v2108
  %v2110 = vpop.f32.mrf.mxu0
  %2111 = vdwg.mxu0
  %2112 = vmatpush.bf16.msra.mxu0 %v1278
  %2113 = vmatpush.bf16.msra.mxu0 %v1266
  %2114 = vmatpush.bf16.msra.mxu0 %v1254
  %2115 = vmatpush.bf16.msra.mxu0 %v1242
  %2116 = vmatpush.bf16.msra.mxu0 %v1230
  %2117 = vmatpush.bf16.msra.mxu0 %v1218
  %2118 = vmatpush.bf16.msra.mxu0 %v1206
  %2119 = vmatpush.bf16.msra.mxu0 %v1194
  %2120 = vmatmul.bf16.gmra.mxu0 %v30
  %v2121 = vpop.f32.mrf.mxu0
  %v2122 = vadd.f32 0.0, %v2121
  %v2123 = vpop.f32.mrf.mxu0
  %2124 = vdwg.mxu0
  %2125 = vmatpush.bf16.msra.mxu0 %v1374
  %2126 = vmatpush.bf16.msra.mxu0 %v1362
  %2127 = vmatpush.bf16.msra.mxu0 %v1350
  %2128 = vmatpush.bf16.msra.mxu0 %v1338
  %2129 = vmatpush.bf16.msra.mxu0 %v1326
  %2130 = vmatpush.bf16.msra.mxu0 %v1314
  %2131 = vmatpush.bf16.msra.mxu0 %v1302
  %2132 = vmatpush.bf16.msra.mxu0 %v1290
  %2133 = vmatmul.bf16.gmra.mxu0 %v31
  %v2134 = vpop.f32.mrf.mxu0
  %v2135 = vadd.f32 %v2122, %v2134
  %v2136 = vpop.f32.mrf.mxu0
  %2137 = vdwg.mxu0
  %2138 = vmatpush.bf16.msra.mxu0 %v1470
  %2139 = vmatpush.bf16.msra.mxu0 %v1458
  %2140 = vmatpush.bf16.msra.mxu0 %v1446
  %2141 = vmatpush.bf16.msra.mxu0 %v1434
  %2142 = vmatpush.bf16.msra.mxu0 %v1422
  %2143 = vmatpush.bf16.msra.mxu0 %v1410
  %2144 = vmatpush.bf16.msra.mxu0 %v1398
  %2145 = vmatpush.bf16.msra.mxu0 %v1386
  %2146 = vmatmul.bf16.gmra.mxu0 %v32
  %v2147 = vpop.f32.mrf.mxu0
  %v2148 = vadd.f32 %v2135, %v2147
  %v2149 = vpop.f32.mrf.mxu0
  %2150 = vdwg.mxu0
  %2151 = vmatpush.bf16.msra.mxu0 %v1279
  %2152 = vmatpush.bf16.msra.mxu0 %v1267
  %2153 = vmatpush.bf16.msra.mxu0 %v1255
  %2154 = vmatpush.bf16.msra.mxu0 %v1243
  %2155 = vmatpush.bf16.msra.mxu0 %v1231
  %2156 = vmatpush.bf16.msra.mxu0 %v1219
  %2157 = vmatpush.bf16.msra.mxu0 %v1207
  %2158 = vmatpush.bf16.msra.mxu0 %v1195
  %2159 = vmatmul.bf16.gmra.mxu0 %v30
  %v2160 = vpop.f32.mrf.mxu0
  %v2161 = vadd.f32 0.0, %v2160
  %v2162 = vpop.f32.mrf.mxu0
  %2163 = vdwg.mxu0
  %2164 = vmatpush.bf16.msra.mxu0 %v1375
  %2165 = vmatpush.bf16.msra.mxu0 %v1363
  %2166 = vmatpush.bf16.msra.mxu0 %v1351
  %2167 = vmatpush.bf16.msra.mxu0 %v1339
  %2168 = vmatpush.bf16.msra.mxu0 %v1327
  %2169 = vmatpush.bf16.msra.mxu0 %v1315
  %2170 = vmatpush.bf16.msra.mxu0 %v1303
  %2171 = vmatpush.bf16.msra.mxu0 %v1291
  %2172 = vmatmul.bf16.gmra.mxu0 %v31
  %v2173 = vpop.f32.mrf.mxu0
  %v2174 = vadd.f32 %v2161, %v2173
  %v2175 = vpop.f32.mrf.mxu0
  %2176 = vdwg.mxu0
  %2177 = vmatpush.bf16.msra.mxu0 %v1471
  %2178 = vmatpush.bf16.msra.mxu0 %v1459
  %2179 = vmatpush.bf16.msra.mxu0 %v1447
  %2180 = vmatpush.bf16.msra.mxu0 %v1435
  %2181 = vmatpush.bf16.msra.mxu0 %v1423
  %2182 = vmatpush.bf16.msra.mxu0 %v1411
  %2183 = vmatpush.bf16.msra.mxu0 %v1399
  %2184 = vmatpush.bf16.msra.mxu0 %v1387
  %2185 = vmatmul.bf16.gmra.mxu0 %v32
  %v2186 = vpop.f32.mrf.mxu0
  %v2187 = vadd.f32 %v2174, %v2186
  %v2188 = vpop.f32.mrf.mxu0
  %2189 = vdwg.mxu0
  %2190 = vmatpush.bf16.msra.mxu0 %v1280
  %2191 = vmatpush.bf16.msra.mxu0 %v1268
  %2192 = vmatpush.bf16.msra.mxu0 %v1256
  %2193 = vmatpush.bf16.msra.mxu0 %v1244
  %2194 = vmatpush.bf16.msra.mxu0 %v1232
  %2195 = vmatpush.bf16.msra.mxu0 %v1220
  %2196 = vmatpush.bf16.msra.mxu0 %v1208
  %2197 = vmatpush.bf16.msra.mxu0 %v1196
  %2198 = vmatmul.bf16.gmra.mxu0 %v30
  %v2199 = vpop.f32.mrf.mxu0
  %v2200 = vadd.f32 0.0, %v2199
  %v2201 = vpop.f32.mrf.mxu0
  %2202 = vdwg.mxu0
  %2203 = vmatpush.bf16.msra.mxu0 %v1376
  %2204 = vmatpush.bf16.msra.mxu0 %v1364
  %2205 = vmatpush.bf16.msra.mxu0 %v1352
  %2206 = vmatpush.bf16.msra.mxu0 %v1340
  %2207 = vmatpush.bf16.msra.mxu0 %v1328
  %2208 = vmatpush.bf16.msra.mxu0 %v1316
  %2209 = vmatpush.bf16.msra.mxu0 %v1304
  %2210 = vmatpush.bf16.msra.mxu0 %v1292
  %2211 = vmatmul.bf16.gmra.mxu0 %v31
  %v2212 = vpop.f32.mrf.mxu0
  %v2213 = vadd.f32 %v2200, %v2212
  %v2214 = vpop.f32.mrf.mxu0
  %2215 = vdwg.mxu0
  %2216 = vmatpush.bf16.msra.mxu0 %v1472
  %2217 = vmatpush.bf16.msra.mxu0 %v1460
  %2218 = vmatpush.bf16.msra.mxu0 %v1448
  %2219 = vmatpush.bf16.msra.mxu0 %v1436
  %2220 = vmatpush.bf16.msra.mxu0 %v1424
  %2221 = vmatpush.bf16.msra.mxu0 %v1412
  %2222 = vmatpush.bf16.msra.mxu0 %v1400
  %2223 = vmatpush.bf16.msra.mxu0 %v1388
  %2224 = vmatmul.bf16.gmra.mxu0 %v32
  %v2225 = vpop.f32.mrf.mxu0
  %v2226 = vadd.f32 %v2213, %v2225
  %v2227 = vpop.f32.mrf.mxu0
  %2228 = vdwg.mxu0
  %v2241 = vrot.slane %v1836, 6
  %v2242 = vrot.slane %v1875, 4
  %v2243 = vrot.slane %v1914, 2
  %v2244 = vrot.slane %v1992, 6
  %v2245 = vrot.slane %v2031, 4
  %v2246 = vrot.slane %v2070, 2
  %v2247 = vrot.slane %v2148, 6
  %v2248 = vrot.slane %v2187, 4
  %v2249 = vrot.slane %v2226, 2
  %vm2250 = vcmask 1041408
  %v2251 = vsel %vm2250, %v1797, %v2241
  %vm2252 = vcmask 1045508
  %v2253 = vsel %vm2252, %v2242, %v2243
  %vm2254 = vcmask 1043456
  %v2255 = vsel %vm2254, %v2251, %v2253
  %v2256 = vsel %vm2250, %v1953, %v2244
  %v2257 = vsel %vm2252, %v2245, %v2246
  %v2258 = vsel %vm2254, %v2256, %v2257
  %v2259 = vsel %vm2250, %v2109, %v2247
  %v2260 = vsel %vm2252, %v2248, %v2249
  %v2261 = vsel %vm2254, %v2259, %v2260
  %v2265 = vadd.f32 %v19, %v2255
  %v2266 = vadd.f32 %v20, %v2258
  %v2267 = vadd.f32 %v21, %v2261
  %v2268 = vxor.u32 %v2265, 2147483648
  %v2269 = vmul.f32 %v2268, 1.442695
  %v2270 = vpow.pop %v2269
  %v2271 = vadd.f32 %v2270, 1.0
  %v2272 = vrcp.pop %v2271
  %v2273 = vmul.f32 %v2271, %v2272
  %v2274 = vsub.f32 1.0, %v2273
  %v2275 = vmul.f32 %v2272, %v2274
  %v2276 = vadd.f32 %v2272, %v2275
  %vm2277 = vweird.f32 %v2271
  %vm2278 = vweird.f32 %v2272
  %vm2279 = vmor %vm2277, %vm2278
  %v2280 = vsel %vm2279, %v2272, %v2276
  %v2281 = vand.u32 2147483647, %v2271
  %vm2282 = vcmp.eq.f32.partialorder %v2281, 8.507059e+37
  %v2283 = vand.u32 %v2271, 2147483648
  %v2284 = vor.u32 1.1754944e-38, %v2283
  %v2285 = vsel %vm2282, %v2284, %v2280
  %v2286 = vmul.f32 1.0, %v2285
  %v2289 = vrot.slane %v2265, 6
  %v2290 = vrot.slane %v2266, 6
  %v2291 = vsel %vm2250, %v2289, %v2290
  %v2293 = vxor.u32 %v2291, 2147483648
  %v2294 = vmul.f32 %v2293, 1.442695
  %v2295 = vpow.pop %v2294
  %v2296 = vadd.f32 %v2295, 1.0
  %v2297 = vrcp.pop %v2296
  %v2298 = vmul.f32 %v2296, %v2297
  %v2299 = vsub.f32 1.0, %v2298
  %v2300 = vmul.f32 %v2297, %v2299
  %v2301 = vadd.f32 %v2297, %v2300
  %vm2302 = vweird.f32 %v2296
  %vm2303 = vweird.f32 %v2297
  %vm2304 = vmor %vm2302, %vm2303
  %v2305 = vsel %vm2304, %v2297, %v2301
  %v2306 = vand.u32 2147483647, %v2296
  %vm2307 = vcmp.eq.f32.partialorder %v2306, 8.507059e+37
  %v2308 = vand.u32 %v2296, 2147483648
  %v2309 = vor.u32 1.1754944e-38, %v2308
  %v2310 = vsel %vm2307, %v2309, %v2305
  %v2311 = vmul.f32 1.0, %v2310
  %v2313 = vrot.slane %v2266, 4
  %v2314 = vrot.slane %v2267, 4
  %v2315 = vsel %vm2254, %v2313, %v2314
  %v2317 = vtanh.pop %v2315
  %v2318 = vrot.slane %v2267, 2
  %v2320 = vxor.u32 %v2318, 2147483648
  %v2321 = vmul.f32 %v2320, 1.442695
  %v2322 = vpow.pop %v2321
  %v2323 = vadd.f32 %v2322, 1.0
  %v2324 = vrcp.pop %v2323
  %v2325 = vmul.f32 %v2323, %v2324
  %v2326 = vsub.f32 1.0, %v2325
  %v2327 = vmul.f32 %v2324, %v2326
  %v2328 = vadd.f32 %v2324, %v2327
  %vm2329 = vweird.f32 %v2323
  %vm2330 = vweird.f32 %v2324
  %vm2331 = vmor %vm2329, %vm2330
  %v2332 = vsel %vm2331, %v2324, %v2328
  %v2333 = vand.u32 2147483647, %v2323
  %vm2334 = vcmp.eq.f32.partialorder %v2333, 8.507059e+37
  %v2335 = vand.u32 %v2323, 2147483648
  %v2336 = vor.u32 1.1754944e-38, %v2335
  %v2337 = vsel %vm2334, %v2336, %v2332
  %v2338 = vmul.f32 1.0, %v2337
  %v2339 = vmul.f32 %v2311, %v18
  %v2340 = vmul.f32 %v2286, %v2317
  %v2341 = vadd.f32 %v2339, %v2340
  %v2342 = vtanh.pop %v2341
  %v2343 = vmul.f32 %v2338, %v2342
  %s2344 = scalar_lea.vmem %s0, 24
  %v2345 = vld [vmem:[%s2344] sm:$0xff]
  %v2346 = vld [vmem:[%s2344 + $0x8] sm:$0xff]
  %v2347 = vld [vmem:[%s2344 + $0x10] sm:$0xff]
  %2349 = vst [vmem:[#allocation1] ss:$4 sm:$0xff] %v2343
  %v2350 = vld.sshfl [vmem:[#allocation1] sm:$0xff pattern:$0x73625140]
  %v2351 = vld.sshfl [vmem:[#allocation1 + $0x8] sm:$0xff pattern:$0x73625140]
  %v2352 = vld.sshfl [vmem:[#allocation1 + $0x10] sm:$0xff pattern:$0x73625140]
  %v2356 = vpack.c.bf16 %v2350, %v2350
  %v2357 = vpack.c.bf16 %v2351, %v2351
  %v2358 = vpack.c.bf16 %v2352, %v2352
  %2359 = vmatpush.bf16.msra.mxu0 %v1269
  %2360 = vmatpush.bf16.msra.mxu0 %v1257
  %2361 = vmatpush.bf16.msra.mxu0 %v1245
  %2362 = vmatpush.bf16.msra.mxu0 %v1233
  %2363 = vmatpush.bf16.msra.mxu0 %v1221
  %2364 = vmatpush.bf16.msra.mxu0 %v1209
  %2365 = vmatpush.bf16.msra.mxu0 %v1197
  %2366 = vmatpush.bf16.msra.mxu0 %v1185
  %2367 = vmatmul.bf16.gmra.mxu0 %v2356
  %v2368 = vpop.f32.mrf.mxu0
  %v2369 = vadd.f32 0.0, %v2368
  %v2370 = vpop.f32.mrf.mxu0
  %2371 = vdwg.mxu0
  %2372 = vmatpush.bf16.msra.mxu0 %v1365
  %2373 = vmatpush.bf16.msra.mxu0 %v1353
  %2374 = vmatpush.bf16.msra.mxu0 %v1341
  %2375 = vmatpush.bf16.msra.mxu0 %v1329
  %2376 = vmatpush.bf16.msra.mxu0 %v1317
  %2377 = vmatpush.bf16.msra.mxu0 %v1305
  %2378 = vmatpush.bf16.msra.mxu0 %v1293
  %2379 = vmatpush.bf16.msra.mxu0 %v1281
  %2380 = vmatmul.bf16.gmra.mxu0 %v2357
  %v2381 = vpop.f32.mrf.mxu0
  %v2382 = vadd.f32 %v2369, %v2381
  %v2383 = vpop.f32.mrf.mxu0
  %2384 = vdwg.mxu0
  %2385 = vmatpush.bf16.msra.mxu0 %v1461
  %2386 = vmatpush.bf16.msra.mxu0 %v1449
  %2387 = vmatpush.bf16.msra.mxu0 %v1437
  %2388 = vmatpush.bf16.msra.mxu0 %v1425
  %2389 = vmatpush.bf16.msra.mxu0 %v1413
  %2390 = vmatpush.bf16.msra.mxu0 %v1401
  %2391 = vmatpush.bf16.msra.mxu0 %v1389
  %2392 = vmatpush.bf16.msra.mxu0 %v1377
  %2393 = vmatmul.bf16.gmra.mxu0 %v2358
  %v2394 = vpop.f32.mrf.mxu0
  %v2395 = vadd.f32 %v2382, %v2394
  %v2396 = vpop.f32.mrf.mxu0
  %2397 = vdwg.mxu0
  %2398 = vmatpush.bf16.msra.mxu0 %v1270
  %2399 = vmatpush.bf16.msra.mxu0 %v1258
  %2400 = vmatpush.bf16.msra.mxu0 %v1246
  %2401 = vmatpush.bf16.msra.mxu0 %v1234
  %2402 = vmatpush.bf16.msra.mxu0 %v1222
  %2403 = vmatpush.bf16.msra.mxu0 %v1210
  %2404 = vmatpush.bf16.msra.mxu0 %v1198
  %2405 = vmatpush.bf16.msra.mxu0 %v1186
  %2406 = vmatmul.bf16.gmra.mxu0 %v2356
  %v2407 = vpop.f32.mrf.mxu0
  %v2408 = vadd.f32 0.0, %v2407
  %v2409 = vpop.f32.mrf.mxu0
  %2410 = vdwg.mxu0
  %2411 = vmatpush.bf16.msra.mxu0 %v1366
  %2412 = vmatpush.bf16.msra.mxu0 %v1354
  %2413 = vmatpush.bf16.msra.mxu0 %v1342
  %2414 = vmatpush.bf16.msra.mxu0 %v1330
  %2415 = vmatpush.bf16.msra.mxu0 %v1318
  %2416 = vmatpush.bf16.msra.mxu0 %v1306
  %2417 = vmatpush.bf16.msra.mxu0 %v1294
  %2418 = vmatpush.bf16.msra.mxu0 %v1282
  %2419 = vmatmul.bf16.gmra.mxu0 %v2357
  %v2420 = vpop.f32.mrf.mxu0
  %v2421 = vadd.f32 %v2408, %v2420
  %v2422 = vpop.f32.mrf.mxu0
  %2423 = vdwg.mxu0
  %2424 = vmatpush.bf16.msra.mxu0 %v1462
  %2425 = vmatpush.bf16.msra.mxu0 %v1450
  %2426 = vmatpush.bf16.msra.mxu0 %v1438
  %2427 = vmatpush.bf16.msra.mxu0 %v1426
  %2428 = vmatpush.bf16.msra.mxu0 %v1414
  %2429 = vmatpush.bf16.msra.mxu0 %v1402
  %2430 = vmatpush.bf16.msra.mxu0 %v1390
  %2431 = vmatpush.bf16.msra.mxu0 %v1378
  %2432 = vmatmul.bf16.gmra.mxu0 %v2358
  %v2433 = vpop.f32.mrf.mxu0
  %v2434 = vadd.f32 %v2421, %v2433
  %v2435 = vpop.f32.mrf.mxu0
  %2436 = vdwg.mxu0
  %2437 = vmatpush.bf16.msra.mxu0 %v1271
  %2438 = vmatpush.bf16.msra.mxu0 %v1259
  %2439 = vmatpush.bf16.msra.mxu0 %v1247
  %2440 = vmatpush.bf16.msra.mxu0 %v1235
  %2441 = vmatpush.bf16.msra.mxu0 %v1223
  %2442 = vmatpush.bf16.msra.mxu0 %v1211
  %2443 = vmatpush.bf16.msra.mxu0 %v1199
  %2444 = vmatpush.bf16.msra.mxu0 %v1187
  %2445 = vmatmul.bf16.gmra.mxu0 %v2356
  %v2446 = vpop.f32.mrf.mxu0
  %v2447 = vadd.f32 0.0, %v2446
  %v2448 = vpop.f32.mrf.mxu0
  %2449 = vdwg.mxu0
  %2450 = vmatpush.bf16.msra.mxu0 %v1367
  %2451 = vmatpush.bf16.msra.mxu0 %v1355
  %2452 = vmatpush.bf16.msra.mxu0 %v1343
  %2453 = vmatpush.bf16.msra.mxu0 %v1331
  %2454 = vmatpush.bf16.msra.mxu0 %v1319
  %2455 = vmatpush.bf16.msra.mxu0 %v1307
  %2456 = vmatpush.bf16.msra.mxu0 %v1295
  %2457 = vmatpush.bf16.msra.mxu0 %v1283
  %2458 = vmatmul.bf16.gmra.mxu0 %v2357
  %v2459 = vpop.f32.mrf.mxu0
  %v2460 = vadd.f32 %v2447, %v2459
  %v2461 = vpop.f32.mrf.mxu0
  %2462 = vdwg.mxu0
  %2463 = vmatpush.bf16.msra.mxu0 %v1463
  %2464 = vmatpush.bf16.msra.mxu0 %v1451
  %2465 = vmatpush.bf16.msra.mxu0 %v1439
  %2466 = vmatpush.bf16.msra.mxu0 %v1427
  %2467 = vmatpush.bf16.msra.mxu0 %v1415
  %2468 = vmatpush.bf16.msra.mxu0 %v1403
  %2469 = vmatpush.bf16.msra.mxu0 %v1391
  %2470 = vmatpush.bf16.msra.mxu0 %v1379
  %2471 = vmatmul.bf16.gmra.mxu0 %v2358
  %v2472 = vpop.f32.mrf.mxu0
  %v2473 = vadd.f32 %v2460, %v2472
  %v2474 = vpop.f32.mrf.mxu0
  %2475 = vdwg.mxu0
  %2476 = vmatpush.bf16.msra.mxu0 %v1272
  %2477 = vmatpush.bf16.msra.mxu0 %v1260
  %2478 = vmatpush.bf16.msra.mxu0 %v1248
  %2479 = vmatpush.bf16.msra.mxu0 %v1236
  %2480 = vmatpush.bf16.msra.mxu0 %v1224
  %2481 = vmatpush.bf16.msra.mxu0 %v1212
  %2482 = vmatpush.bf16.msra.mxu0 %v1200
  %2483 = vmatpush.bf16.msra.mxu0 %v1188
  %2484 = vmatmul.bf16.gmra.mxu0 %v2356
  %v2485 = vpop.f32.mrf.mxu0
  %v2486 = vadd.f32 0.0, %v2485
  %v2487 = vpop.f32.mrf.mxu0
  %2488 = vdwg.mxu0
  %2489 = vmatpush.bf16.msra.mxu0 %v1368
  %2490 = vmatpush.bf16.msra.mxu0 %v1356
  %2491 = vmatpush.bf16.msra.mxu0 %v1344
  %2492 = vmatpush.bf16.msra.mxu0 %v1332
  %2493 = vmatpush.bf16.msra.mxu0 %v1320
  %2494 = vmatpush.bf16.msra.mxu0 %v1308
  %2495 = vmatpush.bf16.msra.mxu0 %v1296
  %2496 = vmatpush.bf16.msra.mxu0 %v1284
  %2497 = vmatmul.bf16.gmra.mxu0 %v2357
  %v2498 = vpop.f32.mrf.mxu0
  %v2499 = vadd.f32 %v2486, %v2498
  %v2500 = vpop.f32.mrf.mxu0
  %2501 = vdwg.mxu0
  %2502 = vmatpush.bf16.msra.mxu0 %v1464
  %2503 = vmatpush.bf16.msra.mxu0 %v1452
  %2504 = vmatpush.bf16.msra.mxu0 %v1440
  %2505 = vmatpush.bf16.msra.mxu0 %v1428
  %2506 = vmatpush.bf16.msra.mxu0 %v1416
  %2507 = vmatpush.bf16.msra.mxu0 %v1404
  %2508 = vmatpush.bf16.msra.mxu0 %v1392
  %2509 = vmatpush.bf16.msra.mxu0 %v1380
  %2510 = vmatmul.bf16.gmra.mxu0 %v2358
  %v2511 = vpop.f32.mrf.mxu0
  %v2512 = vadd.f32 %v2499, %v2511
  %v2513 = vpop.f32.mrf.mxu0
  %2514 = vdwg.mxu0
  %2515 = vmatpush.bf16.msra.mxu0 %v1273
  %2516 = vmatpush.bf16.msra.mxu0 %v1261
  %2517 = vmatpush.bf16.msra.mxu0 %v1249
  %2518 = vmatpush.bf16.msra.mxu0 %v1237
  %2519 = vmatpush.bf16.msra.mxu0 %v1225
  %2520 = vmatpush.bf16.msra.mxu0 %v1213
  %2521 = vmatpush.bf16.msra.mxu0 %v1201
  %2522 = vmatpush.bf16.msra.mxu0 %v1189
  %2523 = vmatmul.bf16.gmra.mxu0 %v2356
  %v2524 = vpop.f32.mrf.mxu0
  %v2525 = vadd.f32 0.0, %v2524
  %v2526 = vpop.f32.mrf.mxu0
  %2527 = vdwg.mxu0
  %2528 = vmatpush.bf16.msra.mxu0 %v1369
  %2529 = vmatpush.bf16.msra.mxu0 %v1357
  %2530 = vmatpush.bf16.msra.mxu0 %v1345
  %2531 = vmatpush.bf16.msra.mxu0 %v1333
  %2532 = vmatpush.bf16.msra.mxu0 %v1321
  %2533 = vmatpush.bf16.msra.mxu0 %v1309
  %2534 = vmatpush.bf16.msra.mxu0 %v1297
  %2535 = vmatpush.bf16.msra.mxu0 %v1285
  %2536 = vmatmul.bf16.gmra.mxu0 %v2357
  %v2537 = vpop.f32.mrf.mxu0
  %v2538 = vadd.f32 %v2525, %v2537
  %v2539 = vpop.f32.mrf.mxu0
  %2540 = vdwg.mxu0
  %2541 = vmatpush.bf16.msra.mxu0 %v1465
  %2542 = vmatpush.bf16.msra.mxu0 %v1453
  %2543 = vmatpush.bf16.msra.mxu0 %v1441
  %2544 = vmatpush.bf16.msra.mxu0 %v1429
  %2545 = vmatpush.bf16.msra.mxu0 %v1417
  %2546 = vmatpush.bf16.msra.mxu0 %v1405
  %2547 = vmatpush.bf16.msra.mxu0 %v1393
  %2548 = vmatpush.bf16.msra.mxu0 %v1381
  %2549 = vmatmul.bf16.gmra.mxu0 %v2358
  %v2550 = vpop.f32.mrf.mxu0
  %v2551 = vadd.f32 %v2538, %v2550
  %v2552 = vpop.f32.mrf.mxu0
  %2553 = vdwg.mxu0
  %2554 = vmatpush.bf16.msra.mxu0 %v1274
  %2555 = vmatpush.bf16.msra.mxu0 %v1262
  %2556 = vmatpush.bf16.msra.mxu0 %v1250
  %2557 = vmatpush.bf16.msra.mxu0 %v1238
  %2558 = vmatpush.bf16.msra.mxu0 %v1226
  %2559 = vmatpush.bf16.msra.mxu0 %v1214
  %2560 = vmatpush.bf16.msra.mxu0 %v1202
  %2561 = vmatpush.bf16.msra.mxu0 %v1190
  %2562 = vmatmul.bf16.gmra.mxu0 %v2356
  %v2563 = vpop.f32.mrf.mxu0
  %v2564 = vadd.f32 0.0, %v2563
  %v2565 = vpop.f32.mrf.mxu0
  %2566 = vdwg.mxu0
  %2567 = vmatpush.bf16.msra.mxu0 %v1370
  %2568 = vmatpush.bf16.msra.mxu0 %v1358
  %2569 = vmatpush.bf16.msra.mxu0 %v1346
  %2570 = vmatpush.bf16.msra.mxu0 %v1334
  %2571 = vmatpush.bf16.msra.mxu0 %v1322
  %2572 = vmatpush.bf16.msra.mxu0 %v1310
  %2573 = vmatpush.bf16.msra.mxu0 %v1298
  %2574 = vmatpush.bf16.msra.mxu0 %v1286
  %2575 = vmatmul.bf16.gmra.mxu0 %v2357
  %v2576 = vpop.f32.mrf.mxu0
  %v2577 = vadd.f32 %v2564, %v2576
  %v2578 = vpop.f32.mrf.mxu0
  %2579 = vdwg.mxu0
  %2580 = vmatpush.bf16.msra.mxu0 %v1466
  %2581 = vmatpush.bf16.msra.mxu0 %v1454
  %2582 = vmatpush.bf16.msra.mxu0 %v1442
  %2583 = vmatpush.bf16.msra.mxu0 %v1430
  %2584 = vmatpush.bf16.msra.mxu0 %v1418
  %2585 = vmatpush.bf16.msra.mxu0 %v1406
  %2586 = vmatpush.bf16.msra.mxu0 %v1394
  %2587 = vmatpush.bf16.msra.mxu0 %v1382
  %2588 = vmatmul.bf16.gmra.mxu0 %v2358
  %v2589 = vpop.f32.mrf.mxu0
  %v2590 = vadd.f32 %v2577, %v2589
  %v2591 = vpop.f32.mrf.mxu0
  %2592 = vdwg.mxu0
  %2593 = vmatpush.bf16.msra.mxu0 %v1275
  %2594 = vmatpush.bf16.msra.mxu0 %v1263
  %2595 = vmatpush.bf16.msra.mxu0 %v1251
  %2596 = vmatpush.bf16.msra.mxu0 %v1239
  %2597 = vmatpush.bf16.msra.mxu0 %v1227
  %2598 = vmatpush.bf16.msra.mxu0 %v1215
  %2599 = vmatpush.bf16.msra.mxu0 %v1203
  %2600 = vmatpush.bf16.msra.mxu0 %v1191
  %2601 = vmatmul.bf16.gmra.mxu0 %v2356
  %v2602 = vpop.f32.mrf.mxu0
  %v2603 = vadd.f32 0.0, %v2602
  %v2604 = vpop.f32.mrf.mxu0
  %2605 = vdwg.mxu0
  %2606 = vmatpush.bf16.msra.mxu0 %v1371
  %2607 = vmatpush.bf16.msra.mxu0 %v1359
  %2608 = vmatpush.bf16.msra.mxu0 %v1347
  %2609 = vmatpush.bf16.msra.mxu0 %v1335
  %2610 = vmatpush.bf16.msra.mxu0 %v1323
  %2611 = vmatpush.bf16.msra.mxu0 %v1311
  %2612 = vmatpush.bf16.msra.mxu0 %v1299
  %2613 = vmatpush.bf16.msra.mxu0 %v1287
  %2614 = vmatmul.bf16.gmra.mxu0 %v2357
  %v2615 = vpop.f32.mrf.mxu0
  %v2616 = vadd.f32 %v2603, %v2615
  %v2617 = vpop.f32.mrf.mxu0
  %2618 = vdwg.mxu0
  %2619 = vmatpush.bf16.msra.mxu0 %v1467
  %2620 = vmatpush.bf16.msra.mxu0 %v1455
  %2621 = vmatpush.bf16.msra.mxu0 %v1443
  %2622 = vmatpush.bf16.msra.mxu0 %v1431
  %2623 = vmatpush.bf16.msra.mxu0 %v1419
  %2624 = vmatpush.bf16.msra.mxu0 %v1407
  %2625 = vmatpush.bf16.msra.mxu0 %v1395
  %2626 = vmatpush.bf16.msra.mxu0 %v1383
  %2627 = vmatmul.bf16.gmra.mxu0 %v2358
  %v2628 = vpop.f32.mrf.mxu0
  %v2629 = vadd.f32 %v2616, %v2628
  %v2630 = vpop.f32.mrf.mxu0
  %2631 = vdwg.mxu0
  %2632 = vmatpush.bf16.msra.mxu0 %v1276
  %2633 = vmatpush.bf16.msra.mxu0 %v1264
  %2634 = vmatpush.bf16.msra.mxu0 %v1252
  %2635 = vmatpush.bf16.msra.mxu0 %v1240
  %2636 = vmatpush.bf16.msra.mxu0 %v1228
  %2637 = vmatpush.bf16.msra.mxu0 %v1216
  %2638 = vmatpush.bf16.msra.mxu0 %v1204
  %2639 = vmatpush.bf16.msra.mxu0 %v1192
  %2640 = vmatmul.bf16.gmra.mxu0 %v2356
  %v2641 = vpop.f32.mrf.mxu0
  %v2642 = vadd.f32 0.0, %v2641
  %v2643 = vpop.f32.mrf.mxu0
  %2644 = vdwg.mxu0
  %2645 = vmatpush.bf16.msra.mxu0 %v1372
  %2646 = vmatpush.bf16.msra.mxu0 %v1360
  %2647 = vmatpush.bf16.msra.mxu0 %v1348
  %2648 = vmatpush.bf16.msra.mxu0 %v1336
  %2649 = vmatpush.bf16.msra.mxu0 %v1324
  %2650 = vmatpush.bf16.msra.mxu0 %v1312
  %2651 = vmatpush.bf16.msra.mxu0 %v1300
  %2652 = vmatpush.bf16.msra.mxu0 %v1288
  %2653 = vmatmul.bf16.gmra.mxu0 %v2357
  %v2654 = vpop.f32.mrf.mxu0
  %v2655 = vadd.f32 %v2642, %v2654
  %v2656 = vpop.f32.mrf.mxu0
  %2657 = vdwg.mxu0
  %2658 = vmatpush.bf16.msra.mxu0 %v1468
  %2659 = vmatpush.bf16.msra.mxu0 %v1456
  %2660 = vmatpush.bf16.msra.mxu0 %v1444
  %2661 = vmatpush.bf16.msra.mxu0 %v1432
  %2662 = vmatpush.bf16.msra.mxu0 %v1420
  %2663 = vmatpush.bf16.msra.mxu0 %v1408
  %2664 = vmatpush.bf16.msra.mxu0 %v1396
  %2665 = vmatpush.bf16.msra.mxu0 %v1384
  %2666 = vmatmul.bf16.gmra.mxu0 %v2358
  %v2667 = vpop.f32.mrf.mxu0
  %v2668 = vadd.f32 %v2655, %v2667
  %v2669 = vpop.f32.mrf.mxu0
  %2670 = vdwg.mxu0
  %2671 = vmatpush.bf16.msra.mxu0 %v1277
  %2672 = vmatpush.bf16.msra.mxu0 %v1265
  %2673 = vmatpush.bf16.msra.mxu0 %v1253
  %2674 = vmatpush.bf16.msra.mxu0 %v1241
  %2675 = vmatpush.bf16.msra.mxu0 %v1229
  %2676 = vmatpush.bf16.msra.mxu0 %v1217
  %2677 = vmatpush.bf16.msra.mxu0 %v1205
  %2678 = vmatpush.bf16.msra.mxu0 %v1193
  %2679 = vmatmul.bf16.gmra.mxu0 %v2356
  %v2680 = vpop.f32.mrf.mxu0
  %v2681 = vadd.f32 0.0, %v2680
  %v2682 = vpop.f32.mrf.mxu0
  %2683 = vdwg.mxu0
  %2684 = vmatpush.bf16.msra.mxu0 %v1373
  %2685 = vmatpush.bf16.msra.mxu0 %v1361
  %2686 = vmatpush.bf16.msra.mxu0 %v1349
  %2687 = vmatpush.bf16.msra.mxu0 %v1337
  %2688 = vmatpush.bf16.msra.mxu0 %v1325
  %2689 = vmatpush.bf16.msra.mxu0 %v1313
  %2690 = vmatpush.bf16.msra.mxu0 %v1301
  %2691 = vmatpush.bf16.msra.mxu0 %v1289
  %2692 = vmatmul.bf16.gmra.mxu0 %v2357
  %v2693 = vpop.f32.mrf.mxu0
  %v2694 = vadd.f32 %v2681, %v2693
  %v2695 = vpop.f32.mrf.mxu0
  %2696 = vdwg.mxu0
  %2697 = vmatpush.bf16.msra.mxu0 %v1469
  %2698 = vmatpush.bf16.msra.mxu0 %v1457
  %2699 = vmatpush.bf16.msra.mxu0 %v1445
  %2700 = vmatpush.bf16.msra.mxu0 %v1433
  %2701 = vmatpush.bf16.msra.mxu0 %v1421
  %2702 = vmatpush.bf16.msra.mxu0 %v1409
  %2703 = vmatpush.bf16.msra.mxu0 %v1397
  %2704 = vmatpush.bf16.msra.mxu0 %v1385
  %2705 = vmatmul.bf16.gmra.mxu0 %v2358
  %v2706 = vpop.f32.mrf.mxu0
  %v2707 = vadd.f32 %v2694, %v2706
  %v2708 = vpop.f32.mrf.mxu0
  %2709 = vdwg.mxu0
  %2710 = vmatpush.bf16.msra.mxu0 %v1278
  %2711 = vmatpush.bf16.msra.mxu0 %v1266
  %2712 = vmatpush.bf16.msra.mxu0 %v1254
  %2713 = vmatpush.bf16.msra.mxu0 %v1242
  %2714 = vmatpush.bf16.msra.mxu0 %v1230
  %2715 = vmatpush.bf16.msra.mxu0 %v1218
  %2716 = vmatpush.bf16.msra.mxu0 %v1206
  %2717 = vmatpush.bf16.msra.mxu0 %v1194
  %2718 = vmatmul.bf16.gmra.mxu0 %v2356
  %v2719 = vpop.f32.mrf.mxu0
  %v2720 = vadd.f32 0.0, %v2719
  %v2721 = vpop.f32.mrf.mxu0
  %2722 = vdwg.mxu0
  %2723 = vmatpush.bf16.msra.mxu0 %v1374
  %2724 = vmatpush.bf16.msra.mxu0 %v1362
  %2725 = vmatpush.bf16.msra.mxu0 %v1350
  %2726 = vmatpush.bf16.msra.mxu0 %v1338
  %2727 = vmatpush.bf16.msra.mxu0 %v1326
  %2728 = vmatpush.bf16.msra.mxu0 %v1314
  %2729 = vmatpush.bf16.msra.mxu0 %v1302
  %2730 = vmatpush.bf16.msra.mxu0 %v1290
  %2731 = vmatmul.bf16.gmra.mxu0 %v2357
  %v2732 = vpop.f32.mrf.mxu0
  %v2733 = vadd.f32 %v2720, %v2732
  %v2734 = vpop.f32.mrf.mxu0
  %2735 = vdwg.mxu0
  %2736 = vmatpush.bf16.msra.mxu0 %v1470
  %2737 = vmatpush.bf16.msra.mxu0 %v1458
  %2738 = vmatpush.bf16.msra.mxu0 %v1446
  %2739 = vmatpush.bf16.msra.mxu0 %v1434
  %2740 = vmatpush.bf16.msra.mxu0 %v1422
  %2741 = vmatpush.bf16.msra.mxu0 %v1410
  %2742 = vmatpush.bf16.msra.mxu0 %v1398
  %2743 = vmatpush.bf16.msra.mxu0 %v1386
  %2744 = vmatmul.bf16.gmra.mxu0 %v2358
  %v2745 = vpop.f32.mrf.mxu0
  %v2746 = vadd.f32 %v2733, %v2745
  %v2747 = vpop.f32.mrf.mxu0
  %2748 = vdwg.mxu0
  %2749 = vmatpush.bf16.msra.mxu0 %v1279
  %2750 = vmatpush.bf16.msra.mxu0 %v1267
  %2751 = vmatpush.bf16.msra.mxu0 %v1255
  %2752 = vmatpush.bf16.msra.mxu0 %v1243
  %2753 = vmatpush.bf16.msra.mxu0 %v1231
  %2754 = vmatpush.bf16.msra.mxu0 %v1219
  %2755 = vmatpush.bf16.msra.mxu0 %v1207
  %2756 = vmatpush.bf16.msra.mxu0 %v1195
  %2757 = vmatmul.bf16.gmra.mxu0 %v2356
  %v2758 = vpop.f32.mrf.mxu0
  %v2759 = vadd.f32 0.0, %v2758
  %v2760 = vpop.f32.mrf.mxu0
  %2761 = vdwg.mxu0
  %2762 = vmatpush.bf16.msra.mxu0 %v1375
  %2763 = vmatpush.bf16.msra.mxu0 %v1363
  %2764 = vmatpush.bf16.msra.mxu0 %v1351
  %2765 = vmatpush.bf16.msra.mxu0 %v1339
  %2766 = vmatpush.bf16.msra.mxu0 %v1327
  %2767 = vmatpush.bf16.msra.mxu0 %v1315
  %2768 = vmatpush.bf16.msra.mxu0 %v1303
  %2769 = vmatpush.bf16.msra.mxu0 %v1291
  %2770 = vmatmul.bf16.gmra.mxu0 %v2357
  %v2771 = vpop.f32.mrf.mxu0
  %v2772 = vadd.f32 %v2759, %v2771
  %v2773 = vpop.f32.mrf.mxu0
  %2774 = vdwg.mxu0
  %2775 = vmatpush.bf16.msra.mxu0 %v1471
  %2776 = vmatpush.bf16.msra.mxu0 %v1459
  %2777 = vmatpush.bf16.msra.mxu0 %v1447
  %2778 = vmatpush.bf16.msra.mxu0 %v1435
  %2779 = vmatpush.bf16.msra.mxu0 %v1423
  %2780 = vmatpush.bf16.msra.mxu0 %v1411
  %2781 = vmatpush.bf16.msra.mxu0 %v1399
  %2782 = vmatpush.bf16.msra.mxu0 %v1387
  %2783 = vmatmul.bf16.gmra.mxu0 %v2358
  %v2784 = vpop.f32.mrf.mxu0
  %v2785 = vadd.f32 %v2772, %v2784
  %v2786 = vpop.f32.mrf.mxu0
  %2787 = vdwg.mxu0
  %2788 = vmatpush.bf16.msra.mxu0 %v1280
  %2789 = vmatpush.bf16.msra.mxu0 %v1268
  %2790 = vmatpush.bf16.msra.mxu0 %v1256
  %2791 = vmatpush.bf16.msra.mxu0 %v1244
  %2792 = vmatpush.bf16.msra.mxu0 %v1232
  %2793 = vmatpush.bf16.msra.mxu0 %v1220
  %2794 = vmatpush.bf16.msra.mxu0 %v1208
  %2795 = vmatpush.bf16.msra.mxu0 %v1196
  %2796 = vmatmul.bf16.gmra.mxu0 %v2356
  %v2797 = vpop.f32.mrf.mxu0
  %v2798 = vadd.f32 0.0, %v2797
  %v2799 = vpop.f32.mrf.mxu0
  %2800 = vdwg.mxu0
  %2801 = vmatpush.bf16.msra.mxu0 %v1376
  %2802 = vmatpush.bf16.msra.mxu0 %v1364
  %2803 = vmatpush.bf16.msra.mxu0 %v1352
  %2804 = vmatpush.bf16.msra.mxu0 %v1340
  %2805 = vmatpush.bf16.msra.mxu0 %v1328
  %2806 = vmatpush.bf16.msra.mxu0 %v1316
  %2807 = vmatpush.bf16.msra.mxu0 %v1304
  %2808 = vmatpush.bf16.msra.mxu0 %v1292
  %2809 = vmatmul.bf16.gmra.mxu0 %v2357
  %v2810 = vpop.f32.mrf.mxu0
  %v2811 = vadd.f32 %v2798, %v2810
  %v2812 = vpop.f32.mrf.mxu0
  %2813 = vdwg.mxu0
  %2814 = vmatpush.bf16.msra.mxu0 %v1472
  %2815 = vmatpush.bf16.msra.mxu0 %v1460
  %2816 = vmatpush.bf16.msra.mxu0 %v1448
  %2817 = vmatpush.bf16.msra.mxu0 %v1436
  %2818 = vmatpush.bf16.msra.mxu0 %v1424
  %2819 = vmatpush.bf16.msra.mxu0 %v1412
  %2820 = vmatpush.bf16.msra.mxu0 %v1400
  %2821 = vmatpush.bf16.msra.mxu0 %v1388
  %2822 = vmatmul.bf16.gmra.mxu0 %v2358
  %v2823 = vpop.f32.mrf.mxu0
  %v2824 = vadd.f32 %v2811, %v2823
  %v2825 = vpop.f32.mrf.mxu0
  %2826 = vdwg.mxu0
  %v2839 = vrot.slane %v2434, 6
  %v2840 = vrot.slane %v2473, 4
  %v2841 = vrot.slane %v2512, 2
  %v2842 = vrot.slane %v2590, 6
  %v2843 = vrot.slane %v2629, 4
  %v2844 = vrot.slane %v2668, 2
  %v2845 = vrot.slane %v2746, 6
  %v2846 = vrot.slane %v2785, 4
  %v2847 = vrot.slane %v2824, 2
  %v2848 = vsel %vm2250, %v2395, %v2839
  %v2849 = vsel %vm2252, %v2840, %v2841
  %v2850 = vsel %vm2254, %v2848, %v2849
  %v2851 = vsel %vm2250, %v2551, %v2842
  %v2852 = vsel %vm2252, %v2843, %v2844
  %v2853 = vsel %vm2254, %v2851, %v2852
  %v2854 = vsel %vm2250, %v2707, %v2845
  %v2855 = vsel %vm2252, %v2846, %v2847
  %v2856 = vsel %vm2254, %v2854, %v2855
  %v2860 = vadd.f32 %v2345, %v2850
  %v2861 = vadd.f32 %v2346, %v2853
  %v2862 = vadd.f32 %v2347, %v2856
  %v2863 = vxor.u32 %v2860, 2147483648
  %v2864 = vmul.f32 %v2863, 1.442695
  %v2865 = vpow.pop %v2864
  %v2866 = vadd.f32 %v2865, 1.0
  %v2867 = vrcp.pop %v2866
  %v2868 = vmul.f32 %v2866, %v2867
  %v2869 = vsub.f32 1.0, %v2868
  %v2870 = vmul.f32 %v2867, %v2869
  %v2871 = vadd.f32 %v2867, %v2870
  %vm2872 = vweird.f32 %v2866
  %vm2873 = vweird.f32 %v2867
  %vm2874 = vmor %vm2872, %vm2873
  %v2875 = vsel %vm2874, %v2867, %v2871
  %v2876 = vand.u32 2147483647, %v2866
  %vm2877 = vcmp.eq.f32.partialorder %v2876, 8.507059e+37
  %v2878 = vand.u32 %v2866, 2147483648
  %v2879 = vor.u32 1.1754944e-38, %v2878
  %v2880 = vsel %vm2877, %v2879, %v2875
  %v2881 = vmul.f32 1.0, %v2880
  %v2884 = vrot.slane %v2860, 6
  %v2885 = vrot.slane %v2861, 6
  %v2886 = vsel %vm2250, %v2884, %v2885
  %v2888 = vxor.u32 %v2886, 2147483648
  %v2889 = vmul.f32 %v2888, 1.442695
  %v2890 = vpow.pop %v2889
  %v2891 = vadd.f32 %v2890, 1.0
  %v2892 = vrcp.pop %v2891
  %v2893 = vmul.f32 %v2891, %v2892
  %v2894 = vsub.f32 1.0, %v2893
  %v2895 = vmul.f32 %v2892, %v2894
  %v2896 = vadd.f32 %v2892, %v2895
  %vm2897 = vweird.f32 %v2891
  %vm2898 = vweird.f32 %v2892
  %vm2899 = vmor %vm2897, %vm2898
  %v2900 = vsel %vm2899, %v2892, %v2896
  %v2901 = vand.u32 2147483647, %v2891
  %vm2902 = vcmp.eq.f32.partialorder %v2901, 8.507059e+37
  %v2903 = vand.u32 %v2891, 2147483648
  %v2904 = vor.u32 1.1754944e-38, %v2903
  %v2905 = vsel %vm2902, %v2904, %v2900
  %v2906 = vmul.f32 1.0, %v2905
  %v2908 = vrot.slane %v2861, 4
  %v2909 = vrot.slane %v2862, 4
  %v2910 = vsel %vm2254, %v2908, %v2909
  %v2912 = vtanh.pop %v2910
  %v2913 = vrot.slane %v2862, 2
  %v2915 = vxor.u32 %v2913, 2147483648
  %v2916 = vmul.f32 %v2915, 1.442695
  %v2917 = vpow.pop %v2916
  %v2918 = vadd.f32 %v2917, 1.0
  %v2919 = vrcp.pop %v2918
  %v2920 = vmul.f32 %v2918, %v2919
  %v2921 = vsub.f32 1.0, %v2920
  %v2922 = vmul.f32 %v2919, %v2921
  %v2923 = vadd.f32 %v2919, %v2922
  %vm2924 = vweird.f32 %v2918
  %vm2925 = vweird.f32 %v2919
  %vm2926 = vmor %vm2924, %vm2925
  %v2927 = vsel %vm2926, %v2919, %v2923
  %v2928 = vand.u32 2147483647, %v2918
  %vm2929 = vcmp.eq.f32.partialorder %v2928, 8.507059e+37
  %v2930 = vand.u32 %v2918, 2147483648
  %v2931 = vor.u32 1.1754944e-38, %v2930
  %v2932 = vsel %vm2929, %v2931, %v2927
  %v2933 = vmul.f32 1.0, %v2932
  %v2934 = vmul.f32 %v2906, %v2341
  %v2935 = vmul.f32 %v2881, %v2912
  %v2936 = vadd.f32 %v2934, %v2935
  %v2937 = vtanh.pop %v2936
  %v2938 = vmul.f32 %v2933, %v2937
  %s2939 = scalar_lea.vmem %s0, 48
  %v2940 = vld [vmem:[%s2939] sm:$0xff]
  %v2941 = vld [vmem:[%s2939 + $0x8] sm:$0xff]
  %v2942 = vld [vmem:[%s2939 + $0x10] sm:$0xff]
  %2944 = vst [vmem:[#allocation1] ss:$4 sm:$0xff] %v2938
  %v2945 = vld.sshfl [vmem:[#allocation1] sm:$0xff pattern:$0x73625140]
  %v2946 = vld.sshfl [vmem:[#allocation1 + $0x8] sm:$0xff pattern:$0x73625140]
  %v2947 = vld.sshfl [vmem:[#allocation1 + $0x10] sm:$0xff pattern:$0x73625140]
  %v2951 = vpack.c.bf16 %v2945, %v2945
  %v2952 = vpack.c.bf16 %v2946, %v2946
  %v2953 = vpack.c.bf16 %v2947, %v2947
  %2954 = vmatpush.bf16.msra.mxu0 %v1269
  %2955 = vmatpush.bf16.msra.mxu0 %v1257
  %2956 = vmatpush.bf16.msra.mxu0 %v1245
  %2957 = vmatpush.bf16.msra.mxu0 %v1233
  %2958 = vmatpush.bf16.msra.mxu0 %v1221
  %2959 = vmatpush.bf16.msra.mxu0 %v1209
  %2960 = vmatpush.bf16.msra.mxu0 %v1197
  %2961 = vmatpush.bf16.msra.mxu0 %v1185
  %2962 = vmatmul.bf16.gmra.mxu0 %v2951
  %v2963 = vpop.f32.mrf.mxu0
  %v2964 = vadd.f32 0.0, %v2963
  %v2965 = vpop.f32.mrf.mxu0
  %2966 = vdwg.mxu0
  %2967 = vmatpush.bf16.msra.mxu0 %v1365
  %2968 = vmatpush.bf16.msra.mxu0 %v1353
  %2969 = vmatpush.bf16.msra.mxu0 %v1341
  %2970 = vmatpush.bf16.msra.mxu0 %v1329
  %2971 = vmatpush.bf16.msra.mxu0 %v1317
  %2972 = vmatpush.bf16.msra.mxu0 %v1305
  %2973 = vmatpush.bf16.msra.mxu0 %v1293
  %2974 = vmatpush.bf16.msra.mxu0 %v1281
  %2975 = vmatmul.bf16.gmra.mxu0 %v2952
  %v2976 = vpop.f32.mrf.mxu0
  %v2977 = vadd.f32 %v2964, %v2976
  %v2978 = vpop.f32.mrf.mxu0
  %2979 = vdwg.mxu0
  %2980 = vmatpush.bf16.msra.mxu0 %v1461
  %2981 = vmatpush.bf16.msra.mxu0 %v1449
  %2982 = vmatpush.bf16.msra.mxu0 %v1437
  %2983 = vmatpush.bf16.msra.mxu0 %v1425
  %2984 = vmatpush.bf16.msra.mxu0 %v1413
  %2985 = vmatpush.bf16.msra.mxu0 %v1401
  %2986 = vmatpush.bf16.msra.mxu0 %v1389
  %2987 = vmatpush.bf16.msra.mxu0 %v1377
  %2988 = vmatmul.bf16.gmra.mxu0 %v2953
  %v2989 = vpop.f32.mrf.mxu0
  %v2990 = vadd.f32 %v2977, %v2989
  %v2991 = vpop.f32.mrf.mxu0
  %2992 = vdwg.mxu0
  %2993 = vmatpush.bf16.msra.mxu0 %v1270
  %2994 = vmatpush.bf16.msra.mxu0 %v1258
  %2995 = vmatpush.bf16.msra.mxu0 %v1246
  %2996 = vmatpush.bf16.msra.mxu0 %v1234
  %2997 = vmatpush.bf16.msra.mxu0 %v1222
  %2998 = vmatpush.bf16.msra.mxu0 %v1210
  %2999 = vmatpush.bf16.msra.mxu0 %v1198
  %3000 = vmatpush.bf16.msra.mxu0 %v1186
  %3001 = vmatmul.bf16.gmra.mxu0 %v2951
  %v3002 = vpop.f32.mrf.mxu0
  %v3003 = vadd.f32 0.0, %v3002
  %v3004 = vpop.f32.mrf.mxu0
  %3005 = vdwg.mxu0
  %3006 = vmatpush.bf16.msra.mxu0 %v1366
  %3007 = vmatpush.bf16.msra.mxu0 %v1354
  %3008 = vmatpush.bf16.msra.mxu0 %v1342
  %3009 = vmatpush.bf16.msra.mxu0 %v1330
  %3010 = vmatpush.bf16.msra.mxu0 %v1318
  %3011 = vmatpush.bf16.msra.mxu0 %v1306
  %3012 = vmatpush.bf16.msra.mxu0 %v1294
  %3013 = vmatpush.bf16.msra.mxu0 %v1282
  %3014 = vmatmul.bf16.gmra.mxu0 %v2952
  %v3015 = vpop.f32.mrf.mxu0
  %v3016 = vadd.f32 %v3003, %v3015
  %v3017 = vpop.f32.mrf.mxu0
  %3018 = vdwg.mxu0
  %3019 = vmatpush.bf16.msra.mxu0 %v1462
  %3020 = vmatpush.bf16.msra.mxu0 %v1450
  %3021 = vmatpush.bf16.msra.mxu0 %v1438
  %3022 = vmatpush.bf16.msra.mxu0 %v1426
  %3023 = vmatpush.bf16.msra.mxu0 %v1414
  %3024 = vmatpush.bf16.msra.mxu0 %v1402
  %3025 = vmatpush.bf16.msra.mxu0 %v1390
  %3026 = vmatpush.bf16.msra.mxu0 %v1378
  %3027 = vmatmul.bf16.gmra.mxu0 %v2953
  %v3028 = vpop.f32.mrf.mxu0
  %v3029 = vadd.f32 %v3016, %v3028
  %v3030 = vpop.f32.mrf.mxu0
  %3031 = vdwg.mxu0
  %3032 = vmatpush.bf16.msra.mxu0 %v1271
  %3033 = vmatpush.bf16.msra.mxu0 %v1259
  %3034 = vmatpush.bf16.msra.mxu0 %v1247
  %3035 = vmatpush.bf16.msra.mxu0 %v1235
  %3036 = vmatpush.bf16.msra.mxu0 %v1223
  %3037 = vmatpush.bf16.msra.mxu0 %v1211
  %3038 = vmatpush.bf16.msra.mxu0 %v1199
  %3039 = vmatpush.bf16.msra.mxu0 %v1187
  %3040 = vmatmul.bf16.gmra.mxu0 %v2951
  %v3041 = vpop.f32.mrf.mxu0
  %v3042 = vadd.f32 0.0, %v3041
  %v3043 = vpop.f32.mrf.mxu0
  %3044 = vdwg.mxu0
  %3045 = vmatpush.bf16.msra.mxu0 %v1367
  %3046 = vmatpush.bf16.msra.mxu0 %v1355
  %3047 = vmatpush.bf16.msra.mxu0 %v1343
  %3048 = vmatpush.bf16.msra.mxu0 %v1331
  %3049 = vmatpush.bf16.msra.mxu0 %v1319
  %3050 = vmatpush.bf16.msra.mxu0 %v1307
  %3051 = vmatpush.bf16.msra.mxu0 %v1295
  %3052 = vmatpush.bf16.msra.mxu0 %v1283
  %3053 = vmatmul.bf16.gmra.mxu0 %v2952
  %v3054 = vpop.f32.mrf.mxu0
  %v3055 = vadd.f32 %v3042, %v3054
  %v3056 = vpop.f32.mrf.mxu0
  %3057 = vdwg.mxu0
  %3058 = vmatpush.bf16.msra.mxu0 %v1463
  %3059 = vmatpush.bf16.msra.mxu0 %v1451
  %3060 = vmatpush.bf16.msra.mxu0 %v1439
  %3061 = vmatpush.bf16.msra.mxu0 %v1427
  %3062 = vmatpush.bf16.msra.mxu0 %v1415
  %3063 = vmatpush.bf16.msra.mxu0 %v1403
  %3064 = vmatpush.bf16.msra.mxu0 %v1391
  %3065 = vmatpush.bf16.msra.mxu0 %v1379
  %3066 = vmatmul.bf16.gmra.mxu0 %v2953
  %v3067 = vpop.f32.mrf.mxu0
  %v3068 = vadd.f32 %v3055, %v3067
  %v3069 = vpop.f32.mrf.mxu0
  %3070 = vdwg.mxu0
  %3071 = vmatpush.bf16.msra.mxu0 %v1272
  %3072 = vmatpush.bf16.msra.mxu0 %v1260
  %3073 = vmatpush.bf16.msra.mxu0 %v1248
  %3074 = vmatpush.bf16.msra.mxu0 %v1236
  %3075 = vmatpush.bf16.msra.mxu0 %v1224
  %3076 = vmatpush.bf16.msra.mxu0 %v1212
  %3077 = vmatpush.bf16.msra.mxu0 %v1200
  %3078 = vmatpush.bf16.msra.mxu0 %v1188
  %3079 = vmatmul.bf16.gmra.mxu0 %v2951
  %v3080 = vpop.f32.mrf.mxu0
  %v3081 = vadd.f32 0.0, %v3080
  %v3082 = vpop.f32.mrf.mxu0
  %3083 = vdwg.mxu0
  %3084 = vmatpush.bf16.msra.mxu0 %v1368
  %3085 = vmatpush.bf16.msra.mxu0 %v1356
  %3086 = vmatpush.bf16.msra.mxu0 %v1344
  %3087 = vmatpush.bf16.msra.mxu0 %v1332
  %3088 = vmatpush.bf16.msra.mxu0 %v1320
  %3089 = vmatpush.bf16.msra.mxu0 %v1308
  %3090 = vmatpush.bf16.msra.mxu0 %v1296
  %3091 = vmatpush.bf16.msra.mxu0 %v1284
  %3092 = vmatmul.bf16.gmra.mxu0 %v2952
  %v3093 = vpop.f32.mrf.mxu0
  %v3094 = vadd.f32 %v3081, %v3093
  %v3095 = vpop.f32.mrf.mxu0
  %3096 = vdwg.mxu0
  %3097 = vmatpush.bf16.msra.mxu0 %v1464
  %3098 = vmatpush.bf16.msra.mxu0 %v1452
  %3099 = vmatpush.bf16.msra.mxu0 %v1440
  %3100 = vmatpush.bf16.msra.mxu0 %v1428
  %3101 = vmatpush.bf16.msra.mxu0 %v1416
  %3102 = vmatpush.bf16.msra.mxu0 %v1404
  %3103 = vmatpush.bf16.msra.mxu0 %v1392
  %3104 = vmatpush.bf16.msra.mxu0 %v1380
  %3105 = vmatmul.bf16.gmra.mxu0 %v2953
  %v3106 = vpop.f32.mrf.mxu0
  %v3107 = vadd.f32 %v3094, %v3106
  %v3108 = vpop.f32.mrf.mxu0
  %3109 = vdwg.mxu0
  %3110 = vmatpush.bf16.msra.mxu0 %v1273
  %3111 = vmatpush.bf16.msra.mxu0 %v1261
  %3112 = vmatpush.bf16.msra.mxu0 %v1249
  %3113 = vmatpush.bf16.msra.mxu0 %v1237
  %3114 = vmatpush.bf16.msra.mxu0 %v1225
  %3115 = vmatpush.bf16.msra.mxu0 %v1213
  %3116 = vmatpush.bf16.msra.mxu0 %v1201
  %3117 = vmatpush.bf16.msra.mxu0 %v1189
  %3118 = vmatmul.bf16.gmra.mxu0 %v2951
  %v3119 = vpop.f32.mrf.mxu0
  %v3120 = vadd.f32 0.0, %v3119
  %v3121 = vpop.f32.mrf.mxu0
  %3122 = vdwg.mxu0
  %3123 = vmatpush.bf16.msra.mxu0 %v1369
  %3124 = vmatpush.bf16.msra.mxu0 %v1357
  %3125 = vmatpush.bf16.msra.mxu0 %v1345
  %3126 = vmatpush.bf16.msra.mxu0 %v1333
  %3127 = vmatpush.bf16.msra.mxu0 %v1321
  %3128 = vmatpush.bf16.msra.mxu0 %v1309
  %3129 = vmatpush.bf16.msra.mxu0 %v1297
  %3130 = vmatpush.bf16.msra.mxu0 %v1285
  %3131 = vmatmul.bf16.gmra.mxu0 %v2952
  %v3132 = vpop.f32.mrf.mxu0
  %v3133 = vadd.f32 %v3120, %v3132
  %v3134 = vpop.f32.mrf.mxu0
  %3135 = vdwg.mxu0
  %3136 = vmatpush.bf16.msra.mxu0 %v1465
  %3137 = vmatpush.bf16.msra.mxu0 %v1453
  %3138 = vmatpush.bf16.msra.mxu0 %v1441
  %3139 = vmatpush.bf16.msra.mxu0 %v1429
  %3140 = vmatpush.bf16.msra.mxu0 %v1417
  %3141 = vmatpush.bf16.msra.mxu0 %v1405
  %3142 = vmatpush.bf16.msra.mxu0 %v1393
  %3143 = vmatpush.bf16.msra.mxu0 %v1381
  %3144 = vmatmul.bf16.gmra.mxu0 %v2953
  %v3145 = vpop.f32.mrf.mxu0
  %v3146 = vadd.f32 %v3133, %v3145
  %v3147 = vpop.f32.mrf.mxu0
  %3148 = vdwg.mxu0
  %3149 = vmatpush.bf16.msra.mxu0 %v1274
  %3150 = vmatpush.bf16.msra.mxu0 %v1262
  %3151 = vmatpush.bf16.msra.mxu0 %v1250
  %3152 = vmatpush.bf16.msra.mxu0 %v1238
  %3153 = vmatpush.bf16.msra.mxu0 %v1226
  %3154 = vmatpush.bf16.msra.mxu0 %v1214
  %3155 = vmatpush.bf16.msra.mxu0 %v1202
  %3156 = vmatpush.bf16.msra.mxu0 %v1190
  %3157 = vmatmul.bf16.gmra.mxu0 %v2951
  %v3158 = vpop.f32.mrf.mxu0
  %v3159 = vadd.f32 0.0, %v3158
  %v3160 = vpop.f32.mrf.mxu0
  %3161 = vdwg.mxu0
  %3162 = vmatpush.bf16.msra.mxu0 %v1370
  %3163 = vmatpush.bf16.msra.mxu0 %v1358
  %3164 = vmatpush.bf16.msra.mxu0 %v1346
  %3165 = vmatpush.bf16.msra.mxu0 %v1334
  %3166 = vmatpush.bf16.msra.mxu0 %v1322
  %3167 = vmatpush.bf16.msra.mxu0 %v1310
  %3168 = vmatpush.bf16.msra.mxu0 %v1298
  %3169 = vmatpush.bf16.msra.mxu0 %v1286
  %3170 = vmatmul.bf16.gmra.mxu0 %v2952
  %v3171 = vpop.f32.mrf.mxu0
  %v3172 = vadd.f32 %v3159, %v3171
  %v3173 = vpop.f32.mrf.mxu0
  %3174 = vdwg.mxu0
  %3175 = vmatpush.bf16.msra.mxu0 %v1466
  %3176 = vmatpush.bf16.msra.mxu0 %v1454
  %3177 = vmatpush.bf16.msra.mxu0 %v1442
  %3178 = vmatpush.bf16.msra.mxu0 %v1430
  %3179 = vmatpush.bf16.msra.mxu0 %v1418
  %3180 = vmatpush.bf16.msra.mxu0 %v1406
  %3181 = vmatpush.bf16.msra.mxu0 %v1394
  %3182 = vmatpush.bf16.msra.mxu0 %v1382
  %3183 = vmatmul.bf16.gmra.mxu0 %v2953
  %v3184 = vpop.f32.mrf.mxu0
  %v3185 = vadd.f32 %v3172, %v3184
  %v3186 = vpop.f32.mrf.mxu0
  %3187 = vdwg.mxu0
  %3188 = vmatpush.bf16.msra.mxu0 %v1275
  %3189 = vmatpush.bf16.msra.mxu0 %v1263
  %3190 = vmatpush.bf16.msra.mxu0 %v1251
  %3191 = vmatpush.bf16.msra.mxu0 %v1239
  %3192 = vmatpush.bf16.msra.mxu0 %v1227
  %3193 = vmatpush.bf16.msra.mxu0 %v1215
  %3194 = vmatpush.bf16.msra.mxu0 %v1203
  %3195 = vmatpush.bf16.msra.mxu0 %v1191
  %3196 = vmatmul.bf16.gmra.mxu0 %v2951
  %v3197 = vpop.f32.mrf.mxu0
  %v3198 = vadd.f32 0.0, %v3197
  %v3199 = vpop.f32.mrf.mxu0
  %3200 = vdwg.mxu0
  %3201 = vmatpush.bf16.msra.mxu0 %v1371
  %3202 = vmatpush.bf16.msra.mxu0 %v1359
  %3203 = vmatpush.bf16.msra.mxu0 %v1347
  %3204 = vmatpush.bf16.msra.mxu0 %v1335
  %3205 = vmatpush.bf16.msra.mxu0 %v1323
  %3206 = vmatpush.bf16.msra.mxu0 %v1311
  %3207 = vmatpush.bf16.msra.mxu0 %v1299
  %3208 = vmatpush.bf16.msra.mxu0 %v1287
  %3209 = vmatmul.bf16.gmra.mxu0 %v2952
  %v3210 = vpop.f32.mrf.mxu0
  %v3211 = vadd.f32 %v3198, %v3210
  %v3212 = vpop.f32.mrf.mxu0
  %3213 = vdwg.mxu0
  %3214 = vmatpush.bf16.msra.mxu0 %v1467
  %3215 = vmatpush.bf16.msra.mxu0 %v1455
  %3216 = vmatpush.bf16.msra.mxu0 %v1443
  %3217 = vmatpush.bf16.msra.mxu0 %v1431
  %3218 = vmatpush.bf16.msra.mxu0 %v1419
  %3219 = vmatpush.bf16.msra.mxu0 %v1407
  %3220 = vmatpush.bf16.msra.mxu0 %v1395
  %3221 = vmatpush.bf16.msra.mxu0 %v1383
  %3222 = vmatmul.bf16.gmra.mxu0 %v2953
  %v3223 = vpop.f32.mrf.mxu0
  %v3224 = vadd.f32 %v3211, %v3223
  %v3225 = vpop.f32.mrf.mxu0
  %3226 = vdwg.mxu0
  %3227 = vmatpush.bf16.msra.mxu0 %v1276
  %3228 = vmatpush.bf16.msra.mxu0 %v1264
  %3229 = vmatpush.bf16.msra.mxu0 %v1252
  %3230 = vmatpush.bf16.msra.mxu0 %v1240
  %3231 = vmatpush.bf16.msra.mxu0 %v1228
  %3232 = vmatpush.bf16.msra.mxu0 %v1216
  %3233 = vmatpush.bf16.msra.mxu0 %v1204
  %3234 = vmatpush.bf16.msra.mxu0 %v1192
  %3235 = vmatmul.bf16.gmra.mxu0 %v2951
  %v3236 = vpop.f32.mrf.mxu0
  %v3237 = vadd.f32 0.0, %v3236
  %v3238 = vpop.f32.mrf.mxu0
  %3239 = vdwg.mxu0
  %3240 = vmatpush.bf16.msra.mxu0 %v1372
  %3241 = vmatpush.bf16.msra.mxu0 %v1360
  %3242 = vmatpush.bf16.msra.mxu0 %v1348
  %3243 = vmatpush.bf16.msra.mxu0 %v1336
  %3244 = vmatpush.bf16.msra.mxu0 %v1324
  %3245 = vmatpush.bf16.msra.mxu0 %v1312
  %3246 = vmatpush.bf16.msra.mxu0 %v1300
  %3247 = vmatpush.bf16.msra.mxu0 %v1288
  %3248 = vmatmul.bf16.gmra.mxu0 %v2952
  %v3249 = vpop.f32.mrf.mxu0
  %v3250 = vadd.f32 %v3237, %v3249
  %v3251 = vpop.f32.mrf.mxu0
  %3252 = vdwg.mxu0
  %3253 = vmatpush.bf16.msra.mxu0 %v1468
  %3254 = vmatpush.bf16.msra.mxu0 %v1456
  %3255 = vmatpush.bf16.msra.mxu0 %v1444
  %3256 = vmatpush.bf16.msra.mxu0 %v1432
  %3257 = vmatpush.bf16.msra.mxu0 %v1420
  %3258 = vmatpush.bf16.msra.mxu0 %v1408
  %3259 = vmatpush.bf16.msra.mxu0 %v1396
  %3260 = vmatpush.bf16.msra.mxu0 %v1384
  %3261 = vmatmul.bf16.gmra.mxu0 %v2953
  %v3262 = vpop.f32.mrf.mxu0
  %v3263 = vadd.f32 %v3250, %v3262
  %v3264 = vpop.f32.mrf.mxu0
  %3265 = vdwg.mxu0
  %3266 = vmatpush.bf16.msra.mxu0 %v1277
  %3267 = vmatpush.bf16.msra.mxu0 %v1265
  %3268 = vmatpush.bf16.msra.mxu0 %v1253
  %3269 = vmatpush.bf16.msra.mxu0 %v1241
  %3270 = vmatpush.bf16.msra.mxu0 %v1229
  %3271 = vmatpush.bf16.msra.mxu0 %v1217
  %3272 = vmatpush.bf16.msra.mxu0 %v1205
  %3273 = vmatpush.bf16.msra.mxu0 %v1193
  %3274 = vmatmul.bf16.gmra.mxu0 %v2951
  %v3275 = vpop.f32.mrf.mxu0
  %v3276 = vadd.f32 0.0, %v3275
  %v3277 = vpop.f32.mrf.mxu0
  %3278 = vdwg.mxu0
  %3279 = vmatpush.bf16.msra.mxu0 %v1373
  %3280 = vmatpush.bf16.msra.mxu0 %v1361
  %3281 = vmatpush.bf16.msra.mxu0 %v1349
  %3282 = vmatpush.bf16.msra.mxu0 %v1337
  %3283 = vmatpush.bf16.msra.mxu0 %v1325
  %3284 = vmatpush.bf16.msra.mxu0 %v1313
  %3285 = vmatpush.bf16.msra.mxu0 %v1301
  %3286 = vmatpush.bf16.msra.mxu0 %v1289
  %3287 = vmatmul.bf16.gmra.mxu0 %v2952
  %v3288 = vpop.f32.mrf.mxu0
  %v3289 = vadd.f32 %v3276, %v3288
  %v3290 = vpop.f32.mrf.mxu0
  %3291 = vdwg.mxu0
  %3292 = vmatpush.bf16.msra.mxu0 %v1469
  %3293 = vmatpush.bf16.msra.mxu0 %v1457
  %3294 = vmatpush.bf16.msra.mxu0 %v1445
  %3295 = vmatpush.bf16.msra.mxu0 %v1433
  %3296 = vmatpush.bf16.msra.mxu0 %v1421
  %3297 = vmatpush.bf16.msra.mxu0 %v1409
  %3298 = vmatpush.bf16.msra.mxu0 %v1397
  %3299 = vmatpush.bf16.msra.mxu0 %v1385
  %3300 = vmatmul.bf16.gmra.mxu0 %v2953
  %v3301 = vpop.f32.mrf.mxu0
  %v3302 = vadd.f32 %v3289, %v3301
  %v3303 = vpop.f32.mrf.mxu0
  %3304 = vdwg.mxu0
  %3305 = vmatpush.bf16.msra.mxu0 %v1278
  %3306 = vmatpush.bf16.msra.mxu0 %v1266
  %3307 = vmatpush.bf16.msra.mxu0 %v1254
  %3308 = vmatpush.bf16.msra.mxu0 %v1242
  %3309 = vmatpush.bf16.msra.mxu0 %v1230
  %3310 = vmatpush.bf16.msra.mxu0 %v1218
  %3311 = vmatpush.bf16.msra.mxu0 %v1206
  %3312 = vmatpush.bf16.msra.mxu0 %v1194
  %3313 = vmatmul.bf16.gmra.mxu0 %v2951
  %v3314 = vpop.f32.mrf.mxu0
  %v3315 = vadd.f32 0.0, %v3314
  %v3316 = vpop.f32.mrf.mxu0
  %3317 = vdwg.mxu0
  %3318 = vmatpush.bf16.msra.mxu0 %v1374
  %3319 = vmatpush.bf16.msra.mxu0 %v1362
  %3320 = vmatpush.bf16.msra.mxu0 %v1350
  %3321 = vmatpush.bf16.msra.mxu0 %v1338
  %3322 = vmatpush.bf16.msra.mxu0 %v1326
  %3323 = vmatpush.bf16.msra.mxu0 %v1314
  %3324 = vmatpush.bf16.msra.mxu0 %v1302
  %3325 = vmatpush.bf16.msra.mxu0 %v1290
  %3326 = vmatmul.bf16.gmra.mxu0 %v2952
  %v3327 = vpop.f32.mrf.mxu0
  %v3328 = vadd.f32 %v3315, %v3327
  %v3329 = vpop.f32.mrf.mxu0
  %3330 = vdwg.mxu0
  %3331 = vmatpush.bf16.msra.mxu0 %v1470
  %3332 = vmatpush.bf16.msra.mxu0 %v1458
  %3333 = vmatpush.bf16.msra.mxu0 %v1446
  %3334 = vmatpush.bf16.msra.mxu0 %v1434
  %3335 = vmatpush.bf16.msra.mxu0 %v1422
  %3336 = vmatpush.bf16.msra.mxu0 %v1410
  %3337 = vmatpush.bf16.msra.mxu0 %v1398
  %3338 = vmatpush.bf16.msra.mxu0 %v1386
  %3339 = vmatmul.bf16.gmra.mxu0 %v2953
  %v3340 = vpop.f32.mrf.mxu0
  %v3341 = vadd.f32 %v3328, %v3340
  %v3342 = vpop.f32.mrf.mxu0
  %3343 = vdwg.mxu0
  %3344 = vmatpush.bf16.msra.mxu0 %v1279
  %3345 = vmatpush.bf16.msra.mxu0 %v1267
  %3346 = vmatpush.bf16.msra.mxu0 %v1255
  %3347 = vmatpush.bf16.msra.mxu0 %v1243
  %3348 = vmatpush.bf16.msra.mxu0 %v1231
  %3349 = vmatpush.bf16.msra.mxu0 %v1219
  %3350 = vmatpush.bf16.msra.mxu0 %v1207
  %3351 = vmatpush.bf16.msra.mxu0 %v1195
  %3352 = vmatmul.bf16.gmra.mxu0 %v2951
  %v3353 = vpop.f32.mrf.mxu0
  %v3354 = vadd.f32 0.0, %v3353
  %v3355 = vpop.f32.mrf.mxu0
  %3356 = vdwg.mxu0
  %3357 = vmatpush.bf16.msra.mxu0 %v1375
  %3358 = vmatpush.bf16.msra.mxu0 %v1363
  %3359 = vmatpush.bf16.msra.mxu0 %v1351
  %3360 = vmatpush.bf16.msra.mxu0 %v1339
  %3361 = vmatpush.bf16.msra.mxu0 %v1327
  %3362 = vmatpush.bf16.msra.mxu0 %v1315
  %3363 = vmatpush.bf16.msra.mxu0 %v1303
  %3364 = vmatpush.bf16.msra.mxu0 %v1291
  %3365 = vmatmul.bf16.gmra.mxu0 %v2952
  %v3366 = vpop.f32.mrf.mxu0
  %v3367 = vadd.f32 %v3354, %v3366
  %v3368 = vpop.f32.mrf.mxu0
  %3369 = vdwg.mxu0
  %3370 = vmatpush.bf16.msra.mxu0 %v1471
  %3371 = vmatpush.bf16.msra.mxu0 %v1459
  %3372 = vmatpush.bf16.msra.mxu0 %v1447
  %3373 = vmatpush.bf16.msra.mxu0 %v1435
  %3374 = vmatpush.bf16.msra.mxu0 %v1423
  %3375 = vmatpush.bf16.msra.mxu0 %v1411
  %3376 = vmatpush.bf16.msra.mxu0 %v1399
  %3377 = vmatpush.bf16.msra.mxu0 %v1387
  %3378 = vmatmul.bf16.gmra.mxu0 %v2953
  %v3379 = vpop.f32.mrf.mxu0
  %v3380 = vadd.f32 %v3367, %v3379
  %v3381 = vpop.f32.mrf.mxu0
  %3382 = vdwg.mxu0
  %3383 = vmatpush.bf16.msra.mxu0 %v1280
  %3384 = vmatpush.bf16.msra.mxu0 %v1268
  %3385 = vmatpush.bf16.msra.mxu0 %v1256
  %3386 = vmatpush.bf16.msra.mxu0 %v1244
  %3387 = vmatpush.bf16.msra.mxu0 %v1232
  %3388 = vmatpush.bf16.msra.mxu0 %v1220
  %3389 = vmatpush.bf16.msra.mxu0 %v1208
  %3390 = vmatpush.bf16.msra.mxu0 %v1196
  %3391 = vmatmul.bf16.gmra.mxu0 %v2951
  %v3392 = vpop.f32.mrf.mxu0
  %v3393 = vadd.f32 0.0, %v3392
  %v3394 = vpop.f32.mrf.mxu0
  %3395 = vdwg.mxu0
  %3396 = vmatpush.bf16.msra.mxu0 %v1376
  %3397 = vmatpush.bf16.msra.mxu0 %v1364
  %3398 = vmatpush.bf16.msra.mxu0 %v1352
  %3399 = vmatpush.bf16.msra.mxu0 %v1340
  %3400 = vmatpush.bf16.msra.mxu0 %v1328
  %3401 = vmatpush.bf16.msra.mxu0 %v1316
  %3402 = vmatpush.bf16.msra.mxu0 %v1304
  %3403 = vmatpush.bf16.msra.mxu0 %v1292
  %3404 = vmatmul.bf16.gmra.mxu0 %v2952
  %v3405 = vpop.f32.mrf.mxu0
  %v3406 = vadd.f32 %v3393, %v3405
  %v3407 = vpop.f32.mrf.mxu0
  %3408 = vdwg.mxu0
  %3409 = vmatpush.bf16.msra.mxu0 %v1472
  %3410 = vmatpush.bf16.msra.mxu0 %v1460
  %3411 = vmatpush.bf16.msra.mxu0 %v1448
  %3412 = vmatpush.bf16.msra.mxu0 %v1436
  %3413 = vmatpush.bf16.msra.mxu0 %v1424
  %3414 = vmatpush.bf16.msra.mxu0 %v1412
  %3415 = vmatpush.bf16.msra.mxu0 %v1400
  %3416 = vmatpush.bf16.msra.mxu0 %v1388
  %3417 = vmatmul.bf16.gmra.mxu0 %v2953
  %v3418 = vpop.f32.mrf.mxu0
  %v3419 = vadd.f32 %v3406, %v3418
  %v3420 = vpop.f32.mrf.mxu0
  %3421 = vdwg.mxu0
  %v3434 = vrot.slane %v3029, 6
  %v3435 = vrot.slane %v3068, 4
  %v3436 = vrot.slane %v3107, 2
  %v3437 = vrot.slane %v3185, 6
  %v3438 = vrot.slane %v3224, 4
  %v3439 = vrot.slane %v3263, 2
  %v3440 = vrot.slane %v3341, 6
  %v3441 = vrot.slane %v3380, 4
  %v3442 = vrot.slane %v3419, 2
  %v3443 = vsel %vm2250, %v2990, %v3434
  %v3444 = vsel %vm2252, %v3435, %v3436
  %v3445 = vsel %vm2254, %v3443, %v3444
  %v3446 = vsel %vm2250, %v3146, %v3437
  %v3447 = vsel %vm2252, %v3438, %v3439
  %v3448 = vsel %vm2254, %v3446, %v3447
  %v3449 = vsel %vm2250, %v3302, %v3440
  %v3450 = vsel %vm2252, %v3441, %v3442
  %v3451 = vsel %vm2254, %v3449, %v3450
  %v3455 = vadd.f32 %v2940, %v3445
  %v3456 = vadd.f32 %v2941, %v3448
  %v3457 = vadd.f32 %v2942, %v3451
  %v3458 = vxor.u32 %v3455, 2147483648
  %v3459 = vmul.f32 %v3458, 1.442695
  %v3460 = vpow.pop %v3459
  %v3461 = vadd.f32 %v3460, 1.0
  %v3462 = vrcp.pop %v3461
  %v3463 = vmul.f32 %v3461, %v3462
  %v3464 = vsub.f32 1.0, %v3463
  %v3465 = vmul.f32 %v3462, %v3464
  %v3466 = vadd.f32 %v3462, %v3465
  %vm3467 = vweird.f32 %v3461
  %vm3468 = vweird.f32 %v3462
  %vm3469 = vmor %vm3467, %vm3468
  %v3470 = vsel %vm3469, %v3462, %v3466
  %v3471 = vand.u32 2147483647, %v3461
  %vm3472 = vcmp.eq.f32.partialorder %v3471, 8.507059e+37
  %v3473 = vand.u32 %v3461, 2147483648
  %v3474 = vor.u32 1.1754944e-38, %v3473
  %v3475 = vsel %vm3472, %v3474, %v3470
  %v3476 = vmul.f32 1.0, %v3475
  %v3479 = vrot.slane %v3455, 6
  %v3480 = vrot.slane %v3456, 6
  %v3481 = vsel %vm2250, %v3479, %v3480
  %v3483 = vxor.u32 %v3481, 2147483648
  %v3484 = vmul.f32 %v3483, 1.442695
  %v3485 = vpow.pop %v3484
  %v3486 = vadd.f32 %v3485, 1.0
  %v3487 = vrcp.pop %v3486
  %v3488 = vmul.f32 %v3486, %v3487
  %v3489 = vsub.f32 1.0, %v3488
  %v3490 = vmul.f32 %v3487, %v3489
  %v3491 = vadd.f32 %v3487, %v3490
  %vm3492 = vweird.f32 %v3486
  %vm3493 = vweird.f32 %v3487
  %vm3494 = vmor %vm3492, %vm3493
  %v3495 = vsel %vm3494, %v3487, %v3491
  %v3496 = vand.u32 2147483647, %v3486
  %vm3497 = vcmp.eq.f32.partialorder %v3496, 8.507059e+37
  %v3498 = vand.u32 %v3486, 2147483648
  %v3499 = vor.u32 1.1754944e-38, %v3498
  %v3500 = vsel %vm3497, %v3499, %v3495
  %v3501 = vmul.f32 1.0, %v3500
  %v3503 = vrot.slane %v3456, 4
  %v3504 = vrot.slane %v3457, 4
  %v3505 = vsel %vm2254, %v3503, %v3504
  %v3507 = vtanh.pop %v3505
  %v3508 = vrot.slane %v3457, 2
  %v3510 = vxor.u32 %v3508, 2147483648
  %v3511 = vmul.f32 %v3510, 1.442695
  %v3512 = vpow.pop %v3511
  %v3513 = vadd.f32 %v3512, 1.0
  %v3514 = vrcp.pop %v3513
  %v3515 = vmul.f32 %v3513, %v3514
  %v3516 = vsub.f32 1.0, %v3515
  %v3517 = vmul.f32 %v3514, %v3516
  %v3518 = vadd.f32 %v3514, %v3517
  %vm3519 = vweird.f32 %v3513
  %vm3520 = vweird.f32 %v3514
  %vm3521 = vmor %vm3519, %vm3520
  %v3522 = vsel %vm3521, %v3514, %v3518
  %v3523 = vand.u32 2147483647, %v3513
  %vm3524 = vcmp.eq.f32.partialorder %v3523, 8.507059e+37
  %v3525 = vand.u32 %v3513, 2147483648
  %v3526 = vor.u32 1.1754944e-38, %v3525
  %v3527 = vsel %vm3524, %v3526, %v3522
  %v3528 = vmul.f32 1.0, %v3527
  %v3529 = vmul.f32 %v3501, %v2936
  %v3530 = vmul.f32 %v3476, %v3507
  %v3531 = vadd.f32 %v3529, %v3530
  %v3532 = vtanh.pop %v3531
  %v3533 = vmul.f32 %v3528, %v3532
  %s3534 = scalar_lea.vmem %s0, 72
  %v3535 = vld [vmem:[%s3534] sm:$0xff]
  %v3536 = vld [vmem:[%s3534 + $0x8] sm:$0xff]
  %v3537 = vld [vmem:[%s3534 + $0x10] sm:$0xff]
  %3539 = vst [vmem:[#allocation1] ss:$4 sm:$0xff] %v3533
  %v3540 = vld.sshfl [vmem:[#allocation1] sm:$0xff pattern:$0x73625140]
  %v3541 = vld.sshfl [vmem:[#allocation1 + $0x8] sm:$0xff pattern:$0x73625140]
  %v3542 = vld.sshfl [vmem:[#allocation1 + $0x10] sm:$0xff pattern:$0x73625140]
  %v3546 = vpack.c.bf16 %v3540, %v3540
  %v3547 = vpack.c.bf16 %v3541, %v3541
  %v3548 = vpack.c.bf16 %v3542, %v3542
  %3549 = vmatpush.bf16.msra.mxu0 %v1269
  %3550 = vmatpush.bf16.msra.mxu0 %v1257
  %3551 = vmatpush.bf16.msra.mxu0 %v1245
  %3552 = vmatpush.bf16.msra.mxu0 %v1233
  %3553 = vmatpush.bf16.msra.mxu0 %v1221
  %3554 = vmatpush.bf16.msra.mxu0 %v1209
  %3555 = vmatpush.bf16.msra.mxu0 %v1197
  %3556 = vmatpush.bf16.msra.mxu0 %v1185
  %3557 = vmatmul.bf16.gmra.mxu0 %v3546
  %v3558 = vpop.f32.mrf.mxu0
  %v3559 = vadd.f32 0.0, %v3558
  %v3560 = vpop.f32.mrf.mxu0
  %3561 = vdwg.mxu0
  %3562 = vmatpush.bf16.msra.mxu0 %v1365
  %3563 = vmatpush.bf16.msra.mxu0 %v1353
  %3564 = vmatpush.bf16.msra.mxu0 %v1341
  %3565 = vmatpush.bf16.msra.mxu0 %v1329
  %3566 = vmatpush.bf16.msra.mxu0 %v1317
  %3567 = vmatpush.bf16.msra.mxu0 %v1305
  %3568 = vmatpush.bf16.msra.mxu0 %v1293
  %3569 = vmatpush.bf16.msra.mxu0 %v1281
  %3570 = vmatmul.bf16.gmra.mxu0 %v3547
  %v3571 = vpop.f32.mrf.mxu0
  %v3572 = vadd.f32 %v3559, %v3571
  %v3573 = vpop.f32.mrf.mxu0
  %3574 = vdwg.mxu0
  %3575 = vmatpush.bf16.msra.mxu0 %v1461
  %3576 = vmatpush.bf16.msra.mxu0 %v1449
  %3577 = vmatpush.bf16.msra.mxu0 %v1437
  %3578 = vmatpush.bf16.msra.mxu0 %v1425
  %3579 = vmatpush.bf16.msra.mxu0 %v1413
  %3580 = vmatpush.bf16.msra.mxu0 %v1401
  %3581 = vmatpush.bf16.msra.mxu0 %v1389
  %3582 = vmatpush.bf16.msra.mxu0 %v1377
  %3583 = vmatmul.bf16.gmra.mxu0 %v3548
  %v3584 = vpop.f32.mrf.mxu0
  %v3585 = vadd.f32 %v3572, %v3584
  %v3586 = vpop.f32.mrf.mxu0
  %3587 = vdwg.mxu0
  %3588 = vmatpush.bf16.msra.mxu0 %v1270
  %3589 = vmatpush.bf16.msra.mxu0 %v1258
  %3590 = vmatpush.bf16.msra.mxu0 %v1246
  %3591 = vmatpush.bf16.msra.mxu0 %v1234
  %3592 = vmatpush.bf16.msra.mxu0 %v1222
  %3593 = vmatpush.bf16.msra.mxu0 %v1210
  %3594 = vmatpush.bf16.msra.mxu0 %v1198
  %3595 = vmatpush.bf16.msra.mxu0 %v1186
  %3596 = vmatmul.bf16.gmra.mxu0 %v3546
  %v3597 = vpop.f32.mrf.mxu0
  %v3598 = vadd.f32 0.0, %v3597
  %v3599 = vpop.f32.mrf.mxu0
  %3600 = vdwg.mxu0
  %3601 = vmatpush.bf16.msra.mxu0 %v1366
  %3602 = vmatpush.bf16.msra.mxu0 %v1354
  %3603 = vmatpush.bf16.msra.mxu0 %v1342
  %3604 = vmatpush.bf16.msra.mxu0 %v1330
  %3605 = vmatpush.bf16.msra.mxu0 %v1318
  %3606 = vmatpush.bf16.msra.mxu0 %v1306
  %3607 = vmatpush.bf16.msra.mxu0 %v1294
  %3608 = vmatpush.bf16.msra.mxu0 %v1282
  %3609 = vmatmul.bf16.gmra.mxu0 %v3547
  %v3610 = vpop.f32.mrf.mxu0
  %v3611 = vadd.f32 %v3598, %v3610
  %v3612 = vpop.f32.mrf.mxu0
  %3613 = vdwg.mxu0
  %3614 = vmatpush.bf16.msra.mxu0 %v1462
  %3615 = vmatpush.bf16.msra.mxu0 %v1450
  %3616 = vmatpush.bf16.msra.mxu0 %v1438
  %3617 = vmatpush.bf16.msra.mxu0 %v1426
  %3618 = vmatpush.bf16.msra.mxu0 %v1414
  %3619 = vmatpush.bf16.msra.mxu0 %v1402
  %3620 = vmatpush.bf16.msra.mxu0 %v1390
  %3621 = vmatpush.bf16.msra.mxu0 %v1378
  %3622 = vmatmul.bf16.gmra.mxu0 %v3548
  %v3623 = vpop.f32.mrf.mxu0
  %v3624 = vadd.f32 %v3611, %v3623
  %v3625 = vpop.f32.mrf.mxu0
  %3626 = vdwg.mxu0
  %3627 = vmatpush.bf16.msra.mxu0 %v1271
  %3628 = vmatpush.bf16.msra.mxu0 %v1259
  %3629 = vmatpush.bf16.msra.mxu0 %v1247
  %3630 = vmatpush.bf16.msra.mxu0 %v1235
  %3631 = vmatpush.bf16.msra.mxu0 %v1223
  %3632 = vmatpush.bf16.msra.mxu0 %v1211
  %3633 = vmatpush.bf16.msra.mxu0 %v1199
  %3634 = vmatpush.bf16.msra.mxu0 %v1187
  %3635 = vmatmul.bf16.gmra.mxu0 %v3546
  %v3636 = vpop.f32.mrf.mxu0
  %v3637 = vadd.f32 0.0, %v3636
  %v3638 = vpop.f32.mrf.mxu0
  %3639 = vdwg.mxu0
  %3640 = vmatpush.bf16.msra.mxu0 %v1367
  %3641 = vmatpush.bf16.msra.mxu0 %v1355
  %3642 = vmatpush.bf16.msra.mxu0 %v1343
  %3643 = vmatpush.bf16.msra.mxu0 %v1331
  %3644 = vmatpush.bf16.msra.mxu0 %v1319
  %3645 = vmatpush.bf16.msra.mxu0 %v1307
  %3646 = vmatpush.bf16.msra.mxu0 %v1295
  %3647 = vmatpush.bf16.msra.mxu0 %v1283
  %3648 = vmatmul.bf16.gmra.mxu0 %v3547
  %v3649 = vpop.f32.mrf.mxu0
  %v3650 = vadd.f32 %v3637, %v3649
  %v3651 = vpop.f32.mrf.mxu0
  %3652 = vdwg.mxu0
  %3653 = vmatpush.bf16.msra.mxu0 %v1463
  %3654 = vmatpush.bf16.msra.mxu0 %v1451
  %3655 = vmatpush.bf16.msra.mxu0 %v1439
  %3656 = vmatpush.bf16.msra.mxu0 %v1427
  %3657 = vmatpush.bf16.msra.mxu0 %v1415
  %3658 = vmatpush.bf16.msra.mxu0 %v1403
  %3659 = vmatpush.bf16.msra.mxu0 %v1391
  %3660 = vmatpush.bf16.msra.mxu0 %v1379
  %3661 = vmatmul.bf16.gmra.mxu0 %v3548
  %v3662 = vpop.f32.mrf.mxu0
  %v3663 = vadd.f32 %v3650, %v3662
  %v3664 = vpop.f32.mrf.mxu0
  %3665 = vdwg.mxu0
  %3666 = vmatpush.bf16.msra.mxu0 %v1272
  %3667 = vmatpush.bf16.msra.mxu0 %v1260
  %3668 = vmatpush.bf16.msra.mxu0 %v1248
  %3669 = vmatpush.bf16.msra.mxu0 %v1236
  %3670 = vmatpush.bf16.msra.mxu0 %v1224
  %3671 = vmatpush.bf16.msra.mxu0 %v1212
  %3672 = vmatpush.bf16.msra.mxu0 %v1200
  %3673 = vmatpush.bf16.msra.mxu0 %v1188
  %3674 = vmatmul.bf16.gmra.mxu0 %v3546
  %v3675 = vpop.f32.mrf.mxu0
  %v3676 = vadd.f32 0.0, %v3675
  %v3677 = vpop.f32.mrf.mxu0
  %3678 = vdwg.mxu0
  %3679 = vmatpush.bf16.msra.mxu0 %v1368
  %3680 = vmatpush.bf16.msra.mxu0 %v1356
  %3681 = vmatpush.bf16.msra.mxu0 %v1344
  %3682 = vmatpush.bf16.msra.mxu0 %v1332
  %3683 = vmatpush.bf16.msra.mxu0 %v1320
  %3684 = vmatpush.bf16.msra.mxu0 %v1308
  %3685 = vmatpush.bf16.msra.mxu0 %v1296
  %3686 = vmatpush.bf16.msra.mxu0 %v1284
  %3687 = vmatmul.bf16.gmra.mxu0 %v3547
  %v3688 = vpop.f32.mrf.mxu0
  %v3689 = vadd.f32 %v3676, %v3688
  %v3690 = vpop.f32.mrf.mxu0
  %3691 = vdwg.mxu0
  %3692 = vmatpush.bf16.msra.mxu0 %v1464
  %3693 = vmatpush.bf16.msra.mxu0 %v1452
  %3694 = vmatpush.bf16.msra.mxu0 %v1440
  %3695 = vmatpush.bf16.msra.mxu0 %v1428
  %3696 = vmatpush.bf16.msra.mxu0 %v1416
  %3697 = vmatpush.bf16.msra.mxu0 %v1404
  %3698 = vmatpush.bf16.msra.mxu0 %v1392
  %3699 = vmatpush.bf16.msra.mxu0 %v1380
  %3700 = vmatmul.bf16.gmra.mxu0 %v3548
  %v3701 = vpop.f32.mrf.mxu0
  %v3702 = vadd.f32 %v3689, %v3701
  %v3703 = vpop.f32.mrf.mxu0
  %3704 = vdwg.mxu0
  %3705 = vmatpush.bf16.msra.mxu0 %v1273
  %3706 = vmatpush.bf16.msra.mxu0 %v1261
  %3707 = vmatpush.bf16.msra.mxu0 %v1249
  %3708 = vmatpush.bf16.msra.mxu0 %v1237
  %3709 = vmatpush.bf16.msra.mxu0 %v1225
  %3710 = vmatpush.bf16.msra.mxu0 %v1213
  %3711 = vmatpush.bf16.msra.mxu0 %v1201
  %3712 = vmatpush.bf16.msra.mxu0 %v1189
  %3713 = vmatmul.bf16.gmra.mxu0 %v3546
  %v3714 = vpop.f32.mrf.mxu0
  %v3715 = vadd.f32 0.0, %v3714
  %v3716 = vpop.f32.mrf.mxu0
  %3717 = vdwg.mxu0
  %3718 = vmatpush.bf16.msra.mxu0 %v1369
  %3719 = vmatpush.bf16.msra.mxu0 %v1357
  %3720 = vmatpush.bf16.msra.mxu0 %v1345
  %3721 = vmatpush.bf16.msra.mxu0 %v1333
  %3722 = vmatpush.bf16.msra.mxu0 %v1321
  %3723 = vmatpush.bf16.msra.mxu0 %v1309
  %3724 = vmatpush.bf16.msra.mxu0 %v1297
  %3725 = vmatpush.bf16.msra.mxu0 %v1285
  %3726 = vmatmul.bf16.gmra.mxu0 %v3547
  %v3727 = vpop.f32.mrf.mxu0
  %v3728 = vadd.f32 %v3715, %v3727
  %v3729 = vpop.f32.mrf.mxu0
  %3730 = vdwg.mxu0
  %3731 = vmatpush.bf16.msra.mxu0 %v1465
  %3732 = vmatpush.bf16.msra.mxu0 %v1453
  %3733 = vmatpush.bf16.msra.mxu0 %v1441
  %3734 = vmatpush.bf16.msra.mxu0 %v1429
  %3735 = vmatpush.bf16.msra.mxu0 %v1417
  %3736 = vmatpush.bf16.msra.mxu0 %v1405
  %3737 = vmatpush.bf16.msra.mxu0 %v1393
  %3738 = vmatpush.bf16.msra.mxu0 %v1381
  %3739 = vmatmul.bf16.gmra.mxu0 %v3548
  %v3740 = vpop.f32.mrf.mxu0
  %v3741 = vadd.f32 %v3728, %v3740
  %v3742 = vpop.f32.mrf.mxu0
  %3743 = vdwg.mxu0
  %3744 = vmatpush.bf16.msra.mxu0 %v1274
  %3745 = vmatpush.bf16.msra.mxu0 %v1262
  %3746 = vmatpush.bf16.msra.mxu0 %v1250
  %3747 = vmatpush.bf16.msra.mxu0 %v1238
  %3748 = vmatpush.bf16.msra.mxu0 %v1226
  %3749 = vmatpush.bf16.msra.mxu0 %v1214
  %3750 = vmatpush.bf16.msra.mxu0 %v1202
  %3751 = vmatpush.bf16.msra.mxu0 %v1190
  %3752 = vmatmul.bf16.gmra.mxu0 %v3546
  %v3753 = vpop.f32.mrf.mxu0
  %v3754 = vadd.f32 0.0, %v3753
  %v3755 = vpop.f32.mrf.mxu0
  %3756 = vdwg.mxu0
  %3757 = vmatpush.bf16.msra.mxu0 %v1370
  %3758 = vmatpush.bf16.msra.mxu0 %v1358
  %3759 = vmatpush.bf16.msra.mxu0 %v1346
  %3760 = vmatpush.bf16.msra.mxu0 %v1334
  %3761 = vmatpush.bf16.msra.mxu0 %v1322
  %3762 = vmatpush.bf16.msra.mxu0 %v1310
  %3763 = vmatpush.bf16.msra.mxu0 %v1298
  %3764 = vmatpush.bf16.msra.mxu0 %v1286
  %3765 = vmatmul.bf16.gmra.mxu0 %v3547
  %v3766 = vpop.f32.mrf.mxu0
  %v3767 = vadd.f32 %v3754, %v3766
  %v3768 = vpop.f32.mrf.mxu0
  %3769 = vdwg.mxu0
  %3770 = vmatpush.bf16.msra.mxu0 %v1466
  %3771 = vmatpush.bf16.msra.mxu0 %v1454
  %3772 = vmatpush.bf16.msra.mxu0 %v1442
  %3773 = vmatpush.bf16.msra.mxu0 %v1430
  %3774 = vmatpush.bf16.msra.mxu0 %v1418
  %3775 = vmatpush.bf16.msra.mxu0 %v1406
  %3776 = vmatpush.bf16.msra.mxu0 %v1394
  %3777 = vmatpush.bf16.msra.mxu0 %v1382
  %3778 = vmatmul.bf16.gmra.mxu0 %v3548
  %v3779 = vpop.f32.mrf.mxu0
  %v3780 = vadd.f32 %v3767, %v3779
  %v3781 = vpop.f32.mrf.mxu0
  %3782 = vdwg.mxu0
  %3783 = vmatpush.bf16.msra.mxu0 %v1275
  %3784 = vmatpush.bf16.msra.mxu0 %v1263
  %3785 = vmatpush.bf16.msra.mxu0 %v1251
  %3786 = vmatpush.bf16.msra.mxu0 %v1239
  %3787 = vmatpush.bf16.msra.mxu0 %v1227
  %3788 = vmatpush.bf16.msra.mxu0 %v1215
  %3789 = vmatpush.bf16.msra.mxu0 %v1203
  %3790 = vmatpush.bf16.msra.mxu0 %v1191
  %3791 = vmatmul.bf16.gmra.mxu0 %v3546
  %v3792 = vpop.f32.mrf.mxu0
  %v3793 = vadd.f32 0.0, %v3792
  %v3794 = vpop.f32.mrf.mxu0
  %3795 = vdwg.mxu0
  %3796 = vmatpush.bf16.msra.mxu0 %v1371
  %3797 = vmatpush.bf16.msra.mxu0 %v1359
  %3798 = vmatpush.bf16.msra.mxu0 %v1347
  %3799 = vmatpush.bf16.msra.mxu0 %v1335
  %3800 = vmatpush.bf16.msra.mxu0 %v1323
  %3801 = vmatpush.bf16.msra.mxu0 %v1311
  %3802 = vmatpush.bf16.msra.mxu0 %v1299
  %3803 = vmatpush.bf16.msra.mxu0 %v1287
  %3804 = vmatmul.bf16.gmra.mxu0 %v3547
  %v3805 = vpop.f32.mrf.mxu0
  %v3806 = vadd.f32 %v3793, %v3805
  %v3807 = vpop.f32.mrf.mxu0
  %3808 = vdwg.mxu0
  %3809 = vmatpush.bf16.msra.mxu0 %v1467
  %3810 = vmatpush.bf16.msra.mxu0 %v1455
  %3811 = vmatpush.bf16.msra.mxu0 %v1443
  %3812 = vmatpush.bf16.msra.mxu0 %v1431
  %3813 = vmatpush.bf16.msra.mxu0 %v1419
  %3814 = vmatpush.bf16.msra.mxu0 %v1407
  %3815 = vmatpush.bf16.msra.mxu0 %v1395
  %3816 = vmatpush.bf16.msra.mxu0 %v1383
  %3817 = vmatmul.bf16.gmra.mxu0 %v3548
  %v3818 = vpop.f32.mrf.mxu0
  %v3819 = vadd.f32 %v3806, %v3818
  %v3820 = vpop.f32.mrf.mxu0
  %3821 = vdwg.mxu0
  %3822 = vmatpush.bf16.msra.mxu0 %v1276
  %3823 = vmatpush.bf16.msra.mxu0 %v1264
  %3824 = vmatpush.bf16.msra.mxu0 %v1252
  %3825 = vmatpush.bf16.msra.mxu0 %v1240
  %3826 = vmatpush.bf16.msra.mxu0 %v1228
  %3827 = vmatpush.bf16.msra.mxu0 %v1216
  %3828 = vmatpush.bf16.msra.mxu0 %v1204
  %3829 = vmatpush.bf16.msra.mxu0 %v1192
  %3830 = vmatmul.bf16.gmra.mxu0 %v3546
  %v3831 = vpop.f32.mrf.mxu0
  %v3832 = vadd.f32 0.0, %v3831
  %v3833 = vpop.f32.mrf.mxu0
  %3834 = vdwg.mxu0
  %3835 = vmatpush.bf16.msra.mxu0 %v1372
  %3836 = vmatpush.bf16.msra.mxu0 %v1360
  %3837 = vmatpush.bf16.msra.mxu0 %v1348
  %3838 = vmatpush.bf16.msra.mxu0 %v1336
  %3839 = vmatpush.bf16.msra.mxu0 %v1324
  %3840 = vmatpush.bf16.msra.mxu0 %v1312
  %3841 = vmatpush.bf16.msra.mxu0 %v1300
  %3842 = vmatpush.bf16.msra.mxu0 %v1288
  %3843 = vmatmul.bf16.gmra.mxu0 %v3547
  %v3844 = vpop.f32.mrf.mxu0
  %v3845 = vadd.f32 %v3832, %v3844
  %v3846 = vpop.f32.mrf.mxu0
  %3847 = vdwg.mxu0
  %3848 = vmatpush.bf16.msra.mxu0 %v1468
  %3849 = vmatpush.bf16.msra.mxu0 %v1456
  %3850 = vmatpush.bf16.msra.mxu0 %v1444
  %3851 = vmatpush.bf16.msra.mxu0 %v1432
  %3852 = vmatpush.bf16.msra.mxu0 %v1420
  %3853 = vmatpush.bf16.msra.mxu0 %v1408
  %3854 = vmatpush.bf16.msra.mxu0 %v1396
  %3855 = vmatpush.bf16.msra.mxu0 %v1384
  %3856 = vmatmul.bf16.gmra.mxu0 %v3548
  %v3857 = vpop.f32.mrf.mxu0
  %v3858 = vadd.f32 %v3845, %v3857
  %v3859 = vpop.f32.mrf.mxu0
  %3860 = vdwg.mxu0
  %3861 = vmatpush.bf16.msra.mxu0 %v1277
  %3862 = vmatpush.bf16.msra.mxu0 %v1265
  %3863 = vmatpush.bf16.msra.mxu0 %v1253
  %3864 = vmatpush.bf16.msra.mxu0 %v1241
  %3865 = vmatpush.bf16.msra.mxu0 %v1229
  %3866 = vmatpush.bf16.msra.mxu0 %v1217
  %3867 = vmatpush.bf16.msra.mxu0 %v1205
  %3868 = vmatpush.bf16.msra.mxu0 %v1193
  %3869 = vmatmul.bf16.gmra.mxu0 %v3546
  %v3870 = vpop.f32.mrf.mxu0
  %v3871 = vadd.f32 0.0, %v3870
  %v3872 = vpop.f32.mrf.mxu0
  %3873 = vdwg.mxu0
  %3874 = vmatpush.bf16.msra.mxu0 %v1373
  %3875 = vmatpush.bf16.msra.mxu0 %v1361
  %3876 = vmatpush.bf16.msra.mxu0 %v1349
  %3877 = vmatpush.bf16.msra.mxu0 %v1337
  %3878 = vmatpush.bf16.msra.mxu0 %v1325
  %3879 = vmatpush.bf16.msra.mxu0 %v1313
  %3880 = vmatpush.bf16.msra.mxu0 %v1301
  %3881 = vmatpush.bf16.msra.mxu0 %v1289
  %3882 = vmatmul.bf16.gmra.mxu0 %v3547
  %v3883 = vpop.f32.mrf.mxu0
  %v3884 = vadd.f32 %v3871, %v3883
  %v3885 = vpop.f32.mrf.mxu0
  %3886 = vdwg.mxu0
  %3887 = vmatpush.bf16.msra.mxu0 %v1469
  %3888 = vmatpush.bf16.msra.mxu0 %v1457
  %3889 = vmatpush.bf16.msra.mxu0 %v1445
  %3890 = vmatpush.bf16.msra.mxu0 %v1433
  %3891 = vmatpush.bf16.msra.mxu0 %v1421
  %3892 = vmatpush.bf16.msra.mxu0 %v1409
  %3893 = vmatpush.bf16.msra.mxu0 %v1397
  %3894 = vmatpush.bf16.msra.mxu0 %v1385
  %3895 = vmatmul.bf16.gmra.mxu0 %v3548
  %v3896 = vpop.f32.mrf.mxu0
  %v3897 = vadd.f32 %v3884, %v3896
  %v3898 = vpop.f32.mrf.mxu0
  %3899 = vdwg.mxu0
  %3900 = vmatpush.bf16.msra.mxu0 %v1278
  %3901 = vmatpush.bf16.msra.mxu0 %v1266
  %3902 = vmatpush.bf16.msra.mxu0 %v1254
  %3903 = vmatpush.bf16.msra.mxu0 %v1242
  %3904 = vmatpush.bf16.msra.mxu0 %v1230
  %3905 = vmatpush.bf16.msra.mxu0 %v1218
  %3906 = vmatpush.bf16.msra.mxu0 %v1206
  %3907 = vmatpush.bf16.msra.mxu0 %v1194
  %3908 = vmatmul.bf16.gmra.mxu0 %v3546
  %v3909 = vpop.f32.mrf.mxu0
  %v3910 = vadd.f32 0.0, %v3909
  %v3911 = vpop.f32.mrf.mxu0
  %3912 = vdwg.mxu0
  %3913 = vmatpush.bf16.msra.mxu0 %v1374
  %3914 = vmatpush.bf16.msra.mxu0 %v1362
  %3915 = vmatpush.bf16.msra.mxu0 %v1350
  %3916 = vmatpush.bf16.msra.mxu0 %v1338
  %3917 = vmatpush.bf16.msra.mxu0 %v1326
  %3918 = vmatpush.bf16.msra.mxu0 %v1314
  %3919 = vmatpush.bf16.msra.mxu0 %v1302
  %3920 = vmatpush.bf16.msra.mxu0 %v1290
  %3921 = vmatmul.bf16.gmra.mxu0 %v3547
  %v3922 = vpop.f32.mrf.mxu0
  %v3923 = vadd.f32 %v3910, %v3922
  %v3924 = vpop.f32.mrf.mxu0
  %3925 = vdwg.mxu0
  %3926 = vmatpush.bf16.msra.mxu0 %v1470
  %3927 = vmatpush.bf16.msra.mxu0 %v1458
  %3928 = vmatpush.bf16.msra.mxu0 %v1446
  %3929 = vmatpush.bf16.msra.mxu0 %v1434
  %3930 = vmatpush.bf16.msra.mxu0 %v1422
  %3931 = vmatpush.bf16.msra.mxu0 %v1410
  %3932 = vmatpush.bf16.msra.mxu0 %v1398
  %3933 = vmatpush.bf16.msra.mxu0 %v1386
  %3934 = vmatmul.bf16.gmra.mxu0 %v3548
  %v3935 = vpop.f32.mrf.mxu0
  %v3936 = vadd.f32 %v3923, %v3935
  %v3937 = vpop.f32.mrf.mxu0
  %3938 = vdwg.mxu0
  %3939 = vmatpush.bf16.msra.mxu0 %v1279
  %3940 = vmatpush.bf16.msra.mxu0 %v1267
  %3941 = vmatpush.bf16.msra.mxu0 %v1255
  %3942 = vmatpush.bf16.msra.mxu0 %v1243
  %3943 = vmatpush.bf16.msra.mxu0 %v1231
  %3944 = vmatpush.bf16.msra.mxu0 %v1219
  %3945 = vmatpush.bf16.msra.mxu0 %v1207
  %3946 = vmatpush.bf16.msra.mxu0 %v1195
  %3947 = vmatmul.bf16.gmra.mxu0 %v3546
  %v3948 = vpop.f32.mrf.mxu0
  %v3949 = vadd.f32 0.0, %v3948
  %v3950 = vpop.f32.mrf.mxu0
  %3951 = vdwg.mxu0
  %3952 = vmatpush.bf16.msra.mxu0 %v1375
  %3953 = vmatpush.bf16.msra.mxu0 %v1363
  %3954 = vmatpush.bf16.msra.mxu0 %v1351
  %3955 = vmatpush.bf16.msra.mxu0 %v1339
  %3956 = vmatpush.bf16.msra.mxu0 %v1327
  %3957 = vmatpush.bf16.msra.mxu0 %v1315
  %3958 = vmatpush.bf16.msra.mxu0 %v1303
  %3959 = vmatpush.bf16.msra.mxu0 %v1291
  %3960 = vmatmul.bf16.gmra.mxu0 %v3547
  %v3961 = vpop.f32.mrf.mxu0
  %v3962 = vadd.f32 %v3949, %v3961
  %v3963 = vpop.f32.mrf.mxu0
  %3964 = vdwg.mxu0
  %3965 = vmatpush.bf16.msra.mxu0 %v1471
  %3966 = vmatpush.bf16.msra.mxu0 %v1459
  %3967 = vmatpush.bf16.msra.mxu0 %v1447
  %3968 = vmatpush.bf16.msra.mxu0 %v1435
  %3969 = vmatpush.bf16.msra.mxu0 %v1423
  %3970 = vmatpush.bf16.msra.mxu0 %v1411
  %3971 = vmatpush.bf16.msra.mxu0 %v1399
  %3972 = vmatpush.bf16.msra.mxu0 %v1387
  %3973 = vmatmul.bf16.gmra.mxu0 %v3548
  %v3974 = vpop.f32.mrf.mxu0
  %v3975 = vadd.f32 %v3962, %v3974
  %v3976 = vpop.f32.mrf.mxu0
  %3977 = vdwg.mxu0
  %3978 = vmatpush.bf16.msra.mxu0 %v1280
  %3979 = vmatpush.bf16.msra.mxu0 %v1268
  %3980 = vmatpush.bf16.msra.mxu0 %v1256
  %3981 = vmatpush.bf16.msra.mxu0 %v1244
  %3982 = vmatpush.bf16.msra.mxu0 %v1232
  %3983 = vmatpush.bf16.msra.mxu0 %v1220
  %3984 = vmatpush.bf16.msra.mxu0 %v1208
  %3985 = vmatpush.bf16.msra.mxu0 %v1196
  %3986 = vmatmul.bf16.gmra.mxu0 %v3546
  %v3987 = vpop.f32.mrf.mxu0
  %v3988 = vadd.f32 0.0, %v3987
  %v3989 = vpop.f32.mrf.mxu0
  %3990 = vdwg.mxu0
  %3991 = vmatpush.bf16.msra.mxu0 %v1376
  %3992 = vmatpush.bf16.msra.mxu0 %v1364
  %3993 = vmatpush.bf16.msra.mxu0 %v1352
  %3994 = vmatpush.bf16.msra.mxu0 %v1340
  %3995 = vmatpush.bf16.msra.mxu0 %v1328
  %3996 = vmatpush.bf16.msra.mxu0 %v1316
  %3997 = vmatpush.bf16.msra.mxu0 %v1304
  %3998 = vmatpush.bf16.msra.mxu0 %v1292
  %3999 = vmatmul.bf16.gmra.mxu0 %v3547
  %v4000 = vpop.f32.mrf.mxu0
  %v4001 = vadd.f32 %v3988, %v4000
  %v4002 = vpop.f32.mrf.mxu0
  %4003 = vdwg.mxu0
  %4004 = vmatpush.bf16.msra.mxu0 %v1472
  %4005 = vmatpush.bf16.msra.mxu0 %v1460
  %4006 = vmatpush.bf16.msra.mxu0 %v1448
  %4007 = vmatpush.bf16.msra.mxu0 %v1436
  %4008 = vmatpush.bf16.msra.mxu0 %v1424
  %4009 = vmatpush.bf16.msra.mxu0 %v1412
  %4010 = vmatpush.bf16.msra.mxu0 %v1400
  %4011 = vmatpush.bf16.msra.mxu0 %v1388
  %4012 = vmatmul.bf16.gmra.mxu0 %v3548
  %v4013 = vpop.f32.mrf.mxu0
  %v4014 = vadd.f32 %v4001, %v4013
  %v4015 = vpop.f32.mrf.mxu0
  %4016 = vdwg.mxu0
  %v4029 = vrot.slane %v3624, 6
  %v4030 = vrot.slane %v3663, 4
  %v4031 = vrot.slane %v3702, 2
  %v4032 = vrot.slane %v3780, 6
  %v4033 = vrot.slane %v3819, 4
  %v4034 = vrot.slane %v3858, 2
  %v4035 = vrot.slane %v3936, 6
  %v4036 = vrot.slane %v3975, 4
  %v4037 = vrot.slane %v4014, 2
  %v4038 = vsel %vm2250, %v3585, %v4029
  %v4039 = vsel %vm2252, %v4030, %v4031
  %v4040 = vsel %vm2254, %v4038, %v4039
  %v4041 = vsel %vm2250, %v3741, %v4032
  %v4042 = vsel %vm2252, %v4033, %v4034
  %v4043 = vsel %vm2254, %v4041, %v4042
  %v4044 = vsel %vm2250, %v3897, %v4035
  %v4045 = vsel %vm2252, %v4036, %v4037
  %v4046 = vsel %vm2254, %v4044, %v4045
  %v4050 = vadd.f32 %v3535, %v4040
  %v4051 = vadd.f32 %v3536, %v4043
  %v4052 = vadd.f32 %v3537, %v4046
  %v4053 = vxor.u32 %v4050, 2147483648
  %v4054 = vmul.f32 %v4053, 1.442695
  %v4055 = vpow.pop %v4054
  %v4056 = vadd.f32 %v4055, 1.0
  %v4057 = vrcp.pop %v4056
  %v4058 = vmul.f32 %v4056, %v4057
  %v4059 = vsub.f32 1.0, %v4058
  %v4060 = vmul.f32 %v4057, %v4059
  %v4061 = vadd.f32 %v4057, %v4060
  %vm4062 = vweird.f32 %v4056
  %vm4063 = vweird.f32 %v4057
  %vm4064 = vmor %vm4062, %vm4063
  %v4065 = vsel %vm4064, %v4057, %v4061
  %v4066 = vand.u32 2147483647, %v4056
  %vm4067 = vcmp.eq.f32.partialorder %v4066, 8.507059e+37
  %v4068 = vand.u32 %v4056, 2147483648
  %v4069 = vor.u32 1.1754944e-38, %v4068
  %v4070 = vsel %vm4067, %v4069, %v4065
  %v4071 = vmul.f32 1.0, %v4070
  %v4074 = vrot.slane %v4050, 6
  %v4075 = vrot.slane %v4051, 6
  %v4076 = vsel %vm2250, %v4074, %v4075
  %v4078 = vxor.u32 %v4076, 2147483648
  %v4079 = vmul.f32 %v4078, 1.442695
  %v4080 = vpow.pop %v4079
  %v4081 = vadd.f32 %v4080, 1.0
  %v4082 = vrcp.pop %v4081
  %v4083 = vmul.f32 %v4081, %v4082
  %v4084 = vsub.f32 1.0, %v4083
  %v4085 = vmul.f32 %v4082, %v4084
  %v4086 = vadd.f32 %v4082, %v4085
  %vm4087 = vweird.f32 %v4081
  %vm4088 = vweird.f32 %v4082
  %vm4089 = vmor %vm4087, %vm4088
  %v4090 = vsel %vm4089, %v4082, %v4086
  %v4091 = vand.u32 2147483647, %v4081
  %vm4092 = vcmp.eq.f32.partialorder %v4091, 8.507059e+37
  %v4093 = vand.u32 %v4081, 2147483648
  %v4094 = vor.u32 1.1754944e-38, %v4093
  %v4095 = vsel %vm4092, %v4094, %v4090
  %v4096 = vmul.f32 1.0, %v4095
  %v4098 = vrot.slane %v4051, 4
  %v4099 = vrot.slane %v4052, 4
  %v4100 = vsel %vm2254, %v4098, %v4099
  %v4102 = vtanh.pop %v4100
  %v4103 = vrot.slane %v4052, 2
  %v4105 = vxor.u32 %v4103, 2147483648
  %v4106 = vmul.f32 %v4105, 1.442695
  %v4107 = vpow.pop %v4106
  %v4108 = vadd.f32 %v4107, 1.0
  %v4109 = vrcp.pop %v4108
  %v4110 = vmul.f32 %v4108, %v4109
  %v4111 = vsub.f32 1.0, %v4110
  %v4112 = vmul.f32 %v4109, %v4111
  %v4113 = vadd.f32 %v4109, %v4112
  %vm4114 = vweird.f32 %v4108
  %vm4115 = vweird.f32 %v4109
  %vm4116 = vmor %vm4114, %vm4115
  %v4117 = vsel %vm4116, %v4109, %v4113
  %v4118 = vand.u32 2147483647, %v4108
  %vm4119 = vcmp.eq.f32.partialorder %v4118, 8.507059e+37
  %v4120 = vand.u32 %v4108, 2147483648
  %v4121 = vor.u32 1.1754944e-38, %v4120
  %v4122 = vsel %vm4119, %v4121, %v4117
  %v4123 = vmul.f32 1.0, %v4122
  %v4124 = vmul.f32 %v4096, %v3531
  %v4125 = vmul.f32 %v4071, %v4102
  %v4126 = vadd.f32 %v4124, %v4125
  %v4127 = vtanh.pop %v4126
  %v4128 = vmul.f32 %v4123, %v4127
  %s4129 = scalar_lea.vmem %s0, 96
  %v4130 = vld [vmem:[%s4129] sm:$0xff]
  %v4131 = vld [vmem:[%s4129 + $0x8] sm:$0xff]
  %v4132 = vld [vmem:[%s4129 + $0x10] sm:$0xff]
  %4134 = vst [vmem:[#allocation1] ss:$4 sm:$0xff] %v4128
  %v4135 = vld.sshfl [vmem:[#allocation1] sm:$0xff pattern:$0x73625140]
  %v4136 = vld.sshfl [vmem:[#allocation1 + $0x8] sm:$0xff pattern:$0x73625140]
  %v4137 = vld.sshfl [vmem:[#allocation1 + $0x10] sm:$0xff pattern:$0x73625140]
  %v4141 = vpack.c.bf16 %v4135, %v4135
  %v4142 = vpack.c.bf16 %v4136, %v4136
  %v4143 = vpack.c.bf16 %v4137, %v4137
  %4144 = vmatpush.bf16.msra.mxu0 %v1269
  %4145 = vmatpush.bf16.msra.mxu0 %v1257
  %4146 = vmatpush.bf16.msra.mxu0 %v1245
  %4147 = vmatpush.bf16.msra.mxu0 %v1233
  %4148 = vmatpush.bf16.msra.mxu0 %v1221
  %4149 = vmatpush.bf16.msra.mxu0 %v1209
  %4150 = vmatpush.bf16.msra.mxu0 %v1197
  %4151 = vmatpush.bf16.msra.mxu0 %v1185
  %4152 = vmatmul.bf16.gmra.mxu0 %v4141
  %v4153 = vpop.f32.mrf.mxu0
  %v4154 = vadd.f32 0.0, %v4153
  %v4155 = vpop.f32.mrf.mxu0
  %4156 = vdwg.mxu0
  %4157 = vmatpush.bf16.msra.mxu0 %v1365
  %4158 = vmatpush.bf16.msra.mxu0 %v1353
  %4159 = vmatpush.bf16.msra.mxu0 %v1341
  %4160 = vmatpush.bf16.msra.mxu0 %v1329
  %4161 = vmatpush.bf16.msra.mxu0 %v1317
  %4162 = vmatpush.bf16.msra.mxu0 %v1305
  %4163 = vmatpush.bf16.msra.mxu0 %v1293
  %4164 = vmatpush.bf16.msra.mxu0 %v1281
  %4165 = vmatmul.bf16.gmra.mxu0 %v4142
  %v4166 = vpop.f32.mrf.mxu0
  %v4167 = vadd.f32 %v4154, %v4166
  %v4168 = vpop.f32.mrf.mxu0
  %4169 = vdwg.mxu0
  %4170 = vmatpush.bf16.msra.mxu0 %v1461
  %4171 = vmatpush.bf16.msra.mxu0 %v1449
  %4172 = vmatpush.bf16.msra.mxu0 %v1437
  %4173 = vmatpush.bf16.msra.mxu0 %v1425
  %4174 = vmatpush.bf16.msra.mxu0 %v1413
  %4175 = vmatpush.bf16.msra.mxu0 %v1401
  %4176 = vmatpush.bf16.msra.mxu0 %v1389
  %4177 = vmatpush.bf16.msra.mxu0 %v1377
  %4178 = vmatmul.bf16.gmra.mxu0 %v4143
  %v4179 = vpop.f32.mrf.mxu0
  %v4180 = vadd.f32 %v4167, %v4179
  %v4181 = vpop.f32.mrf.mxu0
  %4182 = vdwg.mxu0
  %4183 = vmatpush.bf16.msra.mxu0 %v1270
  %4184 = vmatpush.bf16.msra.mxu0 %v1258
  %4185 = vmatpush.bf16.msra.mxu0 %v1246
  %4186 = vmatpush.bf16.msra.mxu0 %v1234
  %4187 = vmatpush.bf16.msra.mxu0 %v1222
  %4188 = vmatpush.bf16.msra.mxu0 %v1210
  %4189 = vmatpush.bf16.msra.mxu0 %v1198
  %4190 = vmatpush.bf16.msra.mxu0 %v1186
  %4191 = vmatmul.bf16.gmra.mxu0 %v4141
  %v4192 = vpop.f32.mrf.mxu0
  %v4193 = vadd.f32 0.0, %v4192
  %v4194 = vpop.f32.mrf.mxu0
  %4195 = vdwg.mxu0
  %4196 = vmatpush.bf16.msra.mxu0 %v1366
  %4197 = vmatpush.bf16.msra.mxu0 %v1354
  %4198 = vmatpush.bf16.msra.mxu0 %v1342
  %4199 = vmatpush.bf16.msra.mxu0 %v1330
  %4200 = vmatpush.bf16.msra.mxu0 %v1318
  %4201 = vmatpush.bf16.msra.mxu0 %v1306
  %4202 = vmatpush.bf16.msra.mxu0 %v1294
  %4203 = vmatpush.bf16.msra.mxu0 %v1282
  %4204 = vmatmul.bf16.gmra.mxu0 %v4142
  %v4205 = vpop.f32.mrf.mxu0
  %v4206 = vadd.f32 %v4193, %v4205
  %v4207 = vpop.f32.mrf.mxu0
  %4208 = vdwg.mxu0
  %4209 = vmatpush.bf16.msra.mxu0 %v1462
  %4210 = vmatpush.bf16.msra.mxu0 %v1450
  %4211 = vmatpush.bf16.msra.mxu0 %v1438
  %4212 = vmatpush.bf16.msra.mxu0 %v1426
  %4213 = vmatpush.bf16.msra.mxu0 %v1414
  %4214 = vmatpush.bf16.msra.mxu0 %v1402
  %4215 = vmatpush.bf16.msra.mxu0 %v1390
  %4216 = vmatpush.bf16.msra.mxu0 %v1378
  %4217 = vmatmul.bf16.gmra.mxu0 %v4143
  %v4218 = vpop.f32.mrf.mxu0
  %v4219 = vadd.f32 %v4206, %v4218
  %v4220 = vpop.f32.mrf.mxu0
  %4221 = vdwg.mxu0
  %4222 = vmatpush.bf16.msra.mxu0 %v1271
  %4223 = vmatpush.bf16.msra.mxu0 %v1259
  %4224 = vmatpush.bf16.msra.mxu0 %v1247
  %4225 = vmatpush.bf16.msra.mxu0 %v1235
  %4226 = vmatpush.bf16.msra.mxu0 %v1223
  %4227 = vmatpush.bf16.msra.mxu0 %v1211
  %4228 = vmatpush.bf16.msra.mxu0 %v1199
  %4229 = vmatpush.bf16.msra.mxu0 %v1187
  %4230 = vmatmul.bf16.gmra.mxu0 %v4141
  %v4231 = vpop.f32.mrf.mxu0
  %v4232 = vadd.f32 0.0, %v4231
  %v4233 = vpop.f32.mrf.mxu0
  %4234 = vdwg.mxu0
  %4235 = vmatpush.bf16.msra.mxu0 %v1367
  %4236 = vmatpush.bf16.msra.mxu0 %v1355
  %4237 = vmatpush.bf16.msra.mxu0 %v1343
  %4238 = vmatpush.bf16.msra.mxu0 %v1331
  %4239 = vmatpush.bf16.msra.mxu0 %v1319
  %4240 = vmatpush.bf16.msra.mxu0 %v1307
  %4241 = vmatpush.bf16.msra.mxu0 %v1295
  %4242 = vmatpush.bf16.msra.mxu0 %v1283
  %4243 = vmatmul.bf16.gmra.mxu0 %v4142
  %v4244 = vpop.f32.mrf.mxu0
  %v4245 = vadd.f32 %v4232, %v4244
  %v4246 = vpop.f32.mrf.mxu0
  %4247 = vdwg.mxu0
  %4248 = vmatpush.bf16.msra.mxu0 %v1463
  %4249 = vmatpush.bf16.msra.mxu0 %v1451
  %4250 = vmatpush.bf16.msra.mxu0 %v1439
  %4251 = vmatpush.bf16.msra.mxu0 %v1427
  %4252 = vmatpush.bf16.msra.mxu0 %v1415
  %4253 = vmatpush.bf16.msra.mxu0 %v1403
  %4254 = vmatpush.bf16.msra.mxu0 %v1391
  %4255 = vmatpush.bf16.msra.mxu0 %v1379
  %4256 = vmatmul.bf16.gmra.mxu0 %v4143
  %v4257 = vpop.f32.mrf.mxu0
  %v4258 = vadd.f32 %v4245, %v4257
  %v4259 = vpop.f32.mrf.mxu0
  %4260 = vdwg.mxu0
  %4261 = vmatpush.bf16.msra.mxu0 %v1272
  %4262 = vmatpush.bf16.msra.mxu0 %v1260
  %4263 = vmatpush.bf16.msra.mxu0 %v1248
  %4264 = vmatpush.bf16.msra.mxu0 %v1236
  %4265 = vmatpush.bf16.msra.mxu0 %v1224
  %4266 = vmatpush.bf16.msra.mxu0 %v1212
  %4267 = vmatpush.bf16.msra.mxu0 %v1200
  %4268 = vmatpush.bf16.msra.mxu0 %v1188
  %4269 = vmatmul.bf16.gmra.mxu0 %v4141
  %v4270 = vpop.f32.mrf.mxu0
  %v4271 = vadd.f32 0.0, %v4270
  %v4272 = vpop.f32.mrf.mxu0
  %4273 = vdwg.mxu0
  %4274 = vmatpush.bf16.msra.mxu0 %v1368
  %4275 = vmatpush.bf16.msra.mxu0 %v1356
  %4276 = vmatpush.bf16.msra.mxu0 %v1344
  %4277 = vmatpush.bf16.msra.mxu0 %v1332
  %4278 = vmatpush.bf16.msra.mxu0 %v1320
  %4279 = vmatpush.bf16.msra.mxu0 %v1308
  %4280 = vmatpush.bf16.msra.mxu0 %v1296
  %4281 = vmatpush.bf16.msra.mxu0 %v1284
  %4282 = vmatmul.bf16.gmra.mxu0 %v4142
  %v4283 = vpop.f32.mrf.mxu0
  %v4284 = vadd.f32 %v4271, %v4283
  %v4285 = vpop.f32.mrf.mxu0
  %4286 = vdwg.mxu0
  %4287 = vmatpush.bf16.msra.mxu0 %v1464
  %4288 = vmatpush.bf16.msra.mxu0 %v1452
  %4289 = vmatpush.bf16.msra.mxu0 %v1440
  %4290 = vmatpush.bf16.msra.mxu0 %v1428
  %4291 = vmatpush.bf16.msra.mxu0 %v1416
  %4292 = vmatpush.bf16.msra.mxu0 %v1404
  %4293 = vmatpush.bf16.msra.mxu0 %v1392
  %4294 = vmatpush.bf16.msra.mxu0 %v1380
  %4295 = vmatmul.bf16.gmra.mxu0 %v4143
  %v4296 = vpop.f32.mrf.mxu0
  %v4297 = vadd.f32 %v4284, %v4296
  %v4298 = vpop.f32.mrf.mxu0
  %4299 = vdwg.mxu0
  %4300 = vmatpush.bf16.msra.mxu0 %v1273
  %4301 = vmatpush.bf16.msra.mxu0 %v1261
  %4302 = vmatpush.bf16.msra.mxu0 %v1249
  %4303 = vmatpush.bf16.msra.mxu0 %v1237
  %4304 = vmatpush.bf16.msra.mxu0 %v1225
  %4305 = vmatpush.bf16.msra.mxu0 %v1213
  %4306 = vmatpush.bf16.msra.mxu0 %v1201
  %4307 = vmatpush.bf16.msra.mxu0 %v1189
  %4308 = vmatmul.bf16.gmra.mxu0 %v4141
  %v4309 = vpop.f32.mrf.mxu0
  %v4310 = vadd.f32 0.0, %v4309
  %v4311 = vpop.f32.mrf.mxu0
  %4312 = vdwg.mxu0
  %4313 = vmatpush.bf16.msra.mxu0 %v1369
  %4314 = vmatpush.bf16.msra.mxu0 %v1357
  %4315 = vmatpush.bf16.msra.mxu0 %v1345
  %4316 = vmatpush.bf16.msra.mxu0 %v1333
  %4317 = vmatpush.bf16.msra.mxu0 %v1321
  %4318 = vmatpush.bf16.msra.mxu0 %v1309
  %4319 = vmatpush.bf16.msra.mxu0 %v1297
  %4320 = vmatpush.bf16.msra.mxu0 %v1285
  %4321 = vmatmul.bf16.gmra.mxu0 %v4142
  %v4322 = vpop.f32.mrf.mxu0
  %v4323 = vadd.f32 %v4310, %v4322
  %v4324 = vpop.f32.mrf.mxu0
  %4325 = vdwg.mxu0
  %4326 = vmatpush.bf16.msra.mxu0 %v1465
  %4327 = vmatpush.bf16.msra.mxu0 %v1453
  %4328 = vmatpush.bf16.msra.mxu0 %v1441
  %4329 = vmatpush.bf16.msra.mxu0 %v1429
  %4330 = vmatpush.bf16.msra.mxu0 %v1417
  %4331 = vmatpush.bf16.msra.mxu0 %v1405
  %4332 = vmatpush.bf16.msra.mxu0 %v1393
  %4333 = vmatpush.bf16.msra.mxu0 %v1381
  %4334 = vmatmul.bf16.gmra.mxu0 %v4143
  %v4335 = vpop.f32.mrf.mxu0
  %v4336 = vadd.f32 %v4323, %v4335
  %v4337 = vpop.f32.mrf.mxu0
  %4338 = vdwg.mxu0
  %4339 = vmatpush.bf16.msra.mxu0 %v1274
  %4340 = vmatpush.bf16.msra.mxu0 %v1262
  %4341 = vmatpush.bf16.msra.mxu0 %v1250
  %4342 = vmatpush.bf16.msra.mxu0 %v1238
  %4343 = vmatpush.bf16.msra.mxu0 %v1226
  %4344 = vmatpush.bf16.msra.mxu0 %v1214
  %4345 = vmatpush.bf16.msra.mxu0 %v1202
  %4346 = vmatpush.bf16.msra.mxu0 %v1190
  %4347 = vmatmul.bf16.gmra.mxu0 %v4141
  %v4348 = vpop.f32.mrf.mxu0
  %v4349 = vadd.f32 0.0, %v4348
  %v4350 = vpop.f32.mrf.mxu0
  %4351 = vdwg.mxu0
  %4352 = vmatpush.bf16.msra.mxu0 %v1370
  %4353 = vmatpush.bf16.msra.mxu0 %v1358
  %4354 = vmatpush.bf16.msra.mxu0 %v1346
  %4355 = vmatpush.bf16.msra.mxu0 %v1334
  %4356 = vmatpush.bf16.msra.mxu0 %v1322
  %4357 = vmatpush.bf16.msra.mxu0 %v1310
  %4358 = vmatpush.bf16.msra.mxu0 %v1298
  %4359 = vmatpush.bf16.msra.mxu0 %v1286
  %4360 = vmatmul.bf16.gmra.mxu0 %v4142
  %v4361 = vpop.f32.mrf.mxu0
  %v4362 = vadd.f32 %v4349, %v4361
  %v4363 = vpop.f32.mrf.mxu0
  %4364 = vdwg.mxu0
  %4365 = vmatpush.bf16.msra.mxu0 %v1466
  %4366 = vmatpush.bf16.msra.mxu0 %v1454
  %4367 = vmatpush.bf16.msra.mxu0 %v1442
  %4368 = vmatpush.bf16.msra.mxu0 %v1430
  %4369 = vmatpush.bf16.msra.mxu0 %v1418
  %4370 = vmatpush.bf16.msra.mxu0 %v1406
  %4371 = vmatpush.bf16.msra.mxu0 %v1394
  %4372 = vmatpush.bf16.msra.mxu0 %v1382
  %4373 = vmatmul.bf16.gmra.mxu0 %v4143
  %v4374 = vpop.f32.mrf.mxu0
  %v4375 = vadd.f32 %v4362, %v4374
  %v4376 = vpop.f32.mrf.mxu0
  %4377 = vdwg.mxu0
  %4378 = vmatpush.bf16.msra.mxu0 %v1275
  %4379 = vmatpush.bf16.msra.mxu0 %v1263
  %4380 = vmatpush.bf16.msra.mxu0 %v1251
  %4381 = vmatpush.bf16.msra.mxu0 %v1239
  %4382 = vmatpush.bf16.msra.mxu0 %v1227
  %4383 = vmatpush.bf16.msra.mxu0 %v1215
  %4384 = vmatpush.bf16.msra.mxu0 %v1203
  %4385 = vmatpush.bf16.msra.mxu0 %v1191
  %4386 = vmatmul.bf16.gmra.mxu0 %v4141
  %v4387 = vpop.f32.mrf.mxu0
  %v4388 = vadd.f32 0.0, %v4387
  %v4389 = vpop.f32.mrf.mxu0
  %4390 = vdwg.mxu0
  %4391 = vmatpush.bf16.msra.mxu0 %v1371
  %4392 = vmatpush.bf16.msra.mxu0 %v1359
  %4393 = vmatpush.bf16.msra.mxu0 %v1347
  %4394 = vmatpush.bf16.msra.mxu0 %v1335
  %4395 = vmatpush.bf16.msra.mxu0 %v1323
  %4396 = vmatpush.bf16.msra.mxu0 %v1311
  %4397 = vmatpush.bf16.msra.mxu0 %v1299
  %4398 = vmatpush.bf16.msra.mxu0 %v1287
  %4399 = vmatmul.bf16.gmra.mxu0 %v4142
  %v4400 = vpop.f32.mrf.mxu0
  %v4401 = vadd.f32 %v4388, %v4400
  %v4402 = vpop.f32.mrf.mxu0
  %4403 = vdwg.mxu0
  %4404 = vmatpush.bf16.msra.mxu0 %v1467
  %4405 = vmatpush.bf16.msra.mxu0 %v1455
  %4406 = vmatpush.bf16.msra.mxu0 %v1443
  %4407 = vmatpush.bf16.msra.mxu0 %v1431
  %4408 = vmatpush.bf16.msra.mxu0 %v1419
  %4409 = vmatpush.bf16.msra.mxu0 %v1407
  %4410 = vmatpush.bf16.msra.mxu0 %v1395
  %4411 = vmatpush.bf16.msra.mxu0 %v1383
  %4412 = vmatmul.bf16.gmra.mxu0 %v4143
  %v4413 = vpop.f32.mrf.mxu0
  %v4414 = vadd.f32 %v4401, %v4413
  %v4415 = vpop.f32.mrf.mxu0
  %4416 = vdwg.mxu0
  %4417 = vmatpush.bf16.msra.mxu0 %v1276
  %4418 = vmatpush.bf16.msra.mxu0 %v1264
  %4419 = vmatpush.bf16.msra.mxu0 %v1252
  %4420 = vmatpush.bf16.msra.mxu0 %v1240
  %4421 = vmatpush.bf16.msra.mxu0 %v1228
  %4422 = vmatpush.bf16.msra.mxu0 %v1216
  %4423 = vmatpush.bf16.msra.mxu0 %v1204
  %4424 = vmatpush.bf16.msra.mxu0 %v1192
  %4425 = vmatmul.bf16.gmra.mxu0 %v4141
  %v4426 = vpop.f32.mrf.mxu0
  %v4427 = vadd.f32 0.0, %v4426
  %v4428 = vpop.f32.mrf.mxu0
  %4429 = vdwg.mxu0
  %4430 = vmatpush.bf16.msra.mxu0 %v1372
  %4431 = vmatpush.bf16.msra.mxu0 %v1360
  %4432 = vmatpush.bf16.msra.mxu0 %v1348
  %4433 = vmatpush.bf16.msra.mxu0 %v1336
  %4434 = vmatpush.bf16.msra.mxu0 %v1324
  %4435 = vmatpush.bf16.msra.mxu0 %v1312
  %4436 = vmatpush.bf16.msra.mxu0 %v1300
  %4437 = vmatpush.bf16.msra.mxu0 %v1288
  %4438 = vmatmul.bf16.gmra.mxu0 %v4142
  %v4439 = vpop.f32.mrf.mxu0
  %v4440 = vadd.f32 %v4427, %v4439
  %v4441 = vpop.f32.mrf.mxu0
  %4442 = vdwg.mxu0
  %4443 = vmatpush.bf16.msra.mxu0 %v1468
  %4444 = vmatpush.bf16.msra.mxu0 %v1456
  %4445 = vmatpush.bf16.msra.mxu0 %v1444
  %4446 = vmatpush.bf16.msra.mxu0 %v1432
  %4447 = vmatpush.bf16.msra.mxu0 %v1420
  %4448 = vmatpush.bf16.msra.mxu0 %v1408
  %4449 = vmatpush.bf16.msra.mxu0 %v1396
  %4450 = vmatpush.bf16.msra.mxu0 %v1384
  %4451 = vmatmul.bf16.gmra.mxu0 %v4143
  %v4452 = vpop.f32.mrf.mxu0
  %v4453 = vadd.f32 %v4440, %v4452
  %v4454 = vpop.f32.mrf.mxu0
  %4455 = vdwg.mxu0
  %4456 = vmatpush.bf16.msra.mxu0 %v1277
  %4457 = vmatpush.bf16.msra.mxu0 %v1265
  %4458 = vmatpush.bf16.msra.mxu0 %v1253
  %4459 = vmatpush.bf16.msra.mxu0 %v1241
  %4460 = vmatpush.bf16.msra.mxu0 %v1229
  %4461 = vmatpush.bf16.msra.mxu0 %v1217
  %4462 = vmatpush.bf16.msra.mxu0 %v1205
  %4463 = vmatpush.bf16.msra.mxu0 %v1193
  %4464 = vmatmul.bf16.gmra.mxu0 %v4141
  %v4465 = vpop.f32.mrf.mxu0
  %v4466 = vadd.f32 0.0, %v4465
  %v4467 = vpop.f32.mrf.mxu0
  %4468 = vdwg.mxu0
  %4469 = vmatpush.bf16.msra.mxu0 %v1373
  %4470 = vmatpush.bf16.msra.mxu0 %v1361
  %4471 = vmatpush.bf16.msra.mxu0 %v1349
  %4472 = vmatpush.bf16.msra.mxu0 %v1337
  %4473 = vmatpush.bf16.msra.mxu0 %v1325
  %4474 = vmatpush.bf16.msra.mxu0 %v1313
  %4475 = vmatpush.bf16.msra.mxu0 %v1301
  %4476 = vmatpush.bf16.msra.mxu0 %v1289
  %4477 = vmatmul.bf16.gmra.mxu0 %v4142
  %v4478 = vpop.f32.mrf.mxu0
  %v4479 = vadd.f32 %v4466, %v4478
  %v4480 = vpop.f32.mrf.mxu0
  %4481 = vdwg.mxu0
  %4482 = vmatpush.bf16.msra.mxu0 %v1469
  %4483 = vmatpush.bf16.msra.mxu0 %v1457
  %4484 = vmatpush.bf16.msra.mxu0 %v1445
  %4485 = vmatpush.bf16.msra.mxu0 %v1433
  %4486 = vmatpush.bf16.msra.mxu0 %v1421
  %4487 = vmatpush.bf16.msra.mxu0 %v1409
  %4488 = vmatpush.bf16.msra.mxu0 %v1397
  %4489 = vmatpush.bf16.msra.mxu0 %v1385
  %4490 = vmatmul.bf16.gmra.mxu0 %v4143
  %v4491 = vpop.f32.mrf.mxu0
  %v4492 = vadd.f32 %v4479, %v4491
  %v4493 = vpop.f32.mrf.mxu0
  %4494 = vdwg.mxu0
  %4495 = vmatpush.bf16.msra.mxu0 %v1278
  %4496 = vmatpush.bf16.msra.mxu0 %v1266
  %4497 = vmatpush.bf16.msra.mxu0 %v1254
  %4498 = vmatpush.bf16.msra.mxu0 %v1242
  %4499 = vmatpush.bf16.msra.mxu0 %v1230
  %4500 = vmatpush.bf16.msra.mxu0 %v1218
  %4501 = vmatpush.bf16.msra.mxu0 %v1206
  %4502 = vmatpush.bf16.msra.mxu0 %v1194
  %4503 = vmatmul.bf16.gmra.mxu0 %v4141
  %v4504 = vpop.f32.mrf.mxu0
  %v4505 = vadd.f32 0.0, %v4504
  %v4506 = vpop.f32.mrf.mxu0
  %4507 = vdwg.mxu0
  %4508 = vmatpush.bf16.msra.mxu0 %v1374
  %4509 = vmatpush.bf16.msra.mxu0 %v1362
  %4510 = vmatpush.bf16.msra.mxu0 %v1350
  %4511 = vmatpush.bf16.msra.mxu0 %v1338
  %4512 = vmatpush.bf16.msra.mxu0 %v1326
  %4513 = vmatpush.bf16.msra.mxu0 %v1314
  %4514 = vmatpush.bf16.msra.mxu0 %v1302
  %4515 = vmatpush.bf16.msra.mxu0 %v1290
  %4516 = vmatmul.bf16.gmra.mxu0 %v4142
  %v4517 = vpop.f32.mrf.mxu0
  %v4518 = vadd.f32 %v4505, %v4517
  %v4519 = vpop.f32.mrf.mxu0
  %4520 = vdwg.mxu0
  %4521 = vmatpush.bf16.msra.mxu0 %v1470
  %4522 = vmatpush.bf16.msra.mxu0 %v1458
  %4523 = vmatpush.bf16.msra.mxu0 %v1446
  %4524 = vmatpush.bf16.msra.mxu0 %v1434
  %4525 = vmatpush.bf16.msra.mxu0 %v1422
  %4526 = vmatpush.bf16.msra.mxu0 %v1410
  %4527 = vmatpush.bf16.msra.mxu0 %v1398
  %4528 = vmatpush.bf16.msra.mxu0 %v1386
  %4529 = vmatmul.bf16.gmra.mxu0 %v4143
  %v4530 = vpop.f32.mrf.mxu0
  %v4531 = vadd.f32 %v4518, %v4530
  %v4532 = vpop.f32.mrf.mxu0
  %4533 = vdwg.mxu0
  %4534 = vmatpush.bf16.msra.mxu0 %v1279
  %4535 = vmatpush.bf16.msra.mxu0 %v1267
  %4536 = vmatpush.bf16.msra.mxu0 %v1255
  %4537 = vmatpush.bf16.msra.mxu0 %v1243
  %4538 = vmatpush.bf16.msra.mxu0 %v1231
  %4539 = vmatpush.bf16.msra.mxu0 %v1219
  %4540 = vmatpush.bf16.msra.mxu0 %v1207
  %4541 = vmatpush.bf16.msra.mxu0 %v1195
  %4542 = vmatmul.bf16.gmra.mxu0 %v4141
  %v4543 = vpop.f32.mrf.mxu0
  %v4544 = vadd.f32 0.0, %v4543
  %v4545 = vpop.f32.mrf.mxu0
  %4546 = vdwg.mxu0
  %4547 = vmatpush.bf16.msra.mxu0 %v1375
  %4548 = vmatpush.bf16.msra.mxu0 %v1363
  %4549 = vmatpush.bf16.msra.mxu0 %v1351
  %4550 = vmatpush.bf16.msra.mxu0 %v1339
  %4551 = vmatpush.bf16.msra.mxu0 %v1327
  %4552 = vmatpush.bf16.msra.mxu0 %v1315
  %4553 = vmatpush.bf16.msra.mxu0 %v1303
  %4554 = vmatpush.bf16.msra.mxu0 %v1291
  %4555 = vmatmul.bf16.gmra.mxu0 %v4142
  %v4556 = vpop.f32.mrf.mxu0
  %v4557 = vadd.f32 %v4544, %v4556
  %v4558 = vpop.f32.mrf.mxu0
  %4559 = vdwg.mxu0
  %4560 = vmatpush.bf16.msra.mxu0 %v1471
  %4561 = vmatpush.bf16.msra.mxu0 %v1459
  %4562 = vmatpush.bf16.msra.mxu0 %v1447
  %4563 = vmatpush.bf16.msra.mxu0 %v1435
  %4564 = vmatpush.bf16.msra.mxu0 %v1423
  %4565 = vmatpush.bf16.msra.mxu0 %v1411
  %4566 = vmatpush.bf16.msra.mxu0 %v1399
  %4567 = vmatpush.bf16.msra.mxu0 %v1387
  %4568 = vmatmul.bf16.gmra.mxu0 %v4143
  %v4569 = vpop.f32.mrf.mxu0
  %v4570 = vadd.f32 %v4557, %v4569
  %v4571 = vpop.f32.mrf.mxu0
  %4572 = vdwg.mxu0
  %4573 = vmatpush.bf16.msra.mxu0 %v1280
  %4574 = vmatpush.bf16.msra.mxu0 %v1268
  %4575 = vmatpush.bf16.msra.mxu0 %v1256
  %4576 = vmatpush.bf16.msra.mxu0 %v1244
  %4577 = vmatpush.bf16.msra.mxu0 %v1232
  %4578 = vmatpush.bf16.msra.mxu0 %v1220
  %4579 = vmatpush.bf16.msra.mxu0 %v1208
  %4580 = vmatpush.bf16.msra.mxu0 %v1196
  %4581 = vmatmul.bf16.gmra.mxu0 %v4141
  %v4582 = vpop.f32.mrf.mxu0
  %v4583 = vadd.f32 0.0, %v4582
  %v4584 = vpop.f32.mrf.mxu0
  %4585 = vdwg.mxu0
  %4586 = vmatpush.bf16.msra.mxu0 %v1376
  %4587 = vmatpush.bf16.msra.mxu0 %v1364
  %4588 = vmatpush.bf16.msra.mxu0 %v1352
  %4589 = vmatpush.bf16.msra.mxu0 %v1340
  %4590 = vmatpush.bf16.msra.mxu0 %v1328
  %4591 = vmatpush.bf16.msra.mxu0 %v1316
  %4592 = vmatpush.bf16.msra.mxu0 %v1304
  %4593 = vmatpush.bf16.msra.mxu0 %v1292
  %4594 = vmatmul.bf16.gmra.mxu0 %v4142
  %v4595 = vpop.f32.mrf.mxu0
  %v4596 = vadd.f32 %v4583, %v4595
  %v4597 = vpop.f32.mrf.mxu0
  %4598 = vdwg.mxu0
  %4599 = vmatpush.bf16.msra.mxu0 %v1472
  %4600 = vmatpush.bf16.msra.mxu0 %v1460
  %4601 = vmatpush.bf16.msra.mxu0 %v1448
  %4602 = vmatpush.bf16.msra.mxu0 %v1436
  %4603 = vmatpush.bf16.msra.mxu0 %v1424
  %4604 = vmatpush.bf16.msra.mxu0 %v1412
  %4605 = vmatpush.bf16.msra.mxu0 %v1400
  %4606 = vmatpush.bf16.msra.mxu0 %v1388
  %4607 = vmatmul.bf16.gmra.mxu0 %v4143
  %v4608 = vpop.f32.mrf.mxu0
  %v4609 = vadd.f32 %v4596, %v4608
  %v4610 = vpop.f32.mrf.mxu0
  %4611 = vdwg.mxu0
  %v4624 = vrot.slane %v4219, 6
  %v4625 = vrot.slane %v4258, 4
  %v4626 = vrot.slane %v4297, 2
  %v4627 = vrot.slane %v4375, 6
  %v4628 = vrot.slane %v4414, 4
  %v4629 = vrot.slane %v4453, 2
  %v4630 = vrot.slane %v4531, 6
  %v4631 = vrot.slane %v4570, 4
  %v4632 = vrot.slane %v4609, 2
  %v4633 = vsel %vm2250, %v4180, %v4624
  %v4634 = vsel %vm2252, %v4625, %v4626
  %v4635 = vsel %vm2254, %v4633, %v4634
  %v4636 = vsel %vm2250, %v4336, %v4627
  %v4637 = vsel %vm2252, %v4628, %v4629
  %v4638 = vsel %vm2254, %v4636, %v4637
  %v4639 = vsel %vm2250, %v4492, %v4630
  %v4640 = vsel %vm2252, %v4631, %v4632
  %v4641 = vsel %vm2254, %v4639, %v4640
  %v4645 = vadd.f32 %v4130, %v4635
  %v4646 = vadd.f32 %v4131, %v4638
  %v4647 = vadd.f32 %v4132, %v4641
  %v4648 = vxor.u32 %v4645, 2147483648
  %v4649 = vmul.f32 %v4648, 1.442695
  %v4650 = vpow.pop %v4649
  %v4651 = vadd.f32 %v4650, 1.0
  %v4652 = vrcp.pop %v4651
  %v4653 = vmul.f32 %v4651, %v4652
  %v4654 = vsub.f32 1.0, %v4653
  %v4655 = vmul.f32 %v4652, %v4654
  %v4656 = vadd.f32 %v4652, %v4655
  %vm4657 = vweird.f32 %v4651
  %vm4658 = vweird.f32 %v4652
  %vm4659 = vmor %vm4657, %vm4658
  %v4660 = vsel %vm4659, %v4652, %v4656
  %v4661 = vand.u32 2147483647, %v4651
  %vm4662 = vcmp.eq.f32.partialorder %v4661, 8.507059e+37
  %v4663 = vand.u32 %v4651, 2147483648
  %v4664 = vor.u32 1.1754944e-38, %v4663
  %v4665 = vsel %vm4662, %v4664, %v4660
  %v4666 = vmul.f32 1.0, %v4665
  %v4669 = vrot.slane %v4645, 6
  %v4670 = vrot.slane %v4646, 6
  %v4671 = vsel %vm2250, %v4669, %v4670
  %v4673 = vxor.u32 %v4671, 2147483648
  %v4674 = vmul.f32 %v4673, 1.442695
  %v4675 = vpow.pop %v4674
  %v4676 = vadd.f32 %v4675, 1.0
  %v4677 = vrcp.pop %v4676
  %v4678 = vmul.f32 %v4676, %v4677
  %v4679 = vsub.f32 1.0, %v4678
  %v4680 = vmul.f32 %v4677, %v4679
  %v4681 = vadd.f32 %v4677, %v4680
  %vm4682 = vweird.f32 %v4676
  %vm4683 = vweird.f32 %v4677
  %vm4684 = vmor %vm4682, %vm4683
  %v4685 = vsel %vm4684, %v4677, %v4681
  %v4686 = vand.u32 2147483647, %v4676
  %vm4687 = vcmp.eq.f32.partialorder %v4686, 8.507059e+37
  %v4688 = vand.u32 %v4676, 2147483648
  %v4689 = vor.u32 1.1754944e-38, %v4688
  %v4690 = vsel %vm4687, %v4689, %v4685
  %v4691 = vmul.f32 1.0, %v4690
  %v4693 = vrot.slane %v4646, 4
  %v4694 = vrot.slane %v4647, 4
  %v4695 = vsel %vm2254, %v4693, %v4694
  %v4697 = vtanh.pop %v4695
  %v4698 = vrot.slane %v4647, 2
  %v4700 = vxor.u32 %v4698, 2147483648
  %v4701 = vmul.f32 %v4700, 1.442695
  %v4702 = vpow.pop %v4701
  %v4703 = vadd.f32 %v4702, 1.0
  %v4704 = vrcp.pop %v4703
  %v4705 = vmul.f32 %v4703, %v4704
  %v4706 = vsub.f32 1.0, %v4705
  %v4707 = vmul.f32 %v4704, %v4706
  %v4708 = vadd.f32 %v4704, %v4707
  %vm4709 = vweird.f32 %v4703
  %vm4710 = vweird.f32 %v4704
  %vm4711 = vmor %vm4709, %vm4710
  %v4712 = vsel %vm4711, %v4704, %v4708
  %v4713 = vand.u32 2147483647, %v4703
  %vm4714 = vcmp.eq.f32.partialorder %v4713, 8.507059e+37
  %v4715 = vand.u32 %v4703, 2147483648
  %v4716 = vor.u32 1.1754944e-38, %v4715
  %v4717 = vsel %vm4714, %v4716, %v4712
  %v4718 = vmul.f32 1.0, %v4717
  %v4719 = vmul.f32 %v4691, %v4126
  %v4720 = vmul.f32 %v4666, %v4697
  %v4721 = vadd.f32 %v4719, %v4720
  %v4722 = vtanh.pop %v4721
  %v4723 = vmul.f32 %v4718, %v4722
  %s4724 = scalar_lea.vmem %s0, 120
  %v4725 = vld [vmem:[%s4724] sm:$0xff]
  %v4726 = vld [vmem:[%s4724 + $0x8] sm:$0xff]
  %v4727 = vld [vmem:[%s4724 + $0x10] sm:$0xff]
  %4729 = vst [vmem:[#allocation1] ss:$4 sm:$0xff] %v4723
  %v4730 = vld.sshfl [vmem:[#allocation1] sm:$0xff pattern:$0x73625140]
  %v4731 = vld.sshfl [vmem:[#allocation1 + $0x8] sm:$0xff pattern:$0x73625140]
  %v4732 = vld.sshfl [vmem:[#allocation1 + $0x10] sm:$0xff pattern:$0x73625140]
  %v4736 = vpack.c.bf16 %v4730, %v4730
  %v4737 = vpack.c.bf16 %v4731, %v4731
  %v4738 = vpack.c.bf16 %v4732, %v4732
  %4739 = vmatpush.bf16.msra.mxu0 %v1269
  %4740 = vmatpush.bf16.msra.mxu0 %v1257
  %4741 = vmatpush.bf16.msra.mxu0 %v1245
  %4742 = vmatpush.bf16.msra.mxu0 %v1233
  %4743 = vmatpush.bf16.msra.mxu0 %v1221
  %4744 = vmatpush.bf16.msra.mxu0 %v1209
  %4745 = vmatpush.bf16.msra.mxu0 %v1197
  %4746 = vmatpush.bf16.msra.mxu0 %v1185
  %4747 = vmatmul.bf16.gmra.mxu0 %v4736
  %v4748 = vpop.f32.mrf.mxu0
  %v4749 = vadd.f32 0.0, %v4748
  %v4750 = vpop.f32.mrf.mxu0
  %4751 = vdwg.mxu0
  %4752 = vmatpush.bf16.msra.mxu0 %v1365
  %4753 = vmatpush.bf16.msra.mxu0 %v1353
  %4754 = vmatpush.bf16.msra.mxu0 %v1341
  %4755 = vmatpush.bf16.msra.mxu0 %v1329
  %4756 = vmatpush.bf16.msra.mxu0 %v1317
  %4757 = vmatpush.bf16.msra.mxu0 %v1305
  %4758 = vmatpush.bf16.msra.mxu0 %v1293
  %4759 = vmatpush.bf16.msra.mxu0 %v1281
  %4760 = vmatmul.bf16.gmra.mxu0 %v4737
  %v4761 = vpop.f32.mrf.mxu0
  %v4762 = vadd.f32 %v4749, %v4761
  %v4763 = vpop.f32.mrf.mxu0
  %4764 = vdwg.mxu0
  %4765 = vmatpush.bf16.msra.mxu0 %v1461
  %4766 = vmatpush.bf16.msra.mxu0 %v1449
  %4767 = vmatpush.bf16.msra.mxu0 %v1437
  %4768 = vmatpush.bf16.msra.mxu0 %v1425
  %4769 = vmatpush.bf16.msra.mxu0 %v1413
  %4770 = vmatpush.bf16.msra.mxu0 %v1401
  %4771 = vmatpush.bf16.msra.mxu0 %v1389
  %4772 = vmatpush.bf16.msra.mxu0 %v1377
  %4773 = vmatmul.bf16.gmra.mxu0 %v4738
  %v4774 = vpop.f32.mrf.mxu0
  %v4775 = vadd.f32 %v4762, %v4774
  %v4776 = vpop.f32.mrf.mxu0
  %4777 = vdwg.mxu0
  %4778 = vmatpush.bf16.msra.mxu0 %v1270
  %4779 = vmatpush.bf16.msra.mxu0 %v1258
  %4780 = vmatpush.bf16.msra.mxu0 %v1246
  %4781 = vmatpush.bf16.msra.mxu0 %v1234
  %4782 = vmatpush.bf16.msra.mxu0 %v1222
  %4783 = vmatpush.bf16.msra.mxu0 %v1210
  %4784 = vmatpush.bf16.msra.mxu0 %v1198
  %4785 = vmatpush.bf16.msra.mxu0 %v1186
  %4786 = vmatmul.bf16.gmra.mxu0 %v4736
  %v4787 = vpop.f32.mrf.mxu0
  %v4788 = vadd.f32 0.0, %v4787
  %v4789 = vpop.f32.mrf.mxu0
  %4790 = vdwg.mxu0
  %4791 = vmatpush.bf16.msra.mxu0 %v1366
  %4792 = vmatpush.bf16.msra.mxu0 %v1354
  %4793 = vmatpush.bf16.msra.mxu0 %v1342
  %4794 = vmatpush.bf16.msra.mxu0 %v1330
  %4795 = vmatpush.bf16.msra.mxu0 %v1318
  %4796 = vmatpush.bf16.msra.mxu0 %v1306
  %4797 = vmatpush.bf16.msra.mxu0 %v1294
  %4798 = vmatpush.bf16.msra.mxu0 %v1282
  %4799 = vmatmul.bf16.gmra.mxu0 %v4737
  %v4800 = vpop.f32.mrf.mxu0
  %v4801 = vadd.f32 %v4788, %v4800
  %v4802 = vpop.f32.mrf.mxu0
  %4803 = vdwg.mxu0
  %4804 = vmatpush.bf16.msra.mxu0 %v1462
  %4805 = vmatpush.bf16.msra.mxu0 %v1450
  %4806 = vmatpush.bf16.msra.mxu0 %v1438
  %4807 = vmatpush.bf16.msra.mxu0 %v1426
  %4808 = vmatpush.bf16.msra.mxu0 %v1414
  %4809 = vmatpush.bf16.msra.mxu0 %v1402
  %4810 = vmatpush.bf16.msra.mxu0 %v1390
  %4811 = vmatpush.bf16.msra.mxu0 %v1378
  %4812 = vmatmul.bf16.gmra.mxu0 %v4738
  %v4813 = vpop.f32.mrf.mxu0
  %v4814 = vadd.f32 %v4801, %v4813
  %v4815 = vpop.f32.mrf.mxu0
  %4816 = vdwg.mxu0
  %4817 = vmatpush.bf16.msra.mxu0 %v1271
  %4818 = vmatpush.bf16.msra.mxu0 %v1259
  %4819 = vmatpush.bf16.msra.mxu0 %v1247
  %4820 = vmatpush.bf16.msra.mxu0 %v1235
  %4821 = vmatpush.bf16.msra.mxu0 %v1223
  %4822 = vmatpush.bf16.msra.mxu0 %v1211
  %4823 = vmatpush.bf16.msra.mxu0 %v1199
  %4824 = vmatpush.bf16.msra.mxu0 %v1187
  %4825 = vmatmul.bf16.gmra.mxu0 %v4736
  %v4826 = vpop.f32.mrf.mxu0
  %v4827 = vadd.f32 0.0, %v4826
  %v4828 = vpop.f32.mrf.mxu0
  %4829 = vdwg.mxu0
  %4830 = vmatpush.bf16.msra.mxu0 %v1367
  %4831 = vmatpush.bf16.msra.mxu0 %v1355
  %4832 = vmatpush.bf16.msra.mxu0 %v1343
  %4833 = vmatpush.bf16.msra.mxu0 %v1331
  %4834 = vmatpush.bf16.msra.mxu0 %v1319
  %4835 = vmatpush.bf16.msra.mxu0 %v1307
  %4836 = vmatpush.bf16.msra.mxu0 %v1295
  %4837 = vmatpush.bf16.msra.mxu0 %v1283
  %4838 = vmatmul.bf16.gmra.mxu0 %v4737
  %v4839 = vpop.f32.mrf.mxu0
  %v4840 = vadd.f32 %v4827, %v4839
  %v4841 = vpop.f32.mrf.mxu0
  %4842 = vdwg.mxu0
  %4843 = vmatpush.bf16.msra.mxu0 %v1463
  %4844 = vmatpush.bf16.msra.mxu0 %v1451
  %4845 = vmatpush.bf16.msra.mxu0 %v1439
  %4846 = vmatpush.bf16.msra.mxu0 %v1427
  %4847 = vmatpush.bf16.msra.mxu0 %v1415
  %4848 = vmatpush.bf16.msra.mxu0 %v1403
  %4849 = vmatpush.bf16.msra.mxu0 %v1391
  %4850 = vmatpush.bf16.msra.mxu0 %v1379
  %4851 = vmatmul.bf16.gmra.mxu0 %v4738
  %v4852 = vpop.f32.mrf.mxu0
  %v4853 = vadd.f32 %v4840, %v4852
  %v4854 = vpop.f32.mrf.mxu0
  %4855 = vdwg.mxu0
  %4856 = vmatpush.bf16.msra.mxu0 %v1272
  %4857 = vmatpush.bf16.msra.mxu0 %v1260
  %4858 = vmatpush.bf16.msra.mxu0 %v1248
  %4859 = vmatpush.bf16.msra.mxu0 %v1236
  %4860 = vmatpush.bf16.msra.mxu0 %v1224
  %4861 = vmatpush.bf16.msra.mxu0 %v1212
  %4862 = vmatpush.bf16.msra.mxu0 %v1200
  %4863 = vmatpush.bf16.msra.mxu0 %v1188
  %4864 = vmatmul.bf16.gmra.mxu0 %v4736
  %v4865 = vpop.f32.mrf.mxu0
  %v4866 = vadd.f32 0.0, %v4865
  %v4867 = vpop.f32.mrf.mxu0
  %4868 = vdwg.mxu0
  %4869 = vmatpush.bf16.msra.mxu0 %v1368
  %4870 = vmatpush.bf16.msra.mxu0 %v1356
  %4871 = vmatpush.bf16.msra.mxu0 %v1344
  %4872 = vmatpush.bf16.msra.mxu0 %v1332
  %4873 = vmatpush.bf16.msra.mxu0 %v1320
  %4874 = vmatpush.bf16.msra.mxu0 %v1308
  %4875 = vmatpush.bf16.msra.mxu0 %v1296
  %4876 = vmatpush.bf16.msra.mxu0 %v1284
  %4877 = vmatmul.bf16.gmra.mxu0 %v4737
  %v4878 = vpop.f32.mrf.mxu0
  %v4879 = vadd.f32 %v4866, %v4878
  %v4880 = vpop.f32.mrf.mxu0
  %4881 = vdwg.mxu0
  %4882 = vmatpush.bf16.msra.mxu0 %v1464
  %4883 = vmatpush.bf16.msra.mxu0 %v1452
  %4884 = vmatpush.bf16.msra.mxu0 %v1440
  %4885 = vmatpush.bf16.msra.mxu0 %v1428
  %4886 = vmatpush.bf16.msra.mxu0 %v1416
  %4887 = vmatpush.bf16.msra.mxu0 %v1404
  %4888 = vmatpush.bf16.msra.mxu0 %v1392
  %4889 = vmatpush.bf16.msra.mxu0 %v1380
  %4890 = vmatmul.bf16.gmra.mxu0 %v4738
  %v4891 = vpop.f32.mrf.mxu0
  %v4892 = vadd.f32 %v4879, %v4891
  %v4893 = vpop.f32.mrf.mxu0
  %4894 = vdwg.mxu0
  %4895 = vmatpush.bf16.msra.mxu0 %v1273
  %4896 = vmatpush.bf16.msra.mxu0 %v1261
  %4897 = vmatpush.bf16.msra.mxu0 %v1249
  %4898 = vmatpush.bf16.msra.mxu0 %v1237
  %4899 = vmatpush.bf16.msra.mxu0 %v1225
  %4900 = vmatpush.bf16.msra.mxu0 %v1213
  %4901 = vmatpush.bf16.msra.mxu0 %v1201
  %4902 = vmatpush.bf16.msra.mxu0 %v1189
  %4903 = vmatmul.bf16.gmra.mxu0 %v4736
  %v4904 = vpop.f32.mrf.mxu0
  %v4905 = vadd.f32 0.0, %v4904
  %v4906 = vpop.f32.mrf.mxu0
  %4907 = vdwg.mxu0
  %4908 = vmatpush.bf16.msra.mxu0 %v1369
  %4909 = vmatpush.bf16.msra.mxu0 %v1357
  %4910 = vmatpush.bf16.msra.mxu0 %v1345
  %4911 = vmatpush.bf16.msra.mxu0 %v1333
  %4912 = vmatpush.bf16.msra.mxu0 %v1321
  %4913 = vmatpush.bf16.msra.mxu0 %v1309
  %4914 = vmatpush.bf16.msra.mxu0 %v1297
  %4915 = vmatpush.bf16.msra.mxu0 %v1285
  %4916 = vmatmul.bf16.gmra.mxu0 %v4737
  %v4917 = vpop.f32.mrf.mxu0
  %v4918 = vadd.f32 %v4905, %v4917
  %v4919 = vpop.f32.mrf.mxu0
  %4920 = vdwg.mxu0
  %4921 = vmatpush.bf16.msra.mxu0 %v1465
  %4922 = vmatpush.bf16.msra.mxu0 %v1453
  %4923 = vmatpush.bf16.msra.mxu0 %v1441
  %4924 = vmatpush.bf16.msra.mxu0 %v1429
  %4925 = vmatpush.bf16.msra.mxu0 %v1417
  %4926 = vmatpush.bf16.msra.mxu0 %v1405
  %4927 = vmatpush.bf16.msra.mxu0 %v1393
  %4928 = vmatpush.bf16.msra.mxu0 %v1381
  %4929 = vmatmul.bf16.gmra.mxu0 %v4738
  %v4930 = vpop.f32.mrf.mxu0
  %v4931 = vadd.f32 %v4918, %v4930
  %v4932 = vpop.f32.mrf.mxu0
  %4933 = vdwg.mxu0
  %4934 = vmatpush.bf16.msra.mxu0 %v1274
  %4935 = vmatpush.bf16.msra.mxu0 %v1262
  %4936 = vmatpush.bf16.msra.mxu0 %v1250
  %4937 = vmatpush.bf16.msra.mxu0 %v1238
  %4938 = vmatpush.bf16.msra.mxu0 %v1226
  %4939 = vmatpush.bf16.msra.mxu0 %v1214
  %4940 = vmatpush.bf16.msra.mxu0 %v1202
  %4941 = vmatpush.bf16.msra.mxu0 %v1190
  %4942 = vmatmul.bf16.gmra.mxu0 %v4736
  %v4943 = vpop.f32.mrf.mxu0
  %v4944 = vadd.f32 0.0, %v4943
  %v4945 = vpop.f32.mrf.mxu0
  %4946 = vdwg.mxu0
  %4947 = vmatpush.bf16.msra.mxu0 %v1370
  %4948 = vmatpush.bf16.msra.mxu0 %v1358
  %4949 = vmatpush.bf16.msra.mxu0 %v1346
  %4950 = vmatpush.bf16.msra.mxu0 %v1334
  %4951 = vmatpush.bf16.msra.mxu0 %v1322
  %4952 = vmatpush.bf16.msra.mxu0 %v1310
  %4953 = vmatpush.bf16.msra.mxu0 %v1298
  %4954 = vmatpush.bf16.msra.mxu0 %v1286
  %4955 = vmatmul.bf16.gmra.mxu0 %v4737
  %v4956 = vpop.f32.mrf.mxu0
  %v4957 = vadd.f32 %v4944, %v4956
  %v4958 = vpop.f32.mrf.mxu0
  %4959 = vdwg.mxu0
  %4960 = vmatpush.bf16.msra.mxu0 %v1466
  %4961 = vmatpush.bf16.msra.mxu0 %v1454
  %4962 = vmatpush.bf16.msra.mxu0 %v1442
  %4963 = vmatpush.bf16.msra.mxu0 %v1430
  %4964 = vmatpush.bf16.msra.mxu0 %v1418
  %4965 = vmatpush.bf16.msra.mxu0 %v1406
  %4966 = vmatpush.bf16.msra.mxu0 %v1394
  %4967 = vmatpush.bf16.msra.mxu0 %v1382
  %4968 = vmatmul.bf16.gmra.mxu0 %v4738
  %v4969 = vpop.f32.mrf.mxu0
  %v4970 = vadd.f32 %v4957, %v4969
  %v4971 = vpop.f32.mrf.mxu0
  %4972 = vdwg.mxu0
  %4973 = vmatpush.bf16.msra.mxu0 %v1275
  %4974 = vmatpush.bf16.msra.mxu0 %v1263
  %4975 = vmatpush.bf16.msra.mxu0 %v1251
  %4976 = vmatpush.bf16.msra.mxu0 %v1239
  %4977 = vmatpush.bf16.msra.mxu0 %v1227
  %4978 = vmatpush.bf16.msra.mxu0 %v1215
  %4979 = vmatpush.bf16.msra.mxu0 %v1203
  %4980 = vmatpush.bf16.msra.mxu0 %v1191
  %4981 = vmatmul.bf16.gmra.mxu0 %v4736
  %v4982 = vpop.f32.mrf.mxu0
  %v4983 = vadd.f32 0.0, %v4982
  %v4984 = vpop.f32.mrf.mxu0
  %4985 = vdwg.mxu0
  %4986 = vmatpush.bf16.msra.mxu0 %v1371
  %4987 = vmatpush.bf16.msra.mxu0 %v1359
  %4988 = vmatpush.bf16.msra.mxu0 %v1347
  %4989 = vmatpush.bf16.msra.mxu0 %v1335
  %4990 = vmatpush.bf16.msra.mxu0 %v1323
  %4991 = vmatpush.bf16.msra.mxu0 %v1311
  %4992 = vmatpush.bf16.msra.mxu0 %v1299
  %4993 = vmatpush.bf16.msra.mxu0 %v1287
  %4994 = vmatmul.bf16.gmra.mxu0 %v4737
  %v4995 = vpop.f32.mrf.mxu0
  %v4996 = vadd.f32 %v4983, %v4995
  %v4997 = vpop.f32.mrf.mxu0
  %4998 = vdwg.mxu0
  %4999 = vmatpush.bf16.msra.mxu0 %v1467
  %5000 = vmatpush.bf16.msra.mxu0 %v1455
  %5001 = vmatpush.bf16.msra.mxu0 %v1443
  %5002 = vmatpush.bf16.msra.mxu0 %v1431
  %5003 = vmatpush.bf16.msra.mxu0 %v1419
  %5004 = vmatpush.bf16.msra.mxu0 %v1407
  %5005 = vmatpush.bf16.msra.mxu0 %v1395
  %5006 = vmatpush.bf16.msra.mxu0 %v1383
  %5007 = vmatmul.bf16.gmra.mxu0 %v4738
  %v5008 = vpop.f32.mrf.mxu0
  %v5009 = vadd.f32 %v4996, %v5008
  %v5010 = vpop.f32.mrf.mxu0
  %5011 = vdwg.mxu0
  %5012 = vmatpush.bf16.msra.mxu0 %v1276
  %5013 = vmatpush.bf16.msra.mxu0 %v1264
  %5014 = vmatpush.bf16.msra.mxu0 %v1252
  %5015 = vmatpush.bf16.msra.mxu0 %v1240
  %5016 = vmatpush.bf16.msra.mxu0 %v1228
  %5017 = vmatpush.bf16.msra.mxu0 %v1216
  %5018 = vmatpush.bf16.msra.mxu0 %v1204
  %5019 = vmatpush.bf16.msra.mxu0 %v1192
  %5020 = vmatmul.bf16.gmra.mxu0 %v4736
  %v5021 = vpop.f32.mrf.mxu0
  %v5022 = vadd.f32 0.0, %v5021
  %v5023 = vpop.f32.mrf.mxu0
  %5024 = vdwg.mxu0
  %5025 = vmatpush.bf16.msra.mxu0 %v1372
  %5026 = vmatpush.bf16.msra.mxu0 %v1360
  %5027 = vmatpush.bf16.msra.mxu0 %v1348
  %5028 = vmatpush.bf16.msra.mxu0 %v1336
  %5029 = vmatpush.bf16.msra.mxu0 %v1324
  %5030 = vmatpush.bf16.msra.mxu0 %v1312
  %5031 = vmatpush.bf16.msra.mxu0 %v1300
  %5032 = vmatpush.bf16.msra.mxu0 %v1288
  %5033 = vmatmul.bf16.gmra.mxu0 %v4737
  %v5034 = vpop.f32.mrf.mxu0
  %v5035 = vadd.f32 %v5022, %v5034
  %v5036 = vpop.f32.mrf.mxu0
  %5037 = vdwg.mxu0
  %5038 = vmatpush.bf16.msra.mxu0 %v1468
  %5039 = vmatpush.bf16.msra.mxu0 %v1456
  %5040 = vmatpush.bf16.msra.mxu0 %v1444
  %5041 = vmatpush.bf16.msra.mxu0 %v1432
  %5042 = vmatpush.bf16.msra.mxu0 %v1420
  %5043 = vmatpush.bf16.msra.mxu0 %v1408
  %5044 = vmatpush.bf16.msra.mxu0 %v1396
  %5045 = vmatpush.bf16.msra.mxu0 %v1384
  %5046 = vmatmul.bf16.gmra.mxu0 %v4738
  %v5047 = vpop.f32.mrf.mxu0
  %v5048 = vadd.f32 %v5035, %v5047
  %v5049 = vpop.f32.mrf.mxu0
  %5050 = vdwg.mxu0
  %5051 = vmatpush.bf16.msra.mxu0 %v1277
  %5052 = vmatpush.bf16.msra.mxu0 %v1265
  %5053 = vmatpush.bf16.msra.mxu0 %v1253
  %5054 = vmatpush.bf16.msra.mxu0 %v1241
  %5055 = vmatpush.bf16.msra.mxu0 %v1229
  %5056 = vmatpush.bf16.msra.mxu0 %v1217
  %5057 = vmatpush.bf16.msra.mxu0 %v1205
  %5058 = vmatpush.bf16.msra.mxu0 %v1193
  %5059 = vmatmul.bf16.gmra.mxu0 %v4736
  %v5060 = vpop.f32.mrf.mxu0
  %v5061 = vadd.f32 0.0, %v5060
  %v5062 = vpop.f32.mrf.mxu0
  %5063 = vdwg.mxu0
  %5064 = vmatpush.bf16.msra.mxu0 %v1373
  %5065 = vmatpush.bf16.msra.mxu0 %v1361
  %5066 = vmatpush.bf16.msra.mxu0 %v1349
  %5067 = vmatpush.bf16.msra.mxu0 %v1337
  %5068 = vmatpush.bf16.msra.mxu0 %v1325
  %5069 = vmatpush.bf16.msra.mxu0 %v1313
  %5070 = vmatpush.bf16.msra.mxu0 %v1301
  %5071 = vmatpush.bf16.msra.mxu0 %v1289
  %5072 = vmatmul.bf16.gmra.mxu0 %v4737
  %v5073 = vpop.f32.mrf.mxu0
  %v5074 = vadd.f32 %v5061, %v5073
  %v5075 = vpop.f32.mrf.mxu0
  %5076 = vdwg.mxu0
  %5077 = vmatpush.bf16.msra.mxu0 %v1469
  %5078 = vmatpush.bf16.msra.mxu0 %v1457
  %5079 = vmatpush.bf16.msra.mxu0 %v1445
  %5080 = vmatpush.bf16.msra.mxu0 %v1433
  %5081 = vmatpush.bf16.msra.mxu0 %v1421
  %5082 = vmatpush.bf16.msra.mxu0 %v1409
  %5083 = vmatpush.bf16.msra.mxu0 %v1397
  %5084 = vmatpush.bf16.msra.mxu0 %v1385
  %5085 = vmatmul.bf16.gmra.mxu0 %v4738
  %v5086 = vpop.f32.mrf.mxu0
  %v5087 = vadd.f32 %v5074, %v5086
  %v5088 = vpop.f32.mrf.mxu0
  %5089 = vdwg.mxu0
  %5090 = vmatpush.bf16.msra.mxu0 %v1278
  %5091 = vmatpush.bf16.msra.mxu0 %v1266
  %5092 = vmatpush.bf16.msra.mxu0 %v1254
  %5093 = vmatpush.bf16.msra.mxu0 %v1242
  %5094 = vmatpush.bf16.msra.mxu0 %v1230
  %5095 = vmatpush.bf16.msra.mxu0 %v1218
  %5096 = vmatpush.bf16.msra.mxu0 %v1206
  %5097 = vmatpush.bf16.msra.mxu0 %v1194
  %5098 = vmatmul.bf16.gmra.mxu0 %v4736
  %v5099 = vpop.f32.mrf.mxu0
  %v5100 = vadd.f32 0.0, %v5099
  %v5101 = vpop.f32.mrf.mxu0
  %5102 = vdwg.mxu0
  %5103 = vmatpush.bf16.msra.mxu0 %v1374
  %5104 = vmatpush.bf16.msra.mxu0 %v1362
  %5105 = vmatpush.bf16.msra.mxu0 %v1350
  %5106 = vmatpush.bf16.msra.mxu0 %v1338
  %5107 = vmatpush.bf16.msra.mxu0 %v1326
  %5108 = vmatpush.bf16.msra.mxu0 %v1314
  %5109 = vmatpush.bf16.msra.mxu0 %v1302
  %5110 = vmatpush.bf16.msra.mxu0 %v1290
  %5111 = vmatmul.bf16.gmra.mxu0 %v4737
  %v5112 = vpop.f32.mrf.mxu0
  %v5113 = vadd.f32 %v5100, %v5112
  %v5114 = vpop.f32.mrf.mxu0
  %5115 = vdwg.mxu0
  %5116 = vmatpush.bf16.msra.mxu0 %v1470
  %5117 = vmatpush.bf16.msra.mxu0 %v1458
  %5118 = vmatpush.bf16.msra.mxu0 %v1446
  %5119 = vmatpush.bf16.msra.mxu0 %v1434
  %5120 = vmatpush.bf16.msra.mxu0 %v1422
  %5121 = vmatpush.bf16.msra.mxu0 %v1410
  %5122 = vmatpush.bf16.msra.mxu0 %v1398
  %5123 = vmatpush.bf16.msra.mxu0 %v1386
  %5124 = vmatmul.bf16.gmra.mxu0 %v4738
  %v5125 = vpop.f32.mrf.mxu0
  %v5126 = vadd.f32 %v5113, %v5125
  %v5127 = vpop.f32.mrf.mxu0
  %5128 = vdwg.mxu0
  %5129 = vmatpush.bf16.msra.mxu0 %v1279
  %5130 = vmatpush.bf16.msra.mxu0 %v1267
  %5131 = vmatpush.bf16.msra.mxu0 %v1255
  %5132 = vmatpush.bf16.msra.mxu0 %v1243
  %5133 = vmatpush.bf16.msra.mxu0 %v1231
  %5134 = vmatpush.bf16.msra.mxu0 %v1219
  %5135 = vmatpush.bf16.msra.mxu0 %v1207
  %5136 = vmatpush.bf16.msra.mxu0 %v1195
  %5137 = vmatmul.bf16.gmra.mxu0 %v4736
  %v5138 = vpop.f32.mrf.mxu0
  %v5139 = vadd.f32 0.0, %v5138
  %v5140 = vpop.f32.mrf.mxu0
  %5141 = vdwg.mxu0
  %5142 = vmatpush.bf16.msra.mxu0 %v1375
  %5143 = vmatpush.bf16.msra.mxu0 %v1363
  %5144 = vmatpush.bf16.msra.mxu0 %v1351
  %5145 = vmatpush.bf16.msra.mxu0 %v1339
  %5146 = vmatpush.bf16.msra.mxu0 %v1327
  %5147 = vmatpush.bf16.msra.mxu0 %v1315
  %5148 = vmatpush.bf16.msra.mxu0 %v1303
  %5149 = vmatpush.bf16.msra.mxu0 %v1291
  %5150 = vmatmul.bf16.gmra.mxu0 %v4737
  %v5151 = vpop.f32.mrf.mxu0
  %v5152 = vadd.f32 %v5139, %v5151
  %v5153 = vpop.f32.mrf.mxu0
  %5154 = vdwg.mxu0
  %5155 = vmatpush.bf16.msra.mxu0 %v1471
  %5156 = vmatpush.bf16.msra.mxu0 %v1459
  %5157 = vmatpush.bf16.msra.mxu0 %v1447
  %5158 = vmatpush.bf16.msra.mxu0 %v1435
  %5159 = vmatpush.bf16.msra.mxu0 %v1423
  %5160 = vmatpush.bf16.msra.mxu0 %v1411
  %5161 = vmatpush.bf16.msra.mxu0 %v1399
  %5162 = vmatpush.bf16.msra.mxu0 %v1387
  %5163 = vmatmul.bf16.gmra.mxu0 %v4738
  %v5164 = vpop.f32.mrf.mxu0
  %v5165 = vadd.f32 %v5152, %v5164
  %v5166 = vpop.f32.mrf.mxu0
  %5167 = vdwg.mxu0
  %5168 = vmatpush.bf16.msra.mxu0 %v1280
  %5169 = vmatpush.bf16.msra.mxu0 %v1268
  %5170 = vmatpush.bf16.msra.mxu0 %v1256
  %5171 = vmatpush.bf16.msra.mxu0 %v1244
  %5172 = vmatpush.bf16.msra.mxu0 %v1232
  %5173 = vmatpush.bf16.msra.mxu0 %v1220
  %5174 = vmatpush.bf16.msra.mxu0 %v1208
  %5175 = vmatpush.bf16.msra.mxu0 %v1196
  %5176 = vmatmul.bf16.gmra.mxu0 %v4736
  %v5177 = vpop.f32.mrf.mxu0
  %v5178 = vadd.f32 0.0, %v5177
  %v5179 = vpop.f32.mrf.mxu0
  %5180 = vdwg.mxu0
  %5181 = vmatpush.bf16.msra.mxu0 %v1376
  %5182 = vmatpush.bf16.msra.mxu0 %v1364
  %5183 = vmatpush.bf16.msra.mxu0 %v1352
  %5184 = vmatpush.bf16.msra.mxu0 %v1340
  %5185 = vmatpush.bf16.msra.mxu0 %v1328
  %5186 = vmatpush.bf16.msra.mxu0 %v1316
  %5187 = vmatpush.bf16.msra.mxu0 %v1304
  %5188 = vmatpush.bf16.msra.mxu0 %v1292
  %5189 = vmatmul.bf16.gmra.mxu0 %v4737
  %v5190 = vpop.f32.mrf.mxu0
  %v5191 = vadd.f32 %v5178, %v5190
  %v5192 = vpop.f32.mrf.mxu0
  %5193 = vdwg.mxu0
  %5194 = vmatpush.bf16.msra.mxu0 %v1472
  %5195 = vmatpush.bf16.msra.mxu0 %v1460
  %5196 = vmatpush.bf16.msra.mxu0 %v1448
  %5197 = vmatpush.bf16.msra.mxu0 %v1436
  %5198 = vmatpush.bf16.msra.mxu0 %v1424
  %5199 = vmatpush.bf16.msra.mxu0 %v1412
  %5200 = vmatpush.bf16.msra.mxu0 %v1400
  %5201 = vmatpush.bf16.msra.mxu0 %v1388
  %5202 = vmatmul.bf16.gmra.mxu0 %v4738
  %v5203 = vpop.f32.mrf.mxu0
  %v5204 = vadd.f32 %v5191, %v5203
  %v5205 = vpop.f32.mrf.mxu0
  %5206 = vdwg.mxu0
  %v5219 = vrot.slane %v4814, 6
  %v5220 = vrot.slane %v4853, 4
  %v5221 = vrot.slane %v4892, 2
  %v5222 = vrot.slane %v4970, 6
  %v5223 = vrot.slane %v5009, 4
  %v5224 = vrot.slane %v5048, 2
  %v5225 = vrot.slane %v5126, 6
  %v5226 = vrot.slane %v5165, 4
  %v5227 = vrot.slane %v5204, 2
  %v5228 = vsel %vm2250, %v4775, %v5219
  %v5229 = vsel %vm2252, %v5220, %v5221
  %v5230 = vsel %vm2254, %v5228, %v5229
  %v5231 = vsel %vm2250, %v4931, %v5222
  %v5232 = vsel %vm2252, %v5223, %v5224
  %v5233 = vsel %vm2254, %v5231, %v5232
  %v5234 = vsel %vm2250, %v5087, %v5225
  %v5235 = vsel %vm2252, %v5226, %v5227
  %v5236 = vsel %vm2254, %v5234, %v5235
  %v5240 = vadd.f32 %v4725, %v5230
  %v5241 = vadd.f32 %v4726, %v5233
  %v5242 = vadd.f32 %v4727, %v5236
  %v5243 = vxor.u32 %v5240, 2147483648
  %v5244 = vmul.f32 %v5243, 1.442695
  %v5245 = vpow.pop %v5244
  %v5246 = vadd.f32 %v5245, 1.0
  %v5247 = vrcp.pop %v5246
  %v5248 = vmul.f32 %v5246, %v5247
  %v5249 = vsub.f32 1.0, %v5248
  %v5250 = vmul.f32 %v5247, %v5249
  %v5251 = vadd.f32 %v5247, %v5250
  %vm5252 = vweird.f32 %v5246
  %vm5253 = vweird.f32 %v5247
  %vm5254 = vmor %vm5252, %vm5253
  %v5255 = vsel %vm5254, %v5247, %v5251
  %v5256 = vand.u32 2147483647, %v5246
  %vm5257 = vcmp.eq.f32.partialorder %v5256, 8.507059e+37
  %v5258 = vand.u32 %v5246, 2147483648
  %v5259 = vor.u32 1.1754944e-38, %v5258
  %v5260 = vsel %vm5257, %v5259, %v5255
  %v5261 = vmul.f32 1.0, %v5260
  %v5264 = vrot.slane %v5240, 6
  %v5265 = vrot.slane %v5241, 6
  %v5266 = vsel %vm2250, %v5264, %v5265
  %v5268 = vxor.u32 %v5266, 2147483648
  %v5269 = vmul.f32 %v5268, 1.442695
  %v5270 = vpow.pop %v5269
  %v5271 = vadd.f32 %v5270, 1.0
  %v5272 = vrcp.pop %v5271
  %v5273 = vmul.f32 %v5271, %v5272
  %v5274 = vsub.f32 1.0, %v5273
  %v5275 = vmul.f32 %v5272, %v5274
  %v5276 = vadd.f32 %v5272, %v5275
  %vm5277 = vweird.f32 %v5271
  %vm5278 = vweird.f32 %v5272
  %vm5279 = vmor %vm5277, %vm5278
  %v5280 = vsel %vm5279, %v5272, %v5276
  %v5281 = vand.u32 2147483647, %v5271
  %vm5282 = vcmp.eq.f32.partialorder %v5281, 8.507059e+37
  %v5283 = vand.u32 %v5271, 2147483648
  %v5284 = vor.u32 1.1754944e-38, %v5283
  %v5285 = vsel %vm5282, %v5284, %v5280
  %v5286 = vmul.f32 1.0, %v5285
  %v5288 = vrot.slane %v5241, 4
  %v5289 = vrot.slane %v5242, 4
  %v5290 = vsel %vm2254, %v5288, %v5289
  %v5292 = vtanh.pop %v5290
  %v5293 = vrot.slane %v5242, 2
  %v5295 = vxor.u32 %v5293, 2147483648
  %v5296 = vmul.f32 %v5295, 1.442695
  %v5297 = vpow.pop %v5296
  %v5298 = vadd.f32 %v5297, 1.0
  %v5299 = vrcp.pop %v5298
  %v5300 = vmul.f32 %v5298, %v5299
  %v5301 = vsub.f32 1.0, %v5300
  %v5302 = vmul.f32 %v5299, %v5301
  %v5303 = vadd.f32 %v5299, %v5302
  %vm5304 = vweird.f32 %v5298
  %vm5305 = vweird.f32 %v5299
  %vm5306 = vmor %vm5304, %vm5305
  %v5307 = vsel %vm5306, %v5299, %v5303
  %v5308 = vand.u32 2147483647, %v5298
  %vm5309 = vcmp.eq.f32.partialorder %v5308, 8.507059e+37
  %v5310 = vand.u32 %v5298, 2147483648
  %v5311 = vor.u32 1.1754944e-38, %v5310
  %v5312 = vsel %vm5309, %v5311, %v5307
  %v5313 = vmul.f32 1.0, %v5312
  %v5314 = vmul.f32 %v5286, %v4721
  %v5315 = vmul.f32 %v5261, %v5292
  %v5316 = vadd.f32 %v5314, %v5315
  %v5317 = vtanh.pop %v5316
  %v5318 = vmul.f32 %v5313, %v5317
  %s5319 = scalar_lea.vmem %s0, 144
  %v5320 = vld [vmem:[%s5319] sm:$0xff]
  %v5321 = vld [vmem:[%s5319 + $0x8] sm:$0xff]
  %v5322 = vld [vmem:[%s5319 + $0x10] sm:$0xff]
  %5324 = vst [vmem:[#allocation1] ss:$4 sm:$0xff] %v5318
  %v5325 = vld.sshfl [vmem:[#allocation1] sm:$0xff pattern:$0x73625140]
  %v5326 = vld.sshfl [vmem:[#allocation1 + $0x8] sm:$0xff pattern:$0x73625140]
  %v5327 = vld.sshfl [vmem:[#allocation1 + $0x10] sm:$0xff pattern:$0x73625140]
  %v5331 = vpack.c.bf16 %v5325, %v5325
  %v5332 = vpack.c.bf16 %v5326, %v5326
  %v5333 = vpack.c.bf16 %v5327, %v5327
  %5334 = vmatpush.bf16.msra.mxu0 %v1269
  %5335 = vmatpush.bf16.msra.mxu0 %v1257
  %5336 = vmatpush.bf16.msra.mxu0 %v1245
  %5337 = vmatpush.bf16.msra.mxu0 %v1233
  %5338 = vmatpush.bf16.msra.mxu0 %v1221
  %5339 = vmatpush.bf16.msra.mxu0 %v1209
  %5340 = vmatpush.bf16.msra.mxu0 %v1197
  %5341 = vmatpush.bf16.msra.mxu0 %v1185
  %5342 = vmatmul.bf16.gmra.mxu0 %v5331
  %v5343 = vpop.f32.mrf.mxu0
  %v5344 = vadd.f32 0.0, %v5343
  %v5345 = vpop.f32.mrf.mxu0
  %5346 = vdwg.mxu0
  %5347 = vmatpush.bf16.msra.mxu0 %v1365
  %5348 = vmatpush.bf16.msra.mxu0 %v1353
  %5349 = vmatpush.bf16.msra.mxu0 %v1341
  %5350 = vmatpush.bf16.msra.mxu0 %v1329
  %5351 = vmatpush.bf16.msra.mxu0 %v1317
  %5352 = vmatpush.bf16.msra.mxu0 %v1305
  %5353 = vmatpush.bf16.msra.mxu0 %v1293
  %5354 = vmatpush.bf16.msra.mxu0 %v1281
  %5355 = vmatmul.bf16.gmra.mxu0 %v5332
  %v5356 = vpop.f32.mrf.mxu0
  %v5357 = vadd.f32 %v5344, %v5356
  %v5358 = vpop.f32.mrf.mxu0
  %5359 = vdwg.mxu0
  %5360 = vmatpush.bf16.msra.mxu0 %v1461
  %5361 = vmatpush.bf16.msra.mxu0 %v1449
  %5362 = vmatpush.bf16.msra.mxu0 %v1437
  %5363 = vmatpush.bf16.msra.mxu0 %v1425
  %5364 = vmatpush.bf16.msra.mxu0 %v1413
  %5365 = vmatpush.bf16.msra.mxu0 %v1401
  %5366 = vmatpush.bf16.msra.mxu0 %v1389
  %5367 = vmatpush.bf16.msra.mxu0 %v1377
  %5368 = vmatmul.bf16.gmra.mxu0 %v5333
  %v5369 = vpop.f32.mrf.mxu0
  %v5370 = vadd.f32 %v5357, %v5369
  %v5371 = vpop.f32.mrf.mxu0
  %5372 = vdwg.mxu0
  %5373 = vmatpush.bf16.msra.mxu0 %v1270
  %5374 = vmatpush.bf16.msra.mxu0 %v1258
  %5375 = vmatpush.bf16.msra.mxu0 %v1246
  %5376 = vmatpush.bf16.msra.mxu0 %v1234
  %5377 = vmatpush.bf16.msra.mxu0 %v1222
  %5378 = vmatpush.bf16.msra.mxu0 %v1210
  %5379 = vmatpush.bf16.msra.mxu0 %v1198
  %5380 = vmatpush.bf16.msra.mxu0 %v1186
  %5381 = vmatmul.bf16.gmra.mxu0 %v5331
  %v5382 = vpop.f32.mrf.mxu0
  %v5383 = vadd.f32 0.0, %v5382
  %v5384 = vpop.f32.mrf.mxu0
  %5385 = vdwg.mxu0
  %5386 = vmatpush.bf16.msra.mxu0 %v1366
  %5387 = vmatpush.bf16.msra.mxu0 %v1354
  %5388 = vmatpush.bf16.msra.mxu0 %v1342
  %5389 = vmatpush.bf16.msra.mxu0 %v1330
  %5390 = vmatpush.bf16.msra.mxu0 %v1318
  %5391 = vmatpush.bf16.msra.mxu0 %v1306
  %5392 = vmatpush.bf16.msra.mxu0 %v1294
  %5393 = vmatpush.bf16.msra.mxu0 %v1282
  %5394 = vmatmul.bf16.gmra.mxu0 %v5332
  %v5395 = vpop.f32.mrf.mxu0
  %v5396 = vadd.f32 %v5383, %v5395
  %v5397 = vpop.f32.mrf.mxu0
  %5398 = vdwg.mxu0
  %5399 = vmatpush.bf16.msra.mxu0 %v1462
  %5400 = vmatpush.bf16.msra.mxu0 %v1450
  %5401 = vmatpush.bf16.msra.mxu0 %v1438
  %5402 = vmatpush.bf16.msra.mxu0 %v1426
  %5403 = vmatpush.bf16.msra.mxu0 %v1414
  %5404 = vmatpush.bf16.msra.mxu0 %v1402
  %5405 = vmatpush.bf16.msra.mxu0 %v1390
  %5406 = vmatpush.bf16.msra.mxu0 %v1378
  %5407 = vmatmul.bf16.gmra.mxu0 %v5333
  %v5408 = vpop.f32.mrf.mxu0
  %v5409 = vadd.f32 %v5396, %v5408
  %v5410 = vpop.f32.mrf.mxu0
  %5411 = vdwg.mxu0
  %5412 = vmatpush.bf16.msra.mxu0 %v1271
  %5413 = vmatpush.bf16.msra.mxu0 %v1259
  %5414 = vmatpush.bf16.msra.mxu0 %v1247
  %5415 = vmatpush.bf16.msra.mxu0 %v1235
  %5416 = vmatpush.bf16.msra.mxu0 %v1223
  %5417 = vmatpush.bf16.msra.mxu0 %v1211
  %5418 = vmatpush.bf16.msra.mxu0 %v1199
  %5419 = vmatpush.bf16.msra.mxu0 %v1187
  %5420 = vmatmul.bf16.gmra.mxu0 %v5331
  %v5421 = vpop.f32.mrf.mxu0
  %v5422 = vadd.f32 0.0, %v5421
  %v5423 = vpop.f32.mrf.mxu0
  %5424 = vdwg.mxu0
  %5425 = vmatpush.bf16.msra.mxu0 %v1367
  %5426 = vmatpush.bf16.msra.mxu0 %v1355
  %5427 = vmatpush.bf16.msra.mxu0 %v1343
  %5428 = vmatpush.bf16.msra.mxu0 %v1331
  %5429 = vmatpush.bf16.msra.mxu0 %v1319
  %5430 = vmatpush.bf16.msra.mxu0 %v1307
  %5431 = vmatpush.bf16.msra.mxu0 %v1295
  %5432 = vmatpush.bf16.msra.mxu0 %v1283
  %5433 = vmatmul.bf16.gmra.mxu0 %v5332
  %v5434 = vpop.f32.mrf.mxu0
  %v5435 = vadd.f32 %v5422, %v5434
  %v5436 = vpop.f32.mrf.mxu0
  %5437 = vdwg.mxu0
  %5438 = vmatpush.bf16.msra.mxu0 %v1463
  %5439 = vmatpush.bf16.msra.mxu0 %v1451
  %5440 = vmatpush.bf16.msra.mxu0 %v1439
  %5441 = vmatpush.bf16.msra.mxu0 %v1427
  %5442 = vmatpush.bf16.msra.mxu0 %v1415
  %5443 = vmatpush.bf16.msra.mxu0 %v1403
  %5444 = vmatpush.bf16.msra.mxu0 %v1391
  %5445 = vmatpush.bf16.msra.mxu0 %v1379
  %5446 = vmatmul.bf16.gmra.mxu0 %v5333
  %v5447 = vpop.f32.mrf.mxu0
  %v5448 = vadd.f32 %v5435, %v5447
  %v5449 = vpop.f32.mrf.mxu0
  %5450 = vdwg.mxu0
  %5451 = vmatpush.bf16.msra.mxu0 %v1272
  %5452 = vmatpush.bf16.msra.mxu0 %v1260
  %5453 = vmatpush.bf16.msra.mxu0 %v1248
  %5454 = vmatpush.bf16.msra.mxu0 %v1236
  %5455 = vmatpush.bf16.msra.mxu0 %v1224
  %5456 = vmatpush.bf16.msra.mxu0 %v1212
  %5457 = vmatpush.bf16.msra.mxu0 %v1200
  %5458 = vmatpush.bf16.msra.mxu0 %v1188
  %5459 = vmatmul.bf16.gmra.mxu0 %v5331
  %v5460 = vpop.f32.mrf.mxu0
  %v5461 = vadd.f32 0.0, %v5460
  %v5462 = vpop.f32.mrf.mxu0
  %5463 = vdwg.mxu0
  %5464 = vmatpush.bf16.msra.mxu0 %v1368
  %5465 = vmatpush.bf16.msra.mxu0 %v1356
  %5466 = vmatpush.bf16.msra.mxu0 %v1344
  %5467 = vmatpush.bf16.msra.mxu0 %v1332
  %5468 = vmatpush.bf16.msra.mxu0 %v1320
  %5469 = vmatpush.bf16.msra.mxu0 %v1308
  %5470 = vmatpush.bf16.msra.mxu0 %v1296
  %5471 = vmatpush.bf16.msra.mxu0 %v1284
  %5472 = vmatmul.bf16.gmra.mxu0 %v5332
  %v5473 = vpop.f32.mrf.mxu0
  %v5474 = vadd.f32 %v5461, %v5473
  %v5475 = vpop.f32.mrf.mxu0
  %5476 = vdwg.mxu0
  %5477 = vmatpush.bf16.msra.mxu0 %v1464
  %5478 = vmatpush.bf16.msra.mxu0 %v1452
  %5479 = vmatpush.bf16.msra.mxu0 %v1440
  %5480 = vmatpush.bf16.msra.mxu0 %v1428
  %5481 = vmatpush.bf16.msra.mxu0 %v1416
  %5482 = vmatpush.bf16.msra.mxu0 %v1404
  %5483 = vmatpush.bf16.msra.mxu0 %v1392
  %5484 = vmatpush.bf16.msra.mxu0 %v1380
  %5485 = vmatmul.bf16.gmra.mxu0 %v5333
  %v5486 = vpop.f32.mrf.mxu0
  %v5487 = vadd.f32 %v5474, %v5486
  %v5488 = vpop.f32.mrf.mxu0
  %5489 = vdwg.mxu0
  %5490 = vmatpush.bf16.msra.mxu0 %v1273
  %5491 = vmatpush.bf16.msra.mxu0 %v1261
  %5492 = vmatpush.bf16.msra.mxu0 %v1249
  %5493 = vmatpush.bf16.msra.mxu0 %v1237
  %5494 = vmatpush.bf16.msra.mxu0 %v1225
  %5495 = vmatpush.bf16.msra.mxu0 %v1213
  %5496 = vmatpush.bf16.msra.mxu0 %v1201
  %5497 = vmatpush.bf16.msra.mxu0 %v1189
  %5498 = vmatmul.bf16.gmra.mxu0 %v5331
  %v5499 = vpop.f32.mrf.mxu0
  %v5500 = vadd.f32 0.0, %v5499
  %v5501 = vpop.f32.mrf.mxu0
  %5502 = vdwg.mxu0
  %5503 = vmatpush.bf16.msra.mxu0 %v1369
  %5504 = vmatpush.bf16.msra.mxu0 %v1357
  %5505 = vmatpush.bf16.msra.mxu0 %v1345
  %5506 = vmatpush.bf16.msra.mxu0 %v1333
  %5507 = vmatpush.bf16.msra.mxu0 %v1321
  %5508 = vmatpush.bf16.msra.mxu0 %v1309
  %5509 = vmatpush.bf16.msra.mxu0 %v1297
  %5510 = vmatpush.bf16.msra.mxu0 %v1285
  %5511 = vmatmul.bf16.gmra.mxu0 %v5332
  %v5512 = vpop.f32.mrf.mxu0
  %v5513 = vadd.f32 %v5500, %v5512
  %v5514 = vpop.f32.mrf.mxu0
  %5515 = vdwg.mxu0
  %5516 = vmatpush.bf16.msra.mxu0 %v1465
  %5517 = vmatpush.bf16.msra.mxu0 %v1453
  %5518 = vmatpush.bf16.msra.mxu0 %v1441
  %5519 = vmatpush.bf16.msra.mxu0 %v1429
  %5520 = vmatpush.bf16.msra.mxu0 %v1417
  %5521 = vmatpush.bf16.msra.mxu0 %v1405
  %5522 = vmatpush.bf16.msra.mxu0 %v1393
  %5523 = vmatpush.bf16.msra.mxu0 %v1381
  %5524 = vmatmul.bf16.gmra.mxu0 %v5333
  %v5525 = vpop.f32.mrf.mxu0
  %v5526 = vadd.f32 %v5513, %v5525
  %v5527 = vpop.f32.mrf.mxu0
  %5528 = vdwg.mxu0
  %5529 = vmatpush.bf16.msra.mxu0 %v1274
  %5530 = vmatpush.bf16.msra.mxu0 %v1262
  %5531 = vmatpush.bf16.msra.mxu0 %v1250
  %5532 = vmatpush.bf16.msra.mxu0 %v1238
  %5533 = vmatpush.bf16.msra.mxu0 %v1226
  %5534 = vmatpush.bf16.msra.mxu0 %v1214
  %5535 = vmatpush.bf16.msra.mxu0 %v1202
  %5536 = vmatpush.bf16.msra.mxu0 %v1190
  %5537 = vmatmul.bf16.gmra.mxu0 %v5331
  %v5538 = vpop.f32.mrf.mxu0
  %v5539 = vadd.f32 0.0, %v5538
  %v5540 = vpop.f32.mrf.mxu0
  %5541 = vdwg.mxu0
  %5542 = vmatpush.bf16.msra.mxu0 %v1370
  %5543 = vmatpush.bf16.msra.mxu0 %v1358
  %5544 = vmatpush.bf16.msra.mxu0 %v1346
  %5545 = vmatpush.bf16.msra.mxu0 %v1334
  %5546 = vmatpush.bf16.msra.mxu0 %v1322
  %5547 = vmatpush.bf16.msra.mxu0 %v1310
  %5548 = vmatpush.bf16.msra.mxu0 %v1298
  %5549 = vmatpush.bf16.msra.mxu0 %v1286
  %5550 = vmatmul.bf16.gmra.mxu0 %v5332
  %v5551 = vpop.f32.mrf.mxu0
  %v5552 = vadd.f32 %v5539, %v5551
  %v5553 = vpop.f32.mrf.mxu0
  %5554 = vdwg.mxu0
  %5555 = vmatpush.bf16.msra.mxu0 %v1466
  %5556 = vmatpush.bf16.msra.mxu0 %v1454
  %5557 = vmatpush.bf16.msra.mxu0 %v1442
  %5558 = vmatpush.bf16.msra.mxu0 %v1430
  %5559 = vmatpush.bf16.msra.mxu0 %v1418
  %5560 = vmatpush.bf16.msra.mxu0 %v1406
  %5561 = vmatpush.bf16.msra.mxu0 %v1394
  %5562 = vmatpush.bf16.msra.mxu0 %v1382
  %5563 = vmatmul.bf16.gmra.mxu0 %v5333
  %v5564 = vpop.f32.mrf.mxu0
  %v5565 = vadd.f32 %v5552, %v5564
  %v5566 = vpop.f32.mrf.mxu0
  %5567 = vdwg.mxu0
  %5568 = vmatpush.bf16.msra.mxu0 %v1275
  %5569 = vmatpush.bf16.msra.mxu0 %v1263
  %5570 = vmatpush.bf16.msra.mxu0 %v1251
  %5571 = vmatpush.bf16.msra.mxu0 %v1239
  %5572 = vmatpush.bf16.msra.mxu0 %v1227
  %5573 = vmatpush.bf16.msra.mxu0 %v1215
  %5574 = vmatpush.bf16.msra.mxu0 %v1203
  %5575 = vmatpush.bf16.msra.mxu0 %v1191
  %5576 = vmatmul.bf16.gmra.mxu0 %v5331
  %v5577 = vpop.f32.mrf.mxu0
  %v5578 = vadd.f32 0.0, %v5577
  %v5579 = vpop.f32.mrf.mxu0
  %5580 = vdwg.mxu0
  %5581 = vmatpush.bf16.msra.mxu0 %v1371
  %5582 = vmatpush.bf16.msra.mxu0 %v1359
  %5583 = vmatpush.bf16.msra.mxu0 %v1347
  %5584 = vmatpush.bf16.msra.mxu0 %v1335
  %5585 = vmatpush.bf16.msra.mxu0 %v1323
  %5586 = vmatpush.bf16.msra.mxu0 %v1311
  %5587 = vmatpush.bf16.msra.mxu0 %v1299
  %5588 = vmatpush.bf16.msra.mxu0 %v1287
  %5589 = vmatmul.bf16.gmra.mxu0 %v5332
  %v5590 = vpop.f32.mrf.mxu0
  %v5591 = vadd.f32 %v5578, %v5590
  %v5592 = vpop.f32.mrf.mxu0
  %5593 = vdwg.mxu0
  %5594 = vmatpush.bf16.msra.mxu0 %v1467
  %5595 = vmatpush.bf16.msra.mxu0 %v1455
  %5596 = vmatpush.bf16.msra.mxu0 %v1443
  %5597 = vmatpush.bf16.msra.mxu0 %v1431
  %5598 = vmatpush.bf16.msra.mxu0 %v1419
  %5599 = vmatpush.bf16.msra.mxu0 %v1407
  %5600 = vmatpush.bf16.msra.mxu0 %v1395
  %5601 = vmatpush.bf16.msra.mxu0 %v1383
  %5602 = vmatmul.bf16.gmra.mxu0 %v5333
  %v5603 = vpop.f32.mrf.mxu0
  %v5604 = vadd.f32 %v5591, %v5603
  %v5605 = vpop.f32.mrf.mxu0
  %5606 = vdwg.mxu0
  %5607 = vmatpush.bf16.msra.mxu0 %v1276
  %5608 = vmatpush.bf16.msra.mxu0 %v1264
  %5609 = vmatpush.bf16.msra.mxu0 %v1252
  %5610 = vmatpush.bf16.msra.mxu0 %v1240
  %5611 = vmatpush.bf16.msra.mxu0 %v1228
  %5612 = vmatpush.bf16.msra.mxu0 %v1216
  %5613 = vmatpush.bf16.msra.mxu0 %v1204
  %5614 = vmatpush.bf16.msra.mxu0 %v1192
  %5615 = vmatmul.bf16.gmra.mxu0 %v5331
  %v5616 = vpop.f32.mrf.mxu0
  %v5617 = vadd.f32 0.0, %v5616
  %v5618 = vpop.f32.mrf.mxu0
  %5619 = vdwg.mxu0
  %5620 = vmatpush.bf16.msra.mxu0 %v1372
  %5621 = vmatpush.bf16.msra.mxu0 %v1360
  %5622 = vmatpush.bf16.msra.mxu0 %v1348
  %5623 = vmatpush.bf16.msra.mxu0 %v1336
  %5624 = vmatpush.bf16.msra.mxu0 %v1324
  %5625 = vmatpush.bf16.msra.mxu0 %v1312
  %5626 = vmatpush.bf16.msra.mxu0 %v1300
  %5627 = vmatpush.bf16.msra.mxu0 %v1288
  %5628 = vmatmul.bf16.gmra.mxu0 %v5332
  %v5629 = vpop.f32.mrf.mxu0
  %v5630 = vadd.f32 %v5617, %v5629
  %v5631 = vpop.f32.mrf.mxu0
  %5632 = vdwg.mxu0
  %5633 = vmatpush.bf16.msra.mxu0 %v1468
  %5634 = vmatpush.bf16.msra.mxu0 %v1456
  %5635 = vmatpush.bf16.msra.mxu0 %v1444
  %5636 = vmatpush.bf16.msra.mxu0 %v1432
  %5637 = vmatpush.bf16.msra.mxu0 %v1420
  %5638 = vmatpush.bf16.msra.mxu0 %v1408
  %5639 = vmatpush.bf16.msra.mxu0 %v1396
  %5640 = vmatpush.bf16.msra.mxu0 %v1384
  %5641 = vmatmul.bf16.gmra.mxu0 %v5333
  %v5642 = vpop.f32.mrf.mxu0
  %v5643 = vadd.f32 %v5630, %v5642
  %v5644 = vpop.f32.mrf.mxu0
  %5645 = vdwg.mxu0
  %5646 = vmatpush.bf16.msra.mxu0 %v1277
  %5647 = vmatpush.bf16.msra.mxu0 %v1265
  %5648 = vmatpush.bf16.msra.mxu0 %v1253
  %5649 = vmatpush.bf16.msra.mxu0 %v1241
  %5650 = vmatpush.bf16.msra.mxu0 %v1229
  %5651 = vmatpush.bf16.msra.mxu0 %v1217
  %5652 = vmatpush.bf16.msra.mxu0 %v1205
  %5653 = vmatpush.bf16.msra.mxu0 %v1193
  %5654 = vmatmul.bf16.gmra.mxu0 %v5331
  %v5655 = vpop.f32.mrf.mxu0
  %v5656 = vadd.f32 0.0, %v5655
  %v5657 = vpop.f32.mrf.mxu0
  %5658 = vdwg.mxu0
  %5659 = vmatpush.bf16.msra.mxu0 %v1373
  %5660 = vmatpush.bf16.msra.mxu0 %v1361
  %5661 = vmatpush.bf16.msra.mxu0 %v1349
  %5662 = vmatpush.bf16.msra.mxu0 %v1337
  %5663 = vmatpush.bf16.msra.mxu0 %v1325
  %5664 = vmatpush.bf16.msra.mxu0 %v1313
  %5665 = vmatpush.bf16.msra.mxu0 %v1301
  %5666 = vmatpush.bf16.msra.mxu0 %v1289
  %5667 = vmatmul.bf16.gmra.mxu0 %v5332
  %v5668 = vpop.f32.mrf.mxu0
  %v5669 = vadd.f32 %v5656, %v5668
  %v5670 = vpop.f32.mrf.mxu0
  %5671 = vdwg.mxu0
  %5672 = vmatpush.bf16.msra.mxu0 %v1469
  %5673 = vmatpush.bf16.msra.mxu0 %v1457
  %5674 = vmatpush.bf16.msra.mxu0 %v1445
  %5675 = vmatpush.bf16.msra.mxu0 %v1433
  %5676 = vmatpush.bf16.msra.mxu0 %v1421
  %5677 = vmatpush.bf16.msra.mxu0 %v1409
  %5678 = vmatpush.bf16.msra.mxu0 %v1397
  %5679 = vmatpush.bf16.msra.mxu0 %v1385
  %5680 = vmatmul.bf16.gmra.mxu0 %v5333
  %v5681 = vpop.f32.mrf.mxu0
  %v5682 = vadd.f32 %v5669, %v5681
  %v5683 = vpop.f32.mrf.mxu0
  %5684 = vdwg.mxu0
  %5685 = vmatpush.bf16.msra.mxu0 %v1278
  %5686 = vmatpush.bf16.msra.mxu0 %v1266
  %5687 = vmatpush.bf16.msra.mxu0 %v1254
  %5688 = vmatpush.bf16.msra.mxu0 %v1242
  %5689 = vmatpush.bf16.msra.mxu0 %v1230
  %5690 = vmatpush.bf16.msra.mxu0 %v1218
  %5691 = vmatpush.bf16.msra.mxu0 %v1206
  %5692 = vmatpush.bf16.msra.mxu0 %v1194
  %5693 = vmatmul.bf16.gmra.mxu0 %v5331
  %v5694 = vpop.f32.mrf.mxu0
  %v5695 = vadd.f32 0.0, %v5694
  %v5696 = vpop.f32.mrf.mxu0
  %5697 = vdwg.mxu0
  %5698 = vmatpush.bf16.msra.mxu0 %v1374
  %5699 = vmatpush.bf16.msra.mxu0 %v1362
  %5700 = vmatpush.bf16.msra.mxu0 %v1350
  %5701 = vmatpush.bf16.msra.mxu0 %v1338
  %5702 = vmatpush.bf16.msra.mxu0 %v1326
  %5703 = vmatpush.bf16.msra.mxu0 %v1314
  %5704 = vmatpush.bf16.msra.mxu0 %v1302
  %5705 = vmatpush.bf16.msra.mxu0 %v1290
  %5706 = vmatmul.bf16.gmra.mxu0 %v5332
  %v5707 = vpop.f32.mrf.mxu0
  %v5708 = vadd.f32 %v5695, %v5707
  %v5709 = vpop.f32.mrf.mxu0
  %5710 = vdwg.mxu0
  %5711 = vmatpush.bf16.msra.mxu0 %v1470
  %5712 = vmatpush.bf16.msra.mxu0 %v1458
  %5713 = vmatpush.bf16.msra.mxu0 %v1446
  %5714 = vmatpush.bf16.msra.mxu0 %v1434
  %5715 = vmatpush.bf16.msra.mxu0 %v1422
  %5716 = vmatpush.bf16.msra.mxu0 %v1410
  %5717 = vmatpush.bf16.msra.mxu0 %v1398
  %5718 = vmatpush.bf16.msra.mxu0 %v1386
  %5719 = vmatmul.bf16.gmra.mxu0 %v5333
  %v5720 = vpop.f32.mrf.mxu0
  %v5721 = vadd.f32 %v5708, %v5720
  %v5722 = vpop.f32.mrf.mxu0
  %5723 = vdwg.mxu0
  %5724 = vmatpush.bf16.msra.mxu0 %v1279
  %5725 = vmatpush.bf16.msra.mxu0 %v1267
  %5726 = vmatpush.bf16.msra.mxu0 %v1255
  %5727 = vmatpush.bf16.msra.mxu0 %v1243
  %5728 = vmatpush.bf16.msra.mxu0 %v1231
  %5729 = vmatpush.bf16.msra.mxu0 %v1219
  %5730 = vmatpush.bf16.msra.mxu0 %v1207
  %5731 = vmatpush.bf16.msra.mxu0 %v1195
  %5732 = vmatmul.bf16.gmra.mxu0 %v5331
  %v5733 = vpop.f32.mrf.mxu0
  %v5734 = vadd.f32 0.0, %v5733
  %v5735 = vpop.f32.mrf.mxu0
  %5736 = vdwg.mxu0
  %5737 = vmatpush.bf16.msra.mxu0 %v1375
  %5738 = vmatpush.bf16.msra.mxu0 %v1363
  %5739 = vmatpush.bf16.msra.mxu0 %v1351
  %5740 = vmatpush.bf16.msra.mxu0 %v1339
  %5741 = vmatpush.bf16.msra.mxu0 %v1327
  %5742 = vmatpush.bf16.msra.mxu0 %v1315
  %5743 = vmatpush.bf16.msra.mxu0 %v1303
  %5744 = vmatpush.bf16.msra.mxu0 %v1291
  %5745 = vmatmul.bf16.gmra.mxu0 %v5332
  %v5746 = vpop.f32.mrf.mxu0
  %v5747 = vadd.f32 %v5734, %v5746
  %v5748 = vpop.f32.mrf.mxu0
  %5749 = vdwg.mxu0
  %5750 = vmatpush.bf16.msra.mxu0 %v1471
  %5751 = vmatpush.bf16.msra.mxu0 %v1459
  %5752 = vmatpush.bf16.msra.mxu0 %v1447
  %5753 = vmatpush.bf16.msra.mxu0 %v1435
  %5754 = vmatpush.bf16.msra.mxu0 %v1423
  %5755 = vmatpush.bf16.msra.mxu0 %v1411
  %5756 = vmatpush.bf16.msra.mxu0 %v1399
  %5757 = vmatpush.bf16.msra.mxu0 %v1387
  %5758 = vmatmul.bf16.gmra.mxu0 %v5333
  %v5759 = vpop.f32.mrf.mxu0
  %v5760 = vadd.f32 %v5747, %v5759
  %v5761 = vpop.f32.mrf.mxu0
  %5762 = vdwg.mxu0
  %5763 = vmatpush.bf16.msra.mxu0 %v1280
  %5764 = vmatpush.bf16.msra.mxu0 %v1268
  %5765 = vmatpush.bf16.msra.mxu0 %v1256
  %5766 = vmatpush.bf16.msra.mxu0 %v1244
  %5767 = vmatpush.bf16.msra.mxu0 %v1232
  %5768 = vmatpush.bf16.msra.mxu0 %v1220
  %5769 = vmatpush.bf16.msra.mxu0 %v1208
  %5770 = vmatpush.bf16.msra.mxu0 %v1196
  %5771 = vmatmul.bf16.gmra.mxu0 %v5331
  %v5772 = vpop.f32.mrf.mxu0
  %v5773 = vadd.f32 0.0, %v5772
  %v5774 = vpop.f32.mrf.mxu0
  %5775 = vdwg.mxu0
  %5776 = vmatpush.bf16.msra.mxu0 %v1376
  %5777 = vmatpush.bf16.msra.mxu0 %v1364
  %5778 = vmatpush.bf16.msra.mxu0 %v1352
  %5779 = vmatpush.bf16.msra.mxu0 %v1340
  %5780 = vmatpush.bf16.msra.mxu0 %v1328
  %5781 = vmatpush.bf16.msra.mxu0 %v1316
  %5782 = vmatpush.bf16.msra.mxu0 %v1304
  %5783 = vmatpush.bf16.msra.mxu0 %v1292
  %5784 = vmatmul.bf16.gmra.mxu0 %v5332
  %v5785 = vpop.f32.mrf.mxu0
  %v5786 = vadd.f32 %v5773, %v5785
  %v5787 = vpop.f32.mrf.mxu0
  %5788 = vdwg.mxu0
  %5789 = vmatpush.bf16.msra.mxu0 %v1472
  %5790 = vmatpush.bf16.msra.mxu0 %v1460
  %5791 = vmatpush.bf16.msra.mxu0 %v1448
  %5792 = vmatpush.bf16.msra.mxu0 %v1436
  %5793 = vmatpush.bf16.msra.mxu0 %v1424
  %5794 = vmatpush.bf16.msra.mxu0 %v1412
  %5795 = vmatpush.bf16.msra.mxu0 %v1400
  %5796 = vmatpush.bf16.msra.mxu0 %v1388
  %5797 = vmatmul.bf16.gmra.mxu0 %v5333
  %v5798 = vpop.f32.mrf.mxu0
  %v5799 = vadd.f32 %v5786, %v5798
  %v5800 = vpop.f32.mrf.mxu0
  %5801 = vdwg.mxu0
  %v5814 = vrot.slane %v5409, 6
  %v5815 = vrot.slane %v5448, 4
  %v5816 = vrot.slane %v5487, 2
  %v5817 = vrot.slane %v5565, 6
  %v5818 = vrot.slane %v5604, 4
  %v5819 = vrot.slane %v5643, 2
  %v5820 = vrot.slane %v5721, 6
  %v5821 = vrot.slane %v5760, 4
  %v5822 = vrot.slane %v5799, 2
  %v5823 = vsel %vm2250, %v5370, %v5814
  %v5824 = vsel %vm2252, %v5815, %v5816
  %v5825 = vsel %vm2254, %v5823, %v5824
  %v5826 = vsel %vm2250, %v5526, %v5817
  %v5827 = vsel %vm2252, %v5818, %v5819
  %v5828 = vsel %vm2254, %v5826, %v5827
  %v5829 = vsel %vm2250, %v5682, %v5820
  %v5830 = vsel %vm2252, %v5821, %v5822
  %v5831 = vsel %vm2254, %v5829, %v5830
  %v5835 = vadd.f32 %v5320, %v5825
  %v5836 = vadd.f32 %v5321, %v5828
  %v5837 = vadd.f32 %v5322, %v5831
  %v5838 = vxor.u32 %v5835, 2147483648
  %v5839 = vmul.f32 %v5838, 1.442695
  %v5840 = vpow.pop %v5839
  %v5841 = vadd.f32 %v5840, 1.0
  %v5842 = vrcp.pop %v5841
  %v5843 = vmul.f32 %v5841, %v5842
  %v5844 = vsub.f32 1.0, %v5843
  %v5845 = vmul.f32 %v5842, %v5844
  %v5846 = vadd.f32 %v5842, %v5845
  %vm5847 = vweird.f32 %v5841
  %vm5848 = vweird.f32 %v5842
  %vm5849 = vmor %vm5847, %vm5848
  %v5850 = vsel %vm5849, %v5842, %v5846
  %v5851 = vand.u32 2147483647, %v5841
  %vm5852 = vcmp.eq.f32.partialorder %v5851, 8.507059e+37
  %v5853 = vand.u32 %v5841, 2147483648
  %v5854 = vor.u32 1.1754944e-38, %v5853
  %v5855 = vsel %vm5852, %v5854, %v5850
  %v5856 = vmul.f32 1.0, %v5855
  %v5859 = vrot.slane %v5835, 6
  %v5860 = vrot.slane %v5836, 6
  %v5861 = vsel %vm2250, %v5859, %v5860
  %v5863 = vxor.u32 %v5861, 2147483648
  %v5864 = vmul.f32 %v5863, 1.442695
  %v5865 = vpow.pop %v5864
  %v5866 = vadd.f32 %v5865, 1.0
  %v5867 = vrcp.pop %v5866
  %v5868 = vmul.f32 %v5866, %v5867
  %v5869 = vsub.f32 1.0, %v5868
  %v5870 = vmul.f32 %v5867, %v5869
  %v5871 = vadd.f32 %v5867, %v5870
  %vm5872 = vweird.f32 %v5866
  %vm5873 = vweird.f32 %v5867
  %vm5874 = vmor %vm5872, %vm5873
  %v5875 = vsel %vm5874, %v5867, %v5871
  %v5876 = vand.u32 2147483647, %v5866
  %vm5877 = vcmp.eq.f32.partialorder %v5876, 8.507059e+37
  %v5878 = vand.u32 %v5866, 2147483648
  %v5879 = vor.u32 1.1754944e-38, %v5878
  %v5880 = vsel %vm5877, %v5879, %v5875
  %v5881 = vmul.f32 1.0, %v5880
  %v5883 = vrot.slane %v5836, 4
  %v5884 = vrot.slane %v5837, 4
  %v5885 = vsel %vm2254, %v5883, %v5884
  %v5887 = vtanh.pop %v5885
  %v5888 = vrot.slane %v5837, 2
  %v5890 = vxor.u32 %v5888, 2147483648
  %v5891 = vmul.f32 %v5890, 1.442695
  %v5892 = vpow.pop %v5891
  %v5893 = vadd.f32 %v5892, 1.0
  %v5894 = vrcp.pop %v5893
  %v5895 = vmul.f32 %v5893, %v5894
  %v5896 = vsub.f32 1.0, %v5895
  %v5897 = vmul.f32 %v5894, %v5896
  %v5898 = vadd.f32 %v5894, %v5897
  %vm5899 = vweird.f32 %v5893
  %vm5900 = vweird.f32 %v5894
  %vm5901 = vmor %vm5899, %vm5900
  %v5902 = vsel %vm5901, %v5894, %v5898
  %v5903 = vand.u32 2147483647, %v5893
  %vm5904 = vcmp.eq.f32.partialorder %v5903, 8.507059e+37
  %v5905 = vand.u32 %v5893, 2147483648
  %v5906 = vor.u32 1.1754944e-38, %v5905
  %v5907 = vsel %vm5904, %v5906, %v5902
  %v5908 = vmul.f32 1.0, %v5907
  %v5909 = vmul.f32 %v5881, %v5316
  %v5910 = vmul.f32 %v5856, %v5887
  %v5911 = vadd.f32 %v5909, %v5910
  %v5912 = vtanh.pop %v5911
  %v5913 = vmul.f32 %v5908, %v5912
  %s5914 = scalar_lea.vmem %s0, 168
  %v5915 = vld [vmem:[%s5914] sm:$0xff]
  %v5916 = vld [vmem:[%s5914 + $0x8] sm:$0xff]
  %v5917 = vld [vmem:[%s5914 + $0x10] sm:$0xff]
  %5919 = vst [vmem:[#allocation1] ss:$4 sm:$0xff] %v5913
  %v5920 = vld.sshfl [vmem:[#allocation1] sm:$0xff pattern:$0x73625140]
  %v5921 = vld.sshfl [vmem:[#allocation1 + $0x8] sm:$0xff pattern:$0x73625140]
  %v5922 = vld.sshfl [vmem:[#allocation1 + $0x10] sm:$0xff pattern:$0x73625140]
  %v5926 = vpack.c.bf16 %v5920, %v5920
  %v5927 = vpack.c.bf16 %v5921, %v5921
  %v5928 = vpack.c.bf16 %v5922, %v5922
  %5929 = vmatpush.bf16.msra.mxu0 %v1269
  %5930 = vmatpush.bf16.msra.mxu0 %v1257
  %5931 = vmatpush.bf16.msra.mxu0 %v1245
  %5932 = vmatpush.bf16.msra.mxu0 %v1233
  %5933 = vmatpush.bf16.msra.mxu0 %v1221
  %5934 = vmatpush.bf16.msra.mxu0 %v1209
  %5935 = vmatpush.bf16.msra.mxu0 %v1197
  %5936 = vmatpush.bf16.msra.mxu0 %v1185
  %5937 = vmatmul.bf16.gmra.mxu0 %v5926
  %v5938 = vpop.f32.mrf.mxu0
  %v5939 = vadd.f32 0.0, %v5938
  %v5940 = vpop.f32.mrf.mxu0
  %5941 = vdwg.mxu0
  %5942 = vmatpush.bf16.msra.mxu0 %v1365
  %5943 = vmatpush.bf16.msra.mxu0 %v1353
  %5944 = vmatpush.bf16.msra.mxu0 %v1341
  %5945 = vmatpush.bf16.msra.mxu0 %v1329
  %5946 = vmatpush.bf16.msra.mxu0 %v1317
  %5947 = vmatpush.bf16.msra.mxu0 %v1305
  %5948 = vmatpush.bf16.msra.mxu0 %v1293
  %5949 = vmatpush.bf16.msra.mxu0 %v1281
  %5950 = vmatmul.bf16.gmra.mxu0 %v5927
  %v5951 = vpop.f32.mrf.mxu0
  %v5952 = vadd.f32 %v5939, %v5951
  %v5953 = vpop.f32.mrf.mxu0
  %5954 = vdwg.mxu0
  %5955 = vmatpush.bf16.msra.mxu0 %v1461
  %5956 = vmatpush.bf16.msra.mxu0 %v1449
  %5957 = vmatpush.bf16.msra.mxu0 %v1437
  %5958 = vmatpush.bf16.msra.mxu0 %v1425
  %5959 = vmatpush.bf16.msra.mxu0 %v1413
  %5960 = vmatpush.bf16.msra.mxu0 %v1401
  %5961 = vmatpush.bf16.msra.mxu0 %v1389
  %5962 = vmatpush.bf16.msra.mxu0 %v1377
  %5963 = vmatmul.bf16.gmra.mxu0 %v5928
  %v5964 = vpop.f32.mrf.mxu0
  %v5965 = vadd.f32 %v5952, %v5964
  %v5966 = vpop.f32.mrf.mxu0
  %5967 = vdwg.mxu0
  %5968 = vmatpush.bf16.msra.mxu0 %v1270
  %5969 = vmatpush.bf16.msra.mxu0 %v1258
  %5970 = vmatpush.bf16.msra.mxu0 %v1246
  %5971 = vmatpush.bf16.msra.mxu0 %v1234
  %5972 = vmatpush.bf16.msra.mxu0 %v1222
  %5973 = vmatpush.bf16.msra.mxu0 %v1210
  %5974 = vmatpush.bf16.msra.mxu0 %v1198
  %5975 = vmatpush.bf16.msra.mxu0 %v1186
  %5976 = vmatmul.bf16.gmra.mxu0 %v5926
  %v5977 = vpop.f32.mrf.mxu0
  %v5978 = vadd.f32 0.0, %v5977
  %v5979 = vpop.f32.mrf.mxu0
  %5980 = vdwg.mxu0
  %5981 = vmatpush.bf16.msra.mxu0 %v1366
  %5982 = vmatpush.bf16.msra.mxu0 %v1354
  %5983 = vmatpush.bf16.msra.mxu0 %v1342
  %5984 = vmatpush.bf16.msra.mxu0 %v1330
  %5985 = vmatpush.bf16.msra.mxu0 %v1318
  %5986 = vmatpush.bf16.msra.mxu0 %v1306
  %5987 = vmatpush.bf16.msra.mxu0 %v1294
  %5988 = vmatpush.bf16.msra.mxu0 %v1282
  %5989 = vmatmul.bf16.gmra.mxu0 %v5927
  %v5990 = vpop.f32.mrf.mxu0
  %v5991 = vadd.f32 %v5978, %v5990
  %v5992 = vpop.f32.mrf.mxu0
  %5993 = vdwg.mxu0
  %5994 = vmatpush.bf16.msra.mxu0 %v1462
  %5995 = vmatpush.bf16.msra.mxu0 %v1450
  %5996 = vmatpush.bf16.msra.mxu0 %v1438
  %5997 = vmatpush.bf16.msra.mxu0 %v1426
  %5998 = vmatpush.bf16.msra.mxu0 %v1414
  %5999 = vmatpush.bf16.msra.mxu0 %v1402
  %6000 = vmatpush.bf16.msra.mxu0 %v1390
  %6001 = vmatpush.bf16.msra.mxu0 %v1378
  %6002 = vmatmul.bf16.gmra.mxu0 %v5928
  %v6003 = vpop.f32.mrf.mxu0
  %v6004 = vadd.f32 %v5991, %v6003
  %v6005 = vpop.f32.mrf.mxu0
  %6006 = vdwg.mxu0
  %6007 = vmatpush.bf16.msra.mxu0 %v1271
  %6008 = vmatpush.bf16.msra.mxu0 %v1259
  %6009 = vmatpush.bf16.msra.mxu0 %v1247
  %6010 = vmatpush.bf16.msra.mxu0 %v1235
  %6011 = vmatpush.bf16.msra.mxu0 %v1223
  %6012 = vmatpush.bf16.msra.mxu0 %v1211
  %6013 = vmatpush.bf16.msra.mxu0 %v1199
  %6014 = vmatpush.bf16.msra.mxu0 %v1187
  %6015 = vmatmul.bf16.gmra.mxu0 %v5926
  %v6016 = vpop.f32.mrf.mxu0
  %v6017 = vadd.f32 0.0, %v6016
  %v6018 = vpop.f32.mrf.mxu0
  %6019 = vdwg.mxu0
  %6020 = vmatpush.bf16.msra.mxu0 %v1367
  %6021 = vmatpush.bf16.msra.mxu0 %v1355
  %6022 = vmatpush.bf16.msra.mxu0 %v1343
  %6023 = vmatpush.bf16.msra.mxu0 %v1331
  %6024 = vmatpush.bf16.msra.mxu0 %v1319
  %6025 = vmatpush.bf16.msra.mxu0 %v1307
  %6026 = vmatpush.bf16.msra.mxu0 %v1295
  %6027 = vmatpush.bf16.msra.mxu0 %v1283
  %6028 = vmatmul.bf16.gmra.mxu0 %v5927
  %v6029 = vpop.f32.mrf.mxu0
  %v6030 = vadd.f32 %v6017, %v6029
  %v6031 = vpop.f32.mrf.mxu0
  %6032 = vdwg.mxu0
  %6033 = vmatpush.bf16.msra.mxu0 %v1463
  %6034 = vmatpush.bf16.msra.mxu0 %v1451
  %6035 = vmatpush.bf16.msra.mxu0 %v1439
  %6036 = vmatpush.bf16.msra.mxu0 %v1427
  %6037 = vmatpush.bf16.msra.mxu0 %v1415
  %6038 = vmatpush.bf16.msra.mxu0 %v1403
  %6039 = vmatpush.bf16.msra.mxu0 %v1391
  %6040 = vmatpush.bf16.msra.mxu0 %v1379
  %6041 = vmatmul.bf16.gmra.mxu0 %v5928
  %v6042 = vpop.f32.mrf.mxu0
  %v6043 = vadd.f32 %v6030, %v6042
  %v6044 = vpop.f32.mrf.mxu0
  %6045 = vdwg.mxu0
  %6046 = vmatpush.bf16.msra.mxu0 %v1272
  %6047 = vmatpush.bf16.msra.mxu0 %v1260
  %6048 = vmatpush.bf16.msra.mxu0 %v1248
  %6049 = vmatpush.bf16.msra.mxu0 %v1236
  %6050 = vmatpush.bf16.msra.mxu0 %v1224
  %6051 = vmatpush.bf16.msra.mxu0 %v1212
  %6052 = vmatpush.bf16.msra.mxu0 %v1200
  %6053 = vmatpush.bf16.msra.mxu0 %v1188
  %6054 = vmatmul.bf16.gmra.mxu0 %v5926
  %v6055 = vpop.f32.mrf.mxu0
  %v6056 = vadd.f32 0.0, %v6055
  %v6057 = vpop.f32.mrf.mxu0
  %6058 = vdwg.mxu0
  %6059 = vmatpush.bf16.msra.mxu0 %v1368
  %6060 = vmatpush.bf16.msra.mxu0 %v1356
  %6061 = vmatpush.bf16.msra.mxu0 %v1344
  %6062 = vmatpush.bf16.msra.mxu0 %v1332
  %6063 = vmatpush.bf16.msra.mxu0 %v1320
  %6064 = vmatpush.bf16.msra.mxu0 %v1308
  %6065 = vmatpush.bf16.msra.mxu0 %v1296
  %6066 = vmatpush.bf16.msra.mxu0 %v1284
  %6067 = vmatmul.bf16.gmra.mxu0 %v5927
  %v6068 = vpop.f32.mrf.mxu0
  %v6069 = vadd.f32 %v6056, %v6068
  %v6070 = vpop.f32.mrf.mxu0
  %6071 = vdwg.mxu0
  %6072 = vmatpush.bf16.msra.mxu0 %v1464
  %6073 = vmatpush.bf16.msra.mxu0 %v1452
  %6074 = vmatpush.bf16.msra.mxu0 %v1440
  %6075 = vmatpush.bf16.msra.mxu0 %v1428
  %6076 = vmatpush.bf16.msra.mxu0 %v1416
  %6077 = vmatpush.bf16.msra.mxu0 %v1404
  %6078 = vmatpush.bf16.msra.mxu0 %v1392
  %6079 = vmatpush.bf16.msra.mxu0 %v1380
  %6080 = vmatmul.bf16.gmra.mxu0 %v5928
  %v6081 = vpop.f32.mrf.mxu0
  %v6082 = vadd.f32 %v6069, %v6081
  %v6083 = vpop.f32.mrf.mxu0
  %6084 = vdwg.mxu0
  %6085 = vmatpush.bf16.msra.mxu0 %v1273
  %6086 = vmatpush.bf16.msra.mxu0 %v1261
  %6087 = vmatpush.bf16.msra.mxu0 %v1249
  %6088 = vmatpush.bf16.msra.mxu0 %v1237
  %6089 = vmatpush.bf16.msra.mxu0 %v1225
  %6090 = vmatpush.bf16.msra.mxu0 %v1213
  %6091 = vmatpush.bf16.msra.mxu0 %v1201
  %6092 = vmatpush.bf16.msra.mxu0 %v1189
  %6093 = vmatmul.bf16.gmra.mxu0 %v5926
  %v6094 = vpop.f32.mrf.mxu0
  %v6095 = vadd.f32 0.0, %v6094
  %v6096 = vpop.f32.mrf.mxu0
  %6097 = vdwg.mxu0
  %6098 = vmatpush.bf16.msra.mxu0 %v1369
  %6099 = vmatpush.bf16.msra.mxu0 %v1357
  %6100 = vmatpush.bf16.msra.mxu0 %v1345
  %6101 = vmatpush.bf16.msra.mxu0 %v1333
  %6102 = vmatpush.bf16.msra.mxu0 %v1321
  %6103 = vmatpush.bf16.msra.mxu0 %v1309
  %6104 = vmatpush.bf16.msra.mxu0 %v1297
  %6105 = vmatpush.bf16.msra.mxu0 %v1285
  %6106 = vmatmul.bf16.gmra.mxu0 %v5927
  %v6107 = vpop.f32.mrf.mxu0
  %v6108 = vadd.f32 %v6095, %v6107
  %v6109 = vpop.f32.mrf.mxu0
  %6110 = vdwg.mxu0
  %6111 = vmatpush.bf16.msra.mxu0 %v1465
  %6112 = vmatpush.bf16.msra.mxu0 %v1453
  %6113 = vmatpush.bf16.msra.mxu0 %v1441
  %6114 = vmatpush.bf16.msra.mxu0 %v1429
  %6115 = vmatpush.bf16.msra.mxu0 %v1417
  %6116 = vmatpush.bf16.msra.mxu0 %v1405
  %6117 = vmatpush.bf16.msra.mxu0 %v1393
  %6118 = vmatpush.bf16.msra.mxu0 %v1381
  %6119 = vmatmul.bf16.gmra.mxu0 %v5928
  %v6120 = vpop.f32.mrf.mxu0
  %v6121 = vadd.f32 %v6108, %v6120
  %v6122 = vpop.f32.mrf.mxu0
  %6123 = vdwg.mxu0
  %6124 = vmatpush.bf16.msra.mxu0 %v1274
  %6125 = vmatpush.bf16.msra.mxu0 %v1262
  %6126 = vmatpush.bf16.msra.mxu0 %v1250
  %6127 = vmatpush.bf16.msra.mxu0 %v1238
  %6128 = vmatpush.bf16.msra.mxu0 %v1226
  %6129 = vmatpush.bf16.msra.mxu0 %v1214
  %6130 = vmatpush.bf16.msra.mxu0 %v1202
  %6131 = vmatpush.bf16.msra.mxu0 %v1190
  %6132 = vmatmul.bf16.gmra.mxu0 %v5926
  %v6133 = vpop.f32.mrf.mxu0
  %v6134 = vadd.f32 0.0, %v6133
  %v6135 = vpop.f32.mrf.mxu0
  %6136 = vdwg.mxu0
  %6137 = vmatpush.bf16.msra.mxu0 %v1370
  %6138 = vmatpush.bf16.msra.mxu0 %v1358
  %6139 = vmatpush.bf16.msra.mxu0 %v1346
  %6140 = vmatpush.bf16.msra.mxu0 %v1334
  %6141 = vmatpush.bf16.msra.mxu0 %v1322
  %6142 = vmatpush.bf16.msra.mxu0 %v1310
  %6143 = vmatpush.bf16.msra.mxu0 %v1298
  %6144 = vmatpush.bf16.msra.mxu0 %v1286
  %6145 = vmatmul.bf16.gmra.mxu0 %v5927
  %v6146 = vpop.f32.mrf.mxu0
  %v6147 = vadd.f32 %v6134, %v6146
  %v6148 = vpop.f32.mrf.mxu0
  %6149 = vdwg.mxu0
  %6150 = vmatpush.bf16.msra.mxu0 %v1466
  %6151 = vmatpush.bf16.msra.mxu0 %v1454
  %6152 = vmatpush.bf16.msra.mxu0 %v1442
  %6153 = vmatpush.bf16.msra.mxu0 %v1430
  %6154 = vmatpush.bf16.msra.mxu0 %v1418
  %6155 = vmatpush.bf16.msra.mxu0 %v1406
  %6156 = vmatpush.bf16.msra.mxu0 %v1394
  %6157 = vmatpush.bf16.msra.mxu0 %v1382
  %6158 = vmatmul.bf16.gmra.mxu0 %v5928
  %v6159 = vpop.f32.mrf.mxu0
  %v6160 = vadd.f32 %v6147, %v6159
  %v6161 = vpop.f32.mrf.mxu0
  %6162 = vdwg.mxu0
  %6163 = vmatpush.bf16.msra.mxu0 %v1275
  %6164 = vmatpush.bf16.msra.mxu0 %v1263
  %6165 = vmatpush.bf16.msra.mxu0 %v1251
  %6166 = vmatpush.bf16.msra.mxu0 %v1239
  %6167 = vmatpush.bf16.msra.mxu0 %v1227
  %6168 = vmatpush.bf16.msra.mxu0 %v1215
  %6169 = vmatpush.bf16.msra.mxu0 %v1203
  %6170 = vmatpush.bf16.msra.mxu0 %v1191
  %6171 = vmatmul.bf16.gmra.mxu0 %v5926
  %v6172 = vpop.f32.mrf.mxu0
  %v6173 = vadd.f32 0.0, %v6172
  %v6174 = vpop.f32.mrf.mxu0
  %6175 = vdwg.mxu0
  %6176 = vmatpush.bf16.msra.mxu0 %v1371
  %6177 = vmatpush.bf16.msra.mxu0 %v1359
  %6178 = vmatpush.bf16.msra.mxu0 %v1347
  %6179 = vmatpush.bf16.msra.mxu0 %v1335
  %6180 = vmatpush.bf16.msra.mxu0 %v1323
  %6181 = vmatpush.bf16.msra.mxu0 %v1311
  %6182 = vmatpush.bf16.msra.mxu0 %v1299
  %6183 = vmatpush.bf16.msra.mxu0 %v1287
  %6184 = vmatmul.bf16.gmra.mxu0 %v5927
  %v6185 = vpop.f32.mrf.mxu0
  %v6186 = vadd.f32 %v6173, %v6185
  %v6187 = vpop.f32.mrf.mxu0
  %6188 = vdwg.mxu0
  %6189 = vmatpush.bf16.msra.mxu0 %v1467
  %6190 = vmatpush.bf16.msra.mxu0 %v1455
  %6191 = vmatpush.bf16.msra.mxu0 %v1443
  %6192 = vmatpush.bf16.msra.mxu0 %v1431
  %6193 = vmatpush.bf16.msra.mxu0 %v1419
  %6194 = vmatpush.bf16.msra.mxu0 %v1407
  %6195 = vmatpush.bf16.msra.mxu0 %v1395
  %6196 = vmatpush.bf16.msra.mxu0 %v1383
  %6197 = vmatmul.bf16.gmra.mxu0 %v5928
  %v6198 = vpop.f32.mrf.mxu0
  %v6199 = vadd.f32 %v6186, %v6198
  %v6200 = vpop.f32.mrf.mxu0
  %6201 = vdwg.mxu0
  %6202 = vmatpush.bf16.msra.mxu0 %v1276
  %6203 = vmatpush.bf16.msra.mxu0 %v1264
  %6204 = vmatpush.bf16.msra.mxu0 %v1252
  %6205 = vmatpush.bf16.msra.mxu0 %v1240
  %6206 = vmatpush.bf16.msra.mxu0 %v1228
  %6207 = vmatpush.bf16.msra.mxu0 %v1216
  %6208 = vmatpush.bf16.msra.mxu0 %v1204
  %6209 = vmatpush.bf16.msra.mxu0 %v1192
  %6210 = vmatmul.bf16.gmra.mxu0 %v5926
  %v6211 = vpop.f32.mrf.mxu0
  %v6212 = vadd.f32 0.0, %v6211
  %v6213 = vpop.f32.mrf.mxu0
  %6214 = vdwg.mxu0
  %6215 = vmatpush.bf16.msra.mxu0 %v1372
  %6216 = vmatpush.bf16.msra.mxu0 %v1360
  %6217 = vmatpush.bf16.msra.mxu0 %v1348
  %6218 = vmatpush.bf16.msra.mxu0 %v1336
  %6219 = vmatpush.bf16.msra.mxu0 %v1324
  %6220 = vmatpush.bf16.msra.mxu0 %v1312
  %6221 = vmatpush.bf16.msra.mxu0 %v1300
  %6222 = vmatpush.bf16.msra.mxu0 %v1288
  %6223 = vmatmul.bf16.gmra.mxu0 %v5927
  %v6224 = vpop.f32.mrf.mxu0
  %v6225 = vadd.f32 %v6212, %v6224
  %v6226 = vpop.f32.mrf.mxu0
  %6227 = vdwg.mxu0
  %6228 = vmatpush.bf16.msra.mxu0 %v1468
  %6229 = vmatpush.bf16.msra.mxu0 %v1456
  %6230 = vmatpush.bf16.msra.mxu0 %v1444
  %6231 = vmatpush.bf16.msra.mxu0 %v1432
  %6232 = vmatpush.bf16.msra.mxu0 %v1420
  %6233 = vmatpush.bf16.msra.mxu0 %v1408
  %6234 = vmatpush.bf16.msra.mxu0 %v1396
  %6235 = vmatpush.bf16.msra.mxu0 %v1384
  %6236 = vmatmul.bf16.gmra.mxu0 %v5928
  %v6237 = vpop.f32.mrf.mxu0
  %v6238 = vadd.f32 %v6225, %v6237
  %v6239 = vpop.f32.mrf.mxu0
  %6240 = vdwg.mxu0
  %6241 = vmatpush.bf16.msra.mxu0 %v1277
  %6242 = vmatpush.bf16.msra.mxu0 %v1265
  %6243 = vmatpush.bf16.msra.mxu0 %v1253
  %6244 = vmatpush.bf16.msra.mxu0 %v1241
  %6245 = vmatpush.bf16.msra.mxu0 %v1229
  %6246 = vmatpush.bf16.msra.mxu0 %v1217
  %6247 = vmatpush.bf16.msra.mxu0 %v1205
  %6248 = vmatpush.bf16.msra.mxu0 %v1193
  %6249 = vmatmul.bf16.gmra.mxu0 %v5926
  %v6250 = vpop.f32.mrf.mxu0
  %v6251 = vadd.f32 0.0, %v6250
  %v6252 = vpop.f32.mrf.mxu0
  %6253 = vdwg.mxu0
  %6254 = vmatpush.bf16.msra.mxu0 %v1373
  %6255 = vmatpush.bf16.msra.mxu0 %v1361
  %6256 = vmatpush.bf16.msra.mxu0 %v1349
  %6257 = vmatpush.bf16.msra.mxu0 %v1337
  %6258 = vmatpush.bf16.msra.mxu0 %v1325
  %6259 = vmatpush.bf16.msra.mxu0 %v1313
  %6260 = vmatpush.bf16.msra.mxu0 %v1301
  %6261 = vmatpush.bf16.msra.mxu0 %v1289
  %6262 = vmatmul.bf16.gmra.mxu0 %v5927
  %v6263 = vpop.f32.mrf.mxu0
  %v6264 = vadd.f32 %v6251, %v6263
  %v6265 = vpop.f32.mrf.mxu0
  %6266 = vdwg.mxu0
  %6267 = vmatpush.bf16.msra.mxu0 %v1469
  %6268 = vmatpush.bf16.msra.mxu0 %v1457
  %6269 = vmatpush.bf16.msra.mxu0 %v1445
  %6270 = vmatpush.bf16.msra.mxu0 %v1433
  %6271 = vmatpush.bf16.msra.mxu0 %v1421
  %6272 = vmatpush.bf16.msra.mxu0 %v1409
  %6273 = vmatpush.bf16.msra.mxu0 %v1397
  %6274 = vmatpush.bf16.msra.mxu0 %v1385
  %6275 = vmatmul.bf16.gmra.mxu0 %v5928
  %v6276 = vpop.f32.mrf.mxu0
  %v6277 = vadd.f32 %v6264, %v6276
  %v6278 = vpop.f32.mrf.mxu0
  %6279 = vdwg.mxu0
  %6280 = vmatpush.bf16.msra.mxu0 %v1278
  %6281 = vmatpush.bf16.msra.mxu0 %v1266
  %6282 = vmatpush.bf16.msra.mxu0 %v1254
  %6283 = vmatpush.bf16.msra.mxu0 %v1242
  %6284 = vmatpush.bf16.msra.mxu0 %v1230
  %6285 = vmatpush.bf16.msra.mxu0 %v1218
  %6286 = vmatpush.bf16.msra.mxu0 %v1206
  %6287 = vmatpush.bf16.msra.mxu0 %v1194
  %6288 = vmatmul.bf16.gmra.mxu0 %v5926
  %v6289 = vpop.f32.mrf.mxu0
  %v6290 = vadd.f32 0.0, %v6289
  %v6291 = vpop.f32.mrf.mxu0
  %6292 = vdwg.mxu0
  %6293 = vmatpush.bf16.msra.mxu0 %v1374
  %6294 = vmatpush.bf16.msra.mxu0 %v1362
  %6295 = vmatpush.bf16.msra.mxu0 %v1350
  %6296 = vmatpush.bf16.msra.mxu0 %v1338
  %6297 = vmatpush.bf16.msra.mxu0 %v1326
  %6298 = vmatpush.bf16.msra.mxu0 %v1314
  %6299 = vmatpush.bf16.msra.mxu0 %v1302
  %6300 = vmatpush.bf16.msra.mxu0 %v1290
  %6301 = vmatmul.bf16.gmra.mxu0 %v5927
  %v6302 = vpop.f32.mrf.mxu0
  %v6303 = vadd.f32 %v6290, %v6302
  %v6304 = vpop.f32.mrf.mxu0
  %6305 = vdwg.mxu0
  %6306 = vmatpush.bf16.msra.mxu0 %v1470
  %6307 = vmatpush.bf16.msra.mxu0 %v1458
  %6308 = vmatpush.bf16.msra.mxu0 %v1446
  %6309 = vmatpush.bf16.msra.mxu0 %v1434
  %6310 = vmatpush.bf16.msra.mxu0 %v1422
  %6311 = vmatpush.bf16.msra.mxu0 %v1410
  %6312 = vmatpush.bf16.msra.mxu0 %v1398
  %6313 = vmatpush.bf16.msra.mxu0 %v1386
  %6314 = vmatmul.bf16.gmra.mxu0 %v5928
  %v6315 = vpop.f32.mrf.mxu0
  %v6316 = vadd.f32 %v6303, %v6315
  %v6317 = vpop.f32.mrf.mxu0
  %6318 = vdwg.mxu0
  %6319 = vmatpush.bf16.msra.mxu0 %v1279
  %6320 = vmatpush.bf16.msra.mxu0 %v1267
  %6321 = vmatpush.bf16.msra.mxu0 %v1255
  %6322 = vmatpush.bf16.msra.mxu0 %v1243
  %6323 = vmatpush.bf16.msra.mxu0 %v1231
  %6324 = vmatpush.bf16.msra.mxu0 %v1219
  %6325 = vmatpush.bf16.msra.mxu0 %v1207
  %6326 = vmatpush.bf16.msra.mxu0 %v1195
  %6327 = vmatmul.bf16.gmra.mxu0 %v5926
  %v6328 = vpop.f32.mrf.mxu0
  %v6329 = vadd.f32 0.0, %v6328
  %v6330 = vpop.f32.mrf.mxu0
  %6331 = vdwg.mxu0
  %6332 = vmatpush.bf16.msra.mxu0 %v1375
  %6333 = vmatpush.bf16.msra.mxu0 %v1363
  %6334 = vmatpush.bf16.msra.mxu0 %v1351
  %6335 = vmatpush.bf16.msra.mxu0 %v1339
  %6336 = vmatpush.bf16.msra.mxu0 %v1327
  %6337 = vmatpush.bf16.msra.mxu0 %v1315
  %6338 = vmatpush.bf16.msra.mxu0 %v1303
  %6339 = vmatpush.bf16.msra.mxu0 %v1291
  %6340 = vmatmul.bf16.gmra.mxu0 %v5927
  %v6341 = vpop.f32.mrf.mxu0
  %v6342 = vadd.f32 %v6329, %v6341
  %v6343 = vpop.f32.mrf.mxu0
  %6344 = vdwg.mxu0
  %6345 = vmatpush.bf16.msra.mxu0 %v1471
  %6346 = vmatpush.bf16.msra.mxu0 %v1459
  %6347 = vmatpush.bf16.msra.mxu0 %v1447
  %6348 = vmatpush.bf16.msra.mxu0 %v1435
  %6349 = vmatpush.bf16.msra.mxu0 %v1423
  %6350 = vmatpush.bf16.msra.mxu0 %v1411
  %6351 = vmatpush.bf16.msra.mxu0 %v1399
  %6352 = vmatpush.bf16.msra.mxu0 %v1387
  %6353 = vmatmul.bf16.gmra.mxu0 %v5928
  %v6354 = vpop.f32.mrf.mxu0
  %v6355 = vadd.f32 %v6342, %v6354
  %v6356 = vpop.f32.mrf.mxu0
  %6357 = vdwg.mxu0
  %6358 = vmatpush.bf16.msra.mxu0 %v1280
  %6359 = vmatpush.bf16.msra.mxu0 %v1268
  %6360 = vmatpush.bf16.msra.mxu0 %v1256
  %6361 = vmatpush.bf16.msra.mxu0 %v1244
  %6362 = vmatpush.bf16.msra.mxu0 %v1232
  %6363 = vmatpush.bf16.msra.mxu0 %v1220
  %6364 = vmatpush.bf16.msra.mxu0 %v1208
  %6365 = vmatpush.bf16.msra.mxu0 %v1196
  %6366 = vmatmul.bf16.gmra.mxu0 %v5926
  %v6367 = vpop.f32.mrf.mxu0
  %v6368 = vadd.f32 0.0, %v6367
  %v6369 = vpop.f32.mrf.mxu0
  %6370 = vdwg.mxu0
  %6371 = vmatpush.bf16.msra.mxu0 %v1376
  %6372 = vmatpush.bf16.msra.mxu0 %v1364
  %6373 = vmatpush.bf16.msra.mxu0 %v1352
  %6374 = vmatpush.bf16.msra.mxu0 %v1340
  %6375 = vmatpush.bf16.msra.mxu0 %v1328
  %6376 = vmatpush.bf16.msra.mxu0 %v1316
  %6377 = vmatpush.bf16.msra.mxu0 %v1304
  %6378 = vmatpush.bf16.msra.mxu0 %v1292
  %6379 = vmatmul.bf16.gmra.mxu0 %v5927
  %v6380 = vpop.f32.mrf.mxu0
  %v6381 = vadd.f32 %v6368, %v6380
  %v6382 = vpop.f32.mrf.mxu0
  %6383 = vdwg.mxu0
  %6384 = vmatpush.bf16.msra.mxu0 %v1472
  %6385 = vmatpush.bf16.msra.mxu0 %v1460
  %6386 = vmatpush.bf16.msra.mxu0 %v1448
  %6387 = vmatpush.bf16.msra.mxu0 %v1436
  %6388 = vmatpush.bf16.msra.mxu0 %v1424
  %6389 = vmatpush.bf16.msra.mxu0 %v1412
  %6390 = vmatpush.bf16.msra.mxu0 %v1400
  %6391 = vmatpush.bf16.msra.mxu0 %v1388
  %6392 = vmatmul.bf16.gmra.mxu0 %v5928
  %v6393 = vpop.f32.mrf.mxu0
  %v6394 = vadd.f32 %v6381, %v6393
  %v6395 = vpop.f32.mrf.mxu0
  %6396 = vdwg.mxu0
  %v6409 = vrot.slane %v6004, 6
  %v6410 = vrot.slane %v6043, 4
  %v6411 = vrot.slane %v6082, 2
  %v6412 = vrot.slane %v6160, 6
  %v6413 = vrot.slane %v6199, 4
  %v6414 = vrot.slane %v6238, 2
  %v6415 = vrot.slane %v6316, 6
  %v6416 = vrot.slane %v6355, 4
  %v6417 = vrot.slane %v6394, 2
  %v6418 = vsel %vm2250, %v5965, %v6409
  %v6419 = vsel %vm2252, %v6410, %v6411
  %v6420 = vsel %vm2254, %v6418, %v6419
  %v6421 = vsel %vm2250, %v6121, %v6412
  %v6422 = vsel %vm2252, %v6413, %v6414
  %v6423 = vsel %vm2254, %v6421, %v6422
  %v6424 = vsel %vm2250, %v6277, %v6415
  %v6425 = vsel %vm2252, %v6416, %v6417
  %v6426 = vsel %vm2254, %v6424, %v6425
  %v6430 = vadd.f32 %v5915, %v6420
  %v6431 = vadd.f32 %v5916, %v6423
  %v6432 = vadd.f32 %v5917, %v6426
  %v6433 = vxor.u32 %v6430, 2147483648
  %v6434 = vmul.f32 %v6433, 1.442695
  %v6435 = vpow.pop %v6434
  %v6436 = vadd.f32 %v6435, 1.0
  %v6437 = vrcp.pop %v6436
  %v6438 = vmul.f32 %v6436, %v6437
  %v6439 = vsub.f32 1.0, %v6438
  %v6440 = vmul.f32 %v6437, %v6439
  %v6441 = vadd.f32 %v6437, %v6440
  %vm6442 = vweird.f32 %v6436
  %vm6443 = vweird.f32 %v6437
  %vm6444 = vmor %vm6442, %vm6443
  %v6445 = vsel %vm6444, %v6437, %v6441
  %v6446 = vand.u32 2147483647, %v6436
  %vm6447 = vcmp.eq.f32.partialorder %v6446, 8.507059e+37
  %v6448 = vand.u32 %v6436, 2147483648
  %v6449 = vor.u32 1.1754944e-38, %v6448
  %v6450 = vsel %vm6447, %v6449, %v6445
  %v6451 = vmul.f32 1.0, %v6450
  %v6454 = vrot.slane %v6430, 6
  %v6455 = vrot.slane %v6431, 6
  %v6456 = vsel %vm2250, %v6454, %v6455
  %v6458 = vxor.u32 %v6456, 2147483648
  %v6459 = vmul.f32 %v6458, 1.442695
  %v6460 = vpow.pop %v6459
  %v6461 = vadd.f32 %v6460, 1.0
  %v6462 = vrcp.pop %v6461
  %v6463 = vmul.f32 %v6461, %v6462
  %v6464 = vsub.f32 1.0, %v6463
  %v6465 = vmul.f32 %v6462, %v6464
  %v6466 = vadd.f32 %v6462, %v6465
  %vm6467 = vweird.f32 %v6461
  %vm6468 = vweird.f32 %v6462
  %vm6469 = vmor %vm6467, %vm6468
  %v6470 = vsel %vm6469, %v6462, %v6466
  %v6471 = vand.u32 2147483647, %v6461
  %vm6472 = vcmp.eq.f32.partialorder %v6471, 8.507059e+37
  %v6473 = vand.u32 %v6461, 2147483648
  %v6474 = vor.u32 1.1754944e-38, %v6473
  %v6475 = vsel %vm6472, %v6474, %v6470
  %v6476 = vmul.f32 1.0, %v6475
  %v6478 = vrot.slane %v6431, 4
  %v6479 = vrot.slane %v6432, 4
  %v6480 = vsel %vm2254, %v6478, %v6479
  %v6482 = vtanh.pop %v6480
  %v6483 = vrot.slane %v6432, 2
  %v6485 = vxor.u32 %v6483, 2147483648
  %v6486 = vmul.f32 %v6485, 1.442695
  %v6487 = vpow.pop %v6486
  %v6488 = vadd.f32 %v6487, 1.0
  %v6489 = vrcp.pop %v6488
  %v6490 = vmul.f32 %v6488, %v6489
  %v6491 = vsub.f32 1.0, %v6490
  %v6492 = vmul.f32 %v6489, %v6491
  %v6493 = vadd.f32 %v6489, %v6492
  %vm6494 = vweird.f32 %v6488
  %vm6495 = vweird.f32 %v6489
  %vm6496 = vmor %vm6494, %vm6495
  %v6497 = vsel %vm6496, %v6489, %v6493
  %v6498 = vand.u32 2147483647, %v6488
  %vm6499 = vcmp.eq.f32.partialorder %v6498, 8.507059e+37
  %v6500 = vand.u32 %v6488, 2147483648
  %v6501 = vor.u32 1.1754944e-38, %v6500
  %v6502 = vsel %vm6499, %v6501, %v6497
  %v6503 = vmul.f32 1.0, %v6502
  %v6504 = vmul.f32 %v6476, %v5911
  %v6505 = vmul.f32 %v6451, %v6482
  %v6506 = vadd.f32 %v6504, %v6505
  %v6507 = vtanh.pop %v6506
  %v6508 = vmul.f32 %v6503, %v6507
  %6509 = vst [vmem:[%s4] sm:$0x3f] %v6508
  // Predicated region
  $region18: #{bilstm_forward.1} parent=0 // pred_check
    _
  $region19: #{bilstm_forward.1} parent=0 // pred_check_branch
    %6511 = sbr.rel (0) target = $region21
  $region20: #{bilstm_forward.1} parent=0 // pred_region
    _
  $region21: #{bilstm_forward.1} parent=0 // pred_fallthru
    _
  // Predicated region
  $region22: #{bilstm_forward.1} parent=0 // pred_check
    _
  $region23: #{bilstm_forward.1} parent=0 // pred_check_branch
    %6513 = sbr.rel (0) target = $region25
  $region24: #{bilstm_forward.1} parent=0 // pred_region
    _
  $region25: #{bilstm_forward.1} parent=0 // pred_fallthru
    _

</llo_original>
